<compile_context>
chip_gen: v7x
topology: tpu7x:2x2x1
jax: 0.10.0
libtpu: 0.0.40
codegen_flags: <defaults>
</compile_context>

<pallas_src>
import jax
import jax.numpy as jnp
from jax.experimental import pallas as pl
from jax.experimental.pallas import tpu as pltpu


# ---------------------------------------------------------------------------
# Fused whole-block kernel factory.
#
# refs layout: [x_ref, (s1,b1,w1,s2,b2,w2m) * L, out_ref]
#   x_ref : (M, C0)          f32      (M = nb*H*W rows of this grid step)
#   s1/b1 : (1, C0+i*G)      f32      folded BN1 scale/bias for layer i
#   w1    : (C0+i*G, Cmid)   bf16     1x1 conv weight as a channel matmul
#   s2/b2 : (1, Cmid)        f32      folded BN2 scale/bias
#   w2m   : (9*Cmid, G)      bf16     3x3 conv weight, row = (dy*3+dx)*Cmid + ci
#   out   : (M, C0+L*G)      f32      concatenated [x, y1, ..., yL]
# ---------------------------------------------------------------------------
def make_dense_block_kernel(nb, H, W, C0, Cmid, G, L):
    M = nb * H * W

    def kernel(*refs):
        x_ref = refs[0]
        out_ref = refs[1 + 6 * L]

        # VMEM-resident growing feature slab (DenseNet concat stays on-chip).
        feat = x_ref[...]  # (M, C0) f32

        for i in range(L):
            s1, b1, w1, s2, b2, w2 = refs[1 + 6 * i: 1 + 6 * (i + 1)]

            # --- BN1 (folded, inference) + ReLU (f32, VPU) ---
            t = jnp.maximum(feat * s1[...] + b1[...], 0.0)

            # --- 1x1 conv == channel matmul (bf16 in, f32 accumulate, MXU) ---
            m = jnp.dot(t.astype(jnp.bfloat16), w1[...],
                        preferred_element_type=jnp.float32)

            # --- BN2 + ReLU (f32) ---
            u = jnp.maximum(m * s2[...] + b2[...], 0.0)  # (M, Cmid)

            # --- 3x3 conv, padding=1, as a single im2col matmul ---
            # Zero-pad spatially with value ops (stays in VMEM, no HBM pad op).
            u4 = u.reshape(nb, H, W, Cmid)
            zw = jnp.zeros((nb, H, 1, Cmid), jnp.float32)
            uw = jnp.concatenate([zw, u4, zw], axis=2)          # (nb, H, W+2, Cmid)
            zh = jnp.zeros((nb, 1, W + 2, Cmid), jnp.float32)
            up = jnp.concatenate([zh, uw, zh], axis=1)          # (nb, H+2, W+2, Cmid)

            # im2col patch tile (M, 9*Cmid); tap order dy*3+dx matches w2m rows.
            cols = []
            for dy in range(3):
                for dx in range(3):
                    cols.append(up[:, dy:dy + H, dx:dx + W, :].reshape(M, Cmid))
            patches = jnp.concatenate(cols, axis=-1).astype(jnp.bfloat16)

            y = jnp.dot(patches, w2[...],                       # (M, G) f32
                        preferred_element_type=jnp.float32)

            # drop_rate = 0 -> dropout is the identity.
            # DenseNet channel concat: grow the slab in VMEM.
            feat = jnp.concatenate([feat, y], axis=-1)

        # Single lane-dense store of the full concatenated feature slab.
        out_ref[...] = feat

    return kernel


# ---------------------------------------------------------------------------
# DenseBlock forward.  Input/output are NCHW to match the PyTorch module.
# ---------------------------------------------------------------------------
def dense_block_forward(x_nchw, layer_params):
    N, C0, H, W = x_nchw.shape
    L = len(layer_params)
    Cmid = layer_params[0][3].shape[1]   # s2: (1, Cmid)
    G = layer_params[0][5].shape[1]      # w2m: (9*Cmid, G)
    Ct = C0 + L * G

    # NCHW -> NHWC -> (N*H*W, C0): channels on lanes, batch*spatial on M.
    x2d = jnp.transpose(x_nchw, (0, 2, 3, 1)).reshape(N * H * W, C0)

    # Batch tile: smallest divisor of N giving >= 128 matmul rows per grid step
    # (fills an MXU pass); the batch axis is "parallel" for v7x's two TCs.
    nb = N
    for cand in range(1, N + 1):
        if N % cand == 0 and cand * H * W >= 128:
            nb = cand
            break
    grid = (N // nb,)
    M = nb * H * W

    in_specs = [pl.BlockSpec((M, C0), lambda b: (b, 0))]
    flat_params = []
    for lp in layer_params:
        for arr in lp:
            # Full-array blocks with constant index_map: weights stay VMEM-resident.
            in_specs.append(pl.BlockSpec(arr.shape, lambda b: (0, 0)))
            flat_params.append(arr)

    kernel = make_dense_block_kernel(nb, H, W, C0, Cmid, G, L)

    out2d = pl.pallas_call(
        kernel,
        out_shape=jax.ShapeDtypeStruct((N * H * W, Ct), jnp.float32),
        grid=grid,
        in_specs=in_specs,
        out_specs=pl.BlockSpec((M, Ct), lambda b: (b, 0)),
        compiler_params=pltpu.CompilerParams(
            dimension_semantics=("parallel",)),
        # NOTE: at realistic DenseNet sizes, re-derive nb / add spatial tiling and
        # set vmem_limit_bytes against v7x's 64 MiB VMEM.
    )(x2d, *flat_params)

    out = out2d.reshape(N, H, W, Ct)
    return jnp.transpose(out, (0, 3, 1, 2))  # NHWC -> NCHW


# ---------------------------------------------------------------------------
# Deterministic synthetic parameter construction.
#   scale1/bias1: (1, Cin) f32     w1: (Cin, Cmid) bf16
#   scale2/bias2: (1, Cmid) f32    w2m: (9*Cmid, G) bf16, row = (dy*3+dx)*Cmid + ci
# ---------------------------------------------------------------------------
def make_dense_block_params(key, num_layers, num_input_features, bn_size,
                            growth_rate, eps=1e-5):
    params = []
    for i in range(num_layers):
        cin = num_input_features + i * growth_rate
        cmid = bn_size * growth_rate
        k = jax.random.fold_in(key, i)
        k1, k2, k3, k4, k5, k6 = jax.random.split(k, 6)

        # BN1 (eval): gamma/beta, running_mean=0, running_var=1 -> folded scale/bias.
        g1 = 1.0 + 0.1 * jax.random.normal(k1, (cin,), jnp.float32)
        be1 = 0.1 * jax.random.normal(k2, (cin,), jnp.float32)
        scale1 = (g1 / jnp.sqrt(1.0 + eps)).reshape(1, cin)
        bias1 = be1.reshape(1, cin)

        # Conv1x1 weight: PyTorch (Cmid, Cin, 1, 1) -> matmul form (Cin, Cmid), bf16.
        w1 = (0.1 * jax.random.normal(k3, (cin, cmid), jnp.float32)
              ).astype(jnp.bfloat16)

        g2 = 1.0 + 0.1 * jax.random.normal(k4, (cmid,), jnp.float32)
        be2 = 0.1 * jax.random.normal(k5, (cmid,), jnp.float32)
        scale2 = (g2 / jnp.sqrt(1.0 + eps)).reshape(1, cmid)
        bias2 = be2.reshape(1, cmid)

        # Conv3x3 weight: PyTorch (G, Cmid, 3, 3) -> (9*Cmid, G) tap-major, bf16.
        w2 = (0.1 * jax.random.normal(k6, (9 * cmid, growth_rate), jnp.float32)
              ).astype(jnp.bfloat16)

        params.append((scale1, bias1, w1, scale2, bias2, w2))
    return params


# ---------------------------------------------------------------------------
# Pure-JAX reference (same bf16 matmul-operand precision as the kernel's MXU path,
# f32 accumulation), for a tight correctness check.
# ---------------------------------------------------------------------------
def reference_dense_block(x_nchw, layer_params):
    feats = jnp.transpose(x_nchw, (0, 2, 3, 1))  # NHWC
    for (s1, b1, w1, s2, b2, w2m) in layer_params:
        cmid = w1.shape[1]
        g = w2m.shape[1]
        t = jnp.maximum(feats * s1.reshape(1, 1, 1, -1) + b1.reshape(1, 1, 1, -1), 0.0)
        m = jnp.einsum("nhwc,cd->nhwd", t.astype(jnp.bfloat16), w1,
                       preferred_element_type=jnp.float32)
        u = jnp.maximum(m * s2.reshape(1, 1, 1, -1) + b2.reshape(1, 1, 1, -1), 0.0)
        w_hwio = w2m.reshape(3, 3, cmid, g)
        y = jax.lax.conv_general_dilated(
            u.astype(jnp.bfloat16), w_hwio, window_strides=(1, 1), padding="SAME",
            dimension_numbers=("NHWC", "HWIO", "NHWC"),
            preferred_element_type=jnp.float32)
        feats = jnp.concatenate([feats, y], axis=-1)
    return jnp.transpose(feats, (0, 3, 1, 2))  # NCHW


if __name__ == "__main__":
    # Small shapes consistent with the module.
    num_layers = 3
    num_input_features = 32
    bn_size = 2
    growth_rate = 16
    N, H, W = 2, 8, 8

    key = jax.random.PRNGKey(0)
    kx, kp = jax.random.split(key)
    x = jax.random.normal(kx, (N, num_input_features, H, W), jnp.float32)  # NCHW
    params = make_dense_block_params(kp, num_layers, num_input_features,
                                     bn_size, growth_rate)

    out = jax.block_until_ready(dense_block_forward(x, params))
    expected_channels = num_input_features + num_layers * growth_rate
    assert out.shape == (N, expected_channels, H, W), out.shape

    ref = jax.block_until_ready(reference_dense_block(x, params))
    max_err = float(jnp.max(jnp.abs(out - ref)))
    assert jnp.allclose(out, ref, atol=2e-2, rtol=2e-2), max_err

    print("KERNEL_OK")
</pallas_src>

<mosaic_0001>
module attributes {stable_mosaic.version = 11 : i64} {
  func.func @kernel(%arg0: i32, %arg1: memref<128x32xf32, #tpu.memory_space<vmem>>, %arg2: memref<1x32xf32, #tpu.memory_space<vmem>>, %arg3: memref<1x32xf32, #tpu.memory_space<vmem>>, %arg4: memref<32x32xbf16, #tpu.memory_space<vmem>>, %arg5: memref<1x32xf32, #tpu.memory_space<vmem>>, %arg6: memref<1x32xf32, #tpu.memory_space<vmem>>, %arg7: memref<288x16xbf16, #tpu.memory_space<vmem>>, %arg8: memref<1x48xf32, #tpu.memory_space<vmem>>, %arg9: memref<1x48xf32, #tpu.memory_space<vmem>>, %arg10: memref<48x32xbf16, #tpu.memory_space<vmem>>, %arg11: memref<1x32xf32, #tpu.memory_space<vmem>>, %arg12: memref<1x32xf32, #tpu.memory_space<vmem>>, %arg13: memref<288x16xbf16, #tpu.memory_space<vmem>>, %arg14: memref<1x64xf32, #tpu.memory_space<vmem>>, %arg15: memref<1x64xf32, #tpu.memory_space<vmem>>, %arg16: memref<64x32xbf16, #tpu.memory_space<vmem>>, %arg17: memref<1x32xf32, #tpu.memory_space<vmem>>, %arg18: memref<1x32xf32, #tpu.memory_space<vmem>>, %arg19: memref<288x16xbf16, #tpu.memory_space<vmem>>, %arg20: memref<128x80xf32, #tpu.memory_space<vmem>>) attributes {dimension_semantics = [#tpu.dimension_semantics<parallel>], iteration_bounds = array<i64: 1>, scalar_prefetch = 0 : i64, scratch_operands = 0 : i64, tpu.core_type = #tpu.core_type<tc>, window_params = [{transform_indices = @transform_0, window_bounds = array<i64: 128, 32>}, {pipeline_mode = #tpu.pipeline_mode<synchronous>, transform_indices = @transform_1, window_bounds = array<i64: 1, 32>}, {pipeline_mode = #tpu.pipeline_mode<synchronous>, transform_indices = @transform_2, window_bounds = array<i64: 1, 32>}, {pipeline_mode = #tpu.pipeline_mode<synchronous>, transform_indices = @transform_3, window_bounds = array<i64: 32, 32>}, {pipeline_mode = #tpu.pipeline_mode<synchronous>, transform_indices = @transform_4, window_bounds = array<i64: 1, 32>}, {pipeline_mode = #tpu.pipeline_mode<synchronous>, transform_indices = @transform_5, window_bounds = array<i64: 1, 32>}, {pipeline_mode = #tpu.pipeline_mode<synchronous>, transform_indices = @transform_6, window_bounds = array<i64: 288, 16>}, {pipeline_mode = #tpu.pipeline_mode<synchronous>, transform_indices = @transform_7, window_bounds = array<i64: 1, 48>}, {pipeline_mode = #tpu.pipeline_mode<synchronous>, transform_indices = @transform_8, window_bounds = array<i64: 1, 48>}, {pipeline_mode = #tpu.pipeline_mode<synchronous>, transform_indices = @transform_9, window_bounds = array<i64: 48, 32>}, {pipeline_mode = #tpu.pipeline_mode<synchronous>, transform_indices = @transform_10, window_bounds = array<i64: 1, 32>}, {pipeline_mode = #tpu.pipeline_mode<synchronous>, transform_indices = @transform_11, window_bounds = array<i64: 1, 32>}, {pipeline_mode = #tpu.pipeline_mode<synchronous>, transform_indices = @transform_12, window_bounds = array<i64: 288, 16>}, {pipeline_mode = #tpu.pipeline_mode<synchronous>, transform_indices = @transform_13, window_bounds = array<i64: 1, 64>}, {pipeline_mode = #tpu.pipeline_mode<synchronous>, transform_indices = @transform_14, window_bounds = array<i64: 1, 64>}, {pipeline_mode = #tpu.pipeline_mode<synchronous>, transform_indices = @transform_15, window_bounds = array<i64: 64, 32>}, {pipeline_mode = #tpu.pipeline_mode<synchronous>, transform_indices = @transform_16, window_bounds = array<i64: 1, 32>}, {pipeline_mode = #tpu.pipeline_mode<synchronous>, transform_indices = @transform_17, window_bounds = array<i64: 1, 32>}, {pipeline_mode = #tpu.pipeline_mode<synchronous>, transform_indices = @transform_18, window_bounds = array<i64: 288, 16>}, {transform_indices = @transform_19, window_bounds = array<i64: 128, 80>}]} {
    %c0 = arith.constant 0 : index
    %c0_0 = arith.constant 0 : index
    %0 = vector.load %arg1[%c0, %c0_0] : memref<128x32xf32, #tpu.memory_space<vmem>>, vector<128x32xf32>
    %c0_1 = arith.constant 0 : index
    %c0_2 = arith.constant 0 : index
    %1 = vector.load %arg2[%c0_1, %c0_2] : memref<1x32xf32, #tpu.memory_space<vmem>>, vector<1x32xf32>
    %2 = vector.broadcast %1 : vector<1x32xf32> to vector<128x32xf32>
    %3 = arith.mulf %0, %2 : vector<128x32xf32>
    %c0_3 = arith.constant 0 : index
    %c0_4 = arith.constant 0 : index
    %4 = vector.load %arg3[%c0_3, %c0_4] : memref<1x32xf32, #tpu.memory_space<vmem>>, vector<1x32xf32>
    %5 = vector.broadcast %4 : vector<1x32xf32> to vector<128x32xf32>
    %6 = arith.addf %3, %5 : vector<128x32xf32>
    %cst = arith.constant 0.000000e+00 : f32
    %7 = vector.broadcast %cst : f32 to vector<128x32xf32>
    %8 = arith.maximumf %6, %7 : vector<128x32xf32>
    %9 = arith.truncf %8 : vector<128x32xf32> to vector<128x32xbf16>
    %c0_5 = arith.constant 0 : index
    %c0_6 = arith.constant 0 : index
    %10 = vector.load %arg4[%c0_5, %c0_6] : memref<32x32xbf16, #tpu.memory_space<vmem>>, vector<32x32xbf16>
    %cst_7 = arith.constant dense<0.000000e+00> : vector<128x32xf32>
    %11 = tpu.matmul %9, %10, %cst_7 {dimension_numbers = #tpu.dot_dimension_numbers<[1], [0], [0], [1], [0, 0, 1, 1], [], []>} : vector<128x32xbf16>, vector<32x32xbf16>, vector<128x32xf32> -> vector<128x32xf32>
    %c0_8 = arith.constant 0 : index
    %c0_9 = arith.constant 0 : index
    %12 = vector.load %arg5[%c0_8, %c0_9] : memref<1x32xf32, #tpu.memory_space<vmem>>, vector<1x32xf32>
    %13 = vector.broadcast %12 : vector<1x32xf32> to vector<128x32xf32>
    %14 = arith.mulf %11, %13 : vector<128x32xf32>
    %c0_10 = arith.constant 0 : index
    %c0_11 = arith.constant 0 : index
    %15 = vector.load %arg6[%c0_10, %c0_11] : memref<1x32xf32, #tpu.memory_space<vmem>>, vector<1x32xf32>
    %16 = vector.broadcast %15 : vector<1x32xf32> to vector<128x32xf32>
    %17 = arith.addf %14, %16 : vector<128x32xf32>
    %cst_12 = arith.constant 0.000000e+00 : f32
    %18 = vector.broadcast %cst_12 : f32 to vector<128x32xf32>
    %19 = arith.maximumf %17, %18 : vector<128x32xf32>
    %20 = vector.shape_cast %19 : vector<128x32xf32> to vector<2x8x8x32xf32>
    %cst_13 = arith.constant 0.000000e+00 : f32
    %21 = vector.broadcast %cst_13 : f32 to vector<2x8x1x32xf32>
    %22 = tpu.concatenate %21, %20, %21 in 2 : vector<2x8x1x32xf32>, vector<2x8x8x32xf32>, vector<2x8x1x32xf32> -> vector<2x8x10x32xf32>
    %cst_14 = arith.constant 0.000000e+00 : f32
    %23 = vector.broadcast %cst_14 : f32 to vector<2x1x10x32xf32>
    %24 = tpu.concatenate %23, %22, %23 in 1 : vector<2x1x10x32xf32>, vector<2x8x10x32xf32>, vector<2x1x10x32xf32> -> vector<2x10x10x32xf32>
    %25 = vector.extract_strided_slice %24 {offsets = [0, 0, 0, 0], sizes = [2, 8, 8, 32], strides = [1, 1, 1, 1]} : vector<2x10x10x32xf32> to vector<2x8x8x32xf32>
    %26 = vector.shape_cast %25 : vector<2x8x8x32xf32> to vector<128x32xf32>
    %27 = vector.extract_strided_slice %24 {offsets = [0, 0, 1, 0], sizes = [2, 8, 8, 32], strides = [1, 1, 1, 1]} : vector<2x10x10x32xf32> to vector<2x8x8x32xf32>
    %28 = vector.shape_cast %27 : vector<2x8x8x32xf32> to vector<128x32xf32>
    %29 = vector.extract_strided_slice %24 {offsets = [0, 0, 2, 0], sizes = [2, 8, 8, 32], strides = [1, 1, 1, 1]} : vector<2x10x10x32xf32> to vector<2x8x8x32xf32>
    %30 = vector.shape_cast %29 : vector<2x8x8x32xf32> to vector<128x32xf32>
    %31 = vector.extract_strided_slice %24 {offsets = [0, 1, 0, 0], sizes = [2, 8, 8, 32], strides = [1, 1, 1, 1]} : vector<2x10x10x32xf32> to vector<2x8x8x32xf32>
    %32 = vector.shape_cast %31 : vector<2x8x8x32xf32> to vector<128x32xf32>
    %33 = vector.extract_strided_slice %24 {offsets = [0, 1, 1, 0], sizes = [2, 8, 8, 32], strides = [1, 1, 1, 1]} : vector<2x10x10x32xf32> to vector<2x8x8x32xf32>
    %34 = vector.shape_cast %33 : vector<2x8x8x32xf32> to vector<128x32xf32>
    %35 = vector.extract_strided_slice %24 {offsets = [0, 1, 2, 0], sizes = [2, 8, 8, 32], strides = [1, 1, 1, 1]} : vector<2x10x10x32xf32> to vector<2x8x8x32xf32>
    %36 = vector.shape_cast %35 : vector<2x8x8x32xf32> to vector<128x32xf32>
    %37 = vector.extract_strided_slice %24 {offsets = [0, 2, 0, 0], sizes = [2, 8, 8, 32], strides = [1, 1, 1, 1]} : vector<2x10x10x32xf32> to vector<2x8x8x32xf32>
    %38 = vector.shape_cast %37 : vector<2x8x8x32xf32> to vector<128x32xf32>
    %39 = vector.extract_strided_slice %24 {offsets = [0, 2, 1, 0], sizes = [2, 8, 8, 32], strides = [1, 1, 1, 1]} : vector<2x10x10x32xf32> to vector<2x8x8x32xf32>
    %40 = vector.shape_cast %39 : vector<2x8x8x32xf32> to vector<128x32xf32>
    %41 = vector.extract_strided_slice %24 {offsets = [0, 2, 2, 0], sizes = [2, 8, 8, 32], strides = [1, 1, 1, 1]} : vector<2x10x10x32xf32> to vector<2x8x8x32xf32>
    %42 = vector.shape_cast %41 : vector<2x8x8x32xf32> to vector<128x32xf32>
    %43 = tpu.concatenate %26, %28, %30, %32, %34, %36, %38, %40, %42 in 1 : vector<128x32xf32>, vector<128x32xf32>, vector<128x32xf32>, vector<128x32xf32>, vector<128x32xf32>, vector<128x32xf32>, vector<128x32xf32>, vector<128x32xf32>, vector<128x32xf32> -> vector<128x288xf32>
    %44 = arith.truncf %43 : vector<128x288xf32> to vector<128x288xbf16>
    %c0_15 = arith.constant 0 : index
    %c0_16 = arith.constant 0 : index
    %45 = vector.load %arg7[%c0_15, %c0_16] : memref<288x16xbf16, #tpu.memory_space<vmem>>, vector<288x16xbf16>
    %cst_17 = arith.constant dense<0.000000e+00> : vector<128x16xf32>
    %46 = tpu.matmul %44, %45, %cst_17 {dimension_numbers = #tpu.dot_dimension_numbers<[1], [0], [0], [1], [0, 0, 1, 1], [], []>} : vector<128x288xbf16>, vector<288x16xbf16>, vector<128x16xf32> -> vector<128x16xf32>
    %47 = tpu.concatenate %0, %46 in 1 : vector<128x32xf32>, vector<128x16xf32> -> vector<128x48xf32>
    %c0_18 = arith.constant 0 : index
    %c0_19 = arith.constant 0 : index
    %48 = vector.load %arg8[%c0_18, %c0_19] : memref<1x48xf32, #tpu.memory_space<vmem>>, vector<1x48xf32>
    %49 = vector.broadcast %48 : vector<1x48xf32> to vector<128x48xf32>
    %50 = arith.mulf %47, %49 : vector<128x48xf32>
    %c0_20 = arith.constant 0 : index
    %c0_21 = arith.constant 0 : index
    %51 = vector.load %arg9[%c0_20, %c0_21] : memref<1x48xf32, #tpu.memory_space<vmem>>, vector<1x48xf32>
    %52 = vector.broadcast %51 : vector<1x48xf32> to vector<128x48xf32>
    %53 = arith.addf %50, %52 : vector<128x48xf32>
    %cst_22 = arith.constant 0.000000e+00 : f32
    %54 = vector.broadcast %cst_22 : f32 to vector<128x48xf32>
    %55 = arith.maximumf %53, %54 : vector<128x48xf32>
    %56 = arith.truncf %55 : vector<128x48xf32> to vector<128x48xbf16>
    %c0_23 = arith.constant 0 : index
    %c0_24 = arith.constant 0 : index
    %57 = vector.load %arg10[%c0_23, %c0_24] : memref<48x32xbf16, #tpu.memory_space<vmem>>, vector<48x32xbf16>
    %cst_25 = arith.constant dense<0.000000e+00> : vector<128x32xf32>
    %58 = tpu.matmul %56, %57, %cst_25 {dimension_numbers = #tpu.dot_dimension_numbers<[1], [0], [0], [1], [0, 0, 1, 1], [], []>} : vector<128x48xbf16>, vector<48x32xbf16>, vector<128x32xf32> -> vector<128x32xf32>
    %c0_26 = arith.constant 0 : index
    %c0_27 = arith.constant 0 : index
    %59 = vector.load %arg11[%c0_26, %c0_27] : memref<1x32xf32, #tpu.memory_space<vmem>>, vector<1x32xf32>
    %60 = vector.broadcast %59 : vector<1x32xf32> to vector<128x32xf32>
    %61 = arith.mulf %58, %60 : vector<128x32xf32>
    %c0_28 = arith.constant 0 : index
    %c0_29 = arith.constant 0 : index
    %62 = vector.load %arg12[%c0_28, %c0_29] : memref<1x32xf32, #tpu.memory_space<vmem>>, vector<1x32xf32>
    %63 = vector.broadcast %62 : vector<1x32xf32> to vector<128x32xf32>
    %64 = arith.addf %61, %63 : vector<128x32xf32>
    %cst_30 = arith.constant 0.000000e+00 : f32
    %65 = vector.broadcast %cst_30 : f32 to vector<128x32xf32>
    %66 = arith.maximumf %64, %65 : vector<128x32xf32>
    %67 = vector.shape_cast %66 : vector<128x32xf32> to vector<2x8x8x32xf32>
    %cst_31 = arith.constant 0.000000e+00 : f32
    %68 = vector.broadcast %cst_31 : f32 to vector<2x8x1x32xf32>
    %69 = tpu.concatenate %68, %67, %68 in 2 : vector<2x8x1x32xf32>, vector<2x8x8x32xf32>, vector<2x8x1x32xf32> -> vector<2x8x10x32xf32>
    %cst_32 = arith.constant 0.000000e+00 : f32
    %70 = vector.broadcast %cst_32 : f32 to vector<2x1x10x32xf32>
    %71 = tpu.concatenate %70, %69, %70 in 1 : vector<2x1x10x32xf32>, vector<2x8x10x32xf32>, vector<2x1x10x32xf32> -> vector<2x10x10x32xf32>
    %72 = vector.extract_strided_slice %71 {offsets = [0, 0, 0, 0], sizes = [2, 8, 8, 32], strides = [1, 1, 1, 1]} : vector<2x10x10x32xf32> to vector<2x8x8x32xf32>
    %73 = vector.shape_cast %72 : vector<2x8x8x32xf32> to vector<128x32xf32>
    %74 = vector.extract_strided_slice %71 {offsets = [0, 0, 1, 0], sizes = [2, 8, 8, 32], strides = [1, 1, 1, 1]} : vector<2x10x10x32xf32> to vector<2x8x8x32xf32>
    %75 = vector.shape_cast %74 : vector<2x8x8x32xf32> to vector<128x32xf32>
    %76 = vector.extract_strided_slice %71 {offsets = [0, 0, 2, 0], sizes = [2, 8, 8, 32], strides = [1, 1, 1, 1]} : vector<2x10x10x32xf32> to vector<2x8x8x32xf32>
    %77 = vector.shape_cast %76 : vector<2x8x8x32xf32> to vector<128x32xf32>
    %78 = vector.extract_strided_slice %71 {offsets = [0, 1, 0, 0], sizes = [2, 8, 8, 32], strides = [1, 1, 1, 1]} : vector<2x10x10x32xf32> to vector<2x8x8x32xf32>
    %79 = vector.shape_cast %78 : vector<2x8x8x32xf32> to vector<128x32xf32>
    %80 = vector.extract_strided_slice %71 {offsets = [0, 1, 1, 0], sizes = [2, 8, 8, 32], strides = [1, 1, 1, 1]} : vector<2x10x10x32xf32> to vector<2x8x8x32xf32>
    %81 = vector.shape_cast %80 : vector<2x8x8x32xf32> to vector<128x32xf32>
    %82 = vector.extract_strided_slice %71 {offsets = [0, 1, 2, 0], sizes = [2, 8, 8, 32], strides = [1, 1, 1, 1]} : vector<2x10x10x32xf32> to vector<2x8x8x32xf32>
    %83 = vector.shape_cast %82 : vector<2x8x8x32xf32> to vector<128x32xf32>
    %84 = vector.extract_strided_slice %71 {offsets = [0, 2, 0, 0], sizes = [2, 8, 8, 32], strides = [1, 1, 1, 1]} : vector<2x10x10x32xf32> to vector<2x8x8x32xf32>
    %85 = vector.shape_cast %84 : vector<2x8x8x32xf32> to vector<128x32xf32>
    %86 = vector.extract_strided_slice %71 {offsets = [0, 2, 1, 0], sizes = [2, 8, 8, 32], strides = [1, 1, 1, 1]} : vector<2x10x10x32xf32> to vector<2x8x8x32xf32>
    %87 = vector.shape_cast %86 : vector<2x8x8x32xf32> to vector<128x32xf32>
    %88 = vector.extract_strided_slice %71 {offsets = [0, 2, 2, 0], sizes = [2, 8, 8, 32], strides = [1, 1, 1, 1]} : vector<2x10x10x32xf32> to vector<2x8x8x32xf32>
    %89 = vector.shape_cast %88 : vector<2x8x8x32xf32> to vector<128x32xf32>
    %90 = tpu.concatenate %73, %75, %77, %79, %81, %83, %85, %87, %89 in 1 : vector<128x32xf32>, vector<128x32xf32>, vector<128x32xf32>, vector<128x32xf32>, vector<128x32xf32>, vector<128x32xf32>, vector<128x32xf32>, vector<128x32xf32>, vector<128x32xf32> -> vector<128x288xf32>
    %91 = arith.truncf %90 : vector<128x288xf32> to vector<128x288xbf16>
    %c0_33 = arith.constant 0 : index
    %c0_34 = arith.constant 0 : index
    %92 = vector.load %arg13[%c0_33, %c0_34] : memref<288x16xbf16, #tpu.memory_space<vmem>>, vector<288x16xbf16>
    %cst_35 = arith.constant dense<0.000000e+00> : vector<128x16xf32>
    %93 = tpu.matmul %91, %92, %cst_35 {dimension_numbers = #tpu.dot_dimension_numbers<[1], [0], [0], [1], [0, 0, 1, 1], [], []>} : vector<128x288xbf16>, vector<288x16xbf16>, vector<128x16xf32> -> vector<128x16xf32>
    %94 = tpu.concatenate %47, %93 in 1 : vector<128x48xf32>, vector<128x16xf32> -> vector<128x64xf32>
    %c0_36 = arith.constant 0 : index
    %c0_37 = arith.constant 0 : index
    %95 = vector.load %arg14[%c0_36, %c0_37] : memref<1x64xf32, #tpu.memory_space<vmem>>, vector<1x64xf32>
    %96 = vector.broadcast %95 : vector<1x64xf32> to vector<128x64xf32>
    %97 = arith.mulf %94, %96 : vector<128x64xf32>
    %c0_38 = arith.constant 0 : index
    %c0_39 = arith.constant 0 : index
    %98 = vector.load %arg15[%c0_38, %c0_39] : memref<1x64xf32, #tpu.memory_space<vmem>>, vector<1x64xf32>
    %99 = vector.broadcast %98 : vector<1x64xf32> to vector<128x64xf32>
    %100 = arith.addf %97, %99 : vector<128x64xf32>
    %cst_40 = arith.constant 0.000000e+00 : f32
    %101 = vector.broadcast %cst_40 : f32 to vector<128x64xf32>
    %102 = arith.maximumf %100, %101 : vector<128x64xf32>
    %103 = arith.truncf %102 : vector<128x64xf32> to vector<128x64xbf16>
    %c0_41 = arith.constant 0 : index
    %c0_42 = arith.constant 0 : index
    %104 = vector.load %arg16[%c0_41, %c0_42] : memref<64x32xbf16, #tpu.memory_space<vmem>>, vector<64x32xbf16>
    %cst_43 = arith.constant dense<0.000000e+00> : vector<128x32xf32>
    %105 = tpu.matmul %103, %104, %cst_43 {dimension_numbers = #tpu.dot_dimension_numbers<[1], [0], [0], [1], [0, 0, 1, 1], [], []>} : vector<128x64xbf16>, vector<64x32xbf16>, vector<128x32xf32> -> vector<128x32xf32>
    %c0_44 = arith.constant 0 : index
    %c0_45 = arith.constant 0 : index
    %106 = vector.load %arg17[%c0_44, %c0_45] : memref<1x32xf32, #tpu.memory_space<vmem>>, vector<1x32xf32>
    %107 = vector.broadcast %106 : vector<1x32xf32> to vector<128x32xf32>
    %108 = arith.mulf %105, %107 : vector<128x32xf32>
    %c0_46 = arith.constant 0 : index
    %c0_47 = arith.constant 0 : index
    %109 = vector.load %arg18[%c0_46, %c0_47] : memref<1x32xf32, #tpu.memory_space<vmem>>, vector<1x32xf32>
    %110 = vector.broadcast %109 : vector<1x32xf32> to vector<128x32xf32>
    %111 = arith.addf %108, %110 : vector<128x32xf32>
    %cst_48 = arith.constant 0.000000e+00 : f32
    %112 = vector.broadcast %cst_48 : f32 to vector<128x32xf32>
    %113 = arith.maximumf %111, %112 : vector<128x32xf32>
    %114 = vector.shape_cast %113 : vector<128x32xf32> to vector<2x8x8x32xf32>
    %cst_49 = arith.constant 0.000000e+00 : f32
    %115 = vector.broadcast %cst_49 : f32 to vector<2x8x1x32xf32>
    %116 = tpu.concatenate %115, %114, %115 in 2 : vector<2x8x1x32xf32>, vector<2x8x8x32xf32>, vector<2x8x1x32xf32> -> vector<2x8x10x32xf32>
    %cst_50 = arith.constant 0.000000e+00 : f32
    %117 = vector.broadcast %cst_50 : f32 to vector<2x1x10x32xf32>
    %118 = tpu.concatenate %117, %116, %117 in 1 : vector<2x1x10x32xf32>, vector<2x8x10x32xf32>, vector<2x1x10x32xf32> -> vector<2x10x10x32xf32>
    %119 = vector.extract_strided_slice %118 {offsets = [0, 0, 0, 0], sizes = [2, 8, 8, 32], strides = [1, 1, 1, 1]} : vector<2x10x10x32xf32> to vector<2x8x8x32xf32>
    %120 = vector.shape_cast %119 : vector<2x8x8x32xf32> to vector<128x32xf32>
    %121 = vector.extract_strided_slice %118 {offsets = [0, 0, 1, 0], sizes = [2, 8, 8, 32], strides = [1, 1, 1, 1]} : vector<2x10x10x32xf32> to vector<2x8x8x32xf32>
    %122 = vector.shape_cast %121 : vector<2x8x8x32xf32> to vector<128x32xf32>
    %123 = vector.extract_strided_slice %118 {offsets = [0, 0, 2, 0], sizes = [2, 8, 8, 32], strides = [1, 1, 1, 1]} : vector<2x10x10x32xf32> to vector<2x8x8x32xf32>
    %124 = vector.shape_cast %123 : vector<2x8x8x32xf32> to vector<128x32xf32>
    %125 = vector.extract_strided_slice %118 {offsets = [0, 1, 0, 0], sizes = [2, 8, 8, 32], strides = [1, 1, 1, 1]} : vector<2x10x10x32xf32> to vector<2x8x8x32xf32>
    %126 = vector.shape_cast %125 : vector<2x8x8x32xf32> to vector<128x32xf32>
    %127 = vector.extract_strided_slice %118 {offsets = [0, 1, 1, 0], sizes = [2, 8, 8, 32], strides = [1, 1, 1, 1]} : vector<2x10x10x32xf32> to vector<2x8x8x32xf32>
    %128 = vector.shape_cast %127 : vector<2x8x8x32xf32> to vector<128x32xf32>
    %129 = vector.extract_strided_slice %118 {offsets = [0, 1, 2, 0], sizes = [2, 8, 8, 32], strides = [1, 1, 1, 1]} : vector<2x10x10x32xf32> to vector<2x8x8x32xf32>
    %130 = vector.shape_cast %129 : vector<2x8x8x32xf32> to vector<128x32xf32>
    %131 = vector.extract_strided_slice %118 {offsets = [0, 2, 0, 0], sizes = [2, 8, 8, 32], strides = [1, 1, 1, 1]} : vector<2x10x10x32xf32> to vector<2x8x8x32xf32>
    %132 = vector.shape_cast %131 : vector<2x8x8x32xf32> to vector<128x32xf32>
    %133 = vector.extract_strided_slice %118 {offsets = [0, 2, 1, 0], sizes = [2, 8, 8, 32], strides = [1, 1, 1, 1]} : vector<2x10x10x32xf32> to vector<2x8x8x32xf32>
    %134 = vector.shape_cast %133 : vector<2x8x8x32xf32> to vector<128x32xf32>
    %135 = vector.extract_strided_slice %118 {offsets = [0, 2, 2, 0], sizes = [2, 8, 8, 32], strides = [1, 1, 1, 1]} : vector<2x10x10x32xf32> to vector<2x8x8x32xf32>
    %136 = vector.shape_cast %135 : vector<2x8x8x32xf32> to vector<128x32xf32>
    %137 = tpu.concatenate %120, %122, %124, %126, %128, %130, %132, %134, %136 in 1 : vector<128x32xf32>, vector<128x32xf32>, vector<128x32xf32>, vector<128x32xf32>, vector<128x32xf32>, vector<128x32xf32>, vector<128x32xf32>, vector<128x32xf32>, vector<128x32xf32> -> vector<128x288xf32>
    %138 = arith.truncf %137 : vector<128x288xf32> to vector<128x288xbf16>
    %c0_51 = arith.constant 0 : index
    %c0_52 = arith.constant 0 : index
    %139 = vector.load %arg19[%c0_51, %c0_52] : memref<288x16xbf16, #tpu.memory_space<vmem>>, vector<288x16xbf16>
    %cst_53 = arith.constant dense<0.000000e+00> : vector<128x16xf32>
    %140 = tpu.matmul %138, %139, %cst_53 {dimension_numbers = #tpu.dot_dimension_numbers<[1], [0], [0], [1], [0, 0, 1, 1], [], []>} : vector<128x288xbf16>, vector<288x16xbf16>, vector<128x16xf32> -> vector<128x16xf32>
    %141 = tpu.concatenate %94, %140 in 1 : vector<128x64xf32>, vector<128x16xf32> -> vector<128x80xf32>
    %c0_54 = arith.constant 0 : index
    %c0_55 = arith.constant 0 : index
    %142 = vector.load %arg20[%c0_54, %c0_55] : memref<128x80xf32, #tpu.memory_space<vmem>>, vector<128x80xf32>
    tpu.vector_store %arg20[%c0_54, %c0_55], %141 {strides = array<i32>} : memref<128x80xf32, #tpu.memory_space<vmem>>, vector<128x80xf32>,
    return
  }
  func.func @transform_0(%arg0: i32) -> (i32, i32) {
    %c0_i32 = arith.constant 0 : i32
    %c0_i32_0 = arith.constant 0 : i32
    return %arg0, %c0_i32 : i32, i32
  }
  func.func @transform_1(%arg0: i32) -> (i32, i32) {
    %c0_i32 = arith.constant 0 : i32
    %c0_i32_0 = arith.constant 0 : i32
    %c0_i32_1 = arith.constant 0 : i32
    return %c0_i32, %c0_i32_0 : i32, i32
  }
  func.func @transform_2(%arg0: i32) -> (i32, i32) {
    %c0_i32 = arith.constant 0 : i32
    %c0_i32_0 = arith.constant 0 : i32
    %c0_i32_1 = arith.constant 0 : i32
    return %c0_i32, %c0_i32_0 : i32, i32
  }
  func.func @transform_3(%arg0: i32) -> (i32, i32) {
    %c0_i32 = arith.constant 0 : i32
    %c0_i32_0 = arith.constant 0 : i32
    %c0_i32_1 = arith.constant 0 : i32
    return %c0_i32, %c0_i32_0 : i32, i32
  }
  func.func @transform_4(%arg0: i32) -> (i32, i32) {
    %c0_i32 = arith.constant 0 : i32
    %c0_i32_0 = arith.constant 0 : i32
    %c0_i32_1 = arith.constant 0 : i32
    return %c0_i32, %c0_i32_0 : i32, i32
  }
  func.func @transform_5(%arg0: i32) -> (i32, i32) {
    %c0_i32 = arith.constant 0 : i32
    %c0_i32_0 = arith.constant 0 : i32
    %c0_i32_1 = arith.constant 0 : i32
    return %c0_i32, %c0_i32_0 : i32, i32
  }
  func.func @transform_6(%arg0: i32) -> (i32, i32) {
    %c0_i32 = arith.constant 0 : i32
    %c0_i32_0 = arith.constant 0 : i32
    %c0_i32_1 = arith.constant 0 : i32
    return %c0_i32, %c0_i32_0 : i32, i32
  }
  func.func @transform_7(%arg0: i32) -> (i32, i32) {
    %c0_i32 = arith.constant 0 : i32
    %c0_i32_0 = arith.constant 0 : i32
    %c0_i32_1 = arith.constant 0 : i32
    return %c0_i32, %c0_i32_0 : i32, i32
  }
  func.func @transform_8(%arg0: i32) -> (i32, i32) {
    %c0_i32 = arith.constant 0 : i32
    %c0_i32_0 = arith.constant 0 : i32
    %c0_i32_1 = arith.constant 0 : i32
    return %c0_i32, %c0_i32_0 : i32, i32
  }
  func.func @transform_9(%arg0: i32) -> (i32, i32) {
    %c0_i32 = arith.constant 0 : i32
    %c0_i32_0 = arith.constant 0 : i32
    %c0_i32_1 = arith.constant 0 : i32
    return %c0_i32, %c0_i32_0 : i32, i32
  }
  func.func @transform_10(%arg0: i32) -> (i32, i32) {
    %c0_i32 = arith.constant 0 : i32
    %c0_i32_0 = arith.constant 0 : i32
    %c0_i32_1 = arith.constant 0 : i32
    return %c0_i32, %c0_i32_0 : i32, i32
  }
  func.func @transform_11(%arg0: i32) -> (i32, i32) {
    %c0_i32 = arith.constant 0 : i32
    %c0_i32_0 = arith.constant 0 : i32
    %c0_i32_1 = arith.constant 0 : i32
    return %c0_i32, %c0_i32_0 : i32, i32
  }
  func.func @transform_12(%arg0: i32) -> (i32, i32) {
    %c0_i32 = arith.constant 0 : i32
    %c0_i32_0 = arith.constant 0 : i32
    %c0_i32_1 = arith.constant 0 : i32
    return %c0_i32, %c0_i32_0 : i32, i32
  }
  func.func @transform_13(%arg0: i32) -> (i32, i32) {
    %c0_i32 = arith.constant 0 : i32
    %c0_i32_0 = arith.constant 0 : i32
    %c0_i32_1 = arith.constant 0 : i32
    return %c0_i32, %c0_i32_0 : i32, i32
  }
  func.func @transform_14(%arg0: i32) -> (i32, i32) {
    %c0_i32 = arith.constant 0 : i32
    %c0_i32_0 = arith.constant 0 : i32
    %c0_i32_1 = arith.constant 0 : i32
    return %c0_i32, %c0_i32_0 : i32, i32
  }
  func.func @transform_15(%arg0: i32) -> (i32, i32) {
    %c0_i32 = arith.constant 0 : i32
    %c0_i32_0 = arith.constant 0 : i32
    %c0_i32_1 = arith.constant 0 : i32
    return %c0_i32, %c0_i32_0 : i32, i32
  }
  func.func @transform_16(%arg0: i32) -> (i32, i32) {
    %c0_i32 = arith.constant 0 : i32
    %c0_i32_0 = arith.constant 0 : i32
    %c0_i32_1 = arith.constant 0 : i32
    return %c0_i32, %c0_i32_0 : i32, i32
  }
  func.func @transform_17(%arg0: i32) -> (i32, i32) {
    %c0_i32 = arith.constant 0 : i32
    %c0_i32_0 = arith.constant 0 : i32
    %c0_i32_1 = arith.constant 0 : i32
    return %c0_i32, %c0_i32_0 : i32, i32
  }
  func.func @transform_18(%arg0: i32) -> (i32, i32) {
    %c0_i32 = arith.constant 0 : i32
    %c0_i32_0 = arith.constant 0 : i32
    %c0_i32_1 = arith.constant 0 : i32
    return %c0_i32, %c0_i32_0 : i32, i32
  }
  func.func @transform_19(%arg0: i32) -> (i32, i32) {
    %c0_i32 = arith.constant 0 : i32
    %c0_i32_0 = arith.constant 0 : i32
    return %arg0, %c0_i32 : i32, i32
  }
}

</mosaic_0001>

<llo_original>
// kernel: tpu_custom_call.1
$region0: #{tpu_custom_call.1}
  #allocation0 [shape = 'u32[]', space=smem, size = 0x4, offset = 0x4, fixed_abs, tag = 'smem constant byte address 0x4 - core index']
  #allocation1 [shape = 'u32[144,128]{1,0:T(1,128)}', space=vmem, size = 0x12000, scoped, tag = 'internal scratch']
  %s0 = inlined_call_operand.vmem [shape: f32[128,32], index: 0, kind: input, shape index: {}]
  %s1 = inlined_call_operand.vmem [shape: f32[1,32], index: 1, kind: input, shape index: {}]
  %s2 = inlined_call_operand.vmem [shape: f32[1,32], index: 2, kind: input, shape index: {}]
  %s3 = inlined_call_operand.vmem [shape: bf16[32,32], index: 3, kind: input, shape index: {}]
  %s4 = inlined_call_operand.vmem [shape: f32[1,32], index: 4, kind: input, shape index: {}]
  %s5 = inlined_call_operand.vmem [shape: f32[1,32], index: 5, kind: input, shape index: {}]
  %s6 = inlined_call_operand.vmem [shape: bf16[288,16], index: 6, kind: input, shape index: {}]
  %s7 = inlined_call_operand.vmem [shape: f32[1,48], index: 7, kind: input, shape index: {}]
  %s8 = inlined_call_operand.vmem [shape: f32[1,48], index: 8, kind: input, shape index: {}]
  %s9 = inlined_call_operand.vmem [shape: bf16[48,32], index: 9, kind: input, shape index: {}]
  %s10 = inlined_call_operand.vmem [shape: f32[1,32], index: 10, kind: input, shape index: {}]
  %s11 = inlined_call_operand.vmem [shape: f32[1,32], index: 11, kind: input, shape index: {}]
  %s12 = inlined_call_operand.vmem [shape: bf16[288,16], index: 12, kind: input, shape index: {}]
  %s13 = inlined_call_operand.vmem [shape: f32[1,64], index: 13, kind: input, shape index: {}]
  %s14 = inlined_call_operand.vmem [shape: f32[1,64], index: 14, kind: input, shape index: {}]
  %s15 = inlined_call_operand.vmem [shape: bf16[64,32], index: 15, kind: input, shape index: {}]
  %s16 = inlined_call_operand.vmem [shape: f32[1,32], index: 16, kind: input, shape index: {}]
  %s17 = inlined_call_operand.vmem [shape: f32[1,32], index: 17, kind: input, shape index: {}]
  %s18 = inlined_call_operand.vmem [shape: bf16[288,16], index: 18, kind: input, shape index: {}]
  %s19 = inlined_call_operand.vmem [shape: f32[128,80], index: 19, kind: output, shape index: {}]
  %s20 = sld [smem:[#allocation0]]
  $region86: #{tpu_custom_call.1} parent=0
    _
  %s22 = ssub.s32 1, %s20
  %s23 = scalar_select 0, %s22, %s20
  // Predicated region
  $region2: #{tpu_custom_call.1} parent=0 // pred_check
    _
  $region3: #{tpu_custom_call.1} parent=0 // pred_check_branch
    %25 = sbr.rel (0) target = $region5
  $region4: #{tpu_custom_call.1} parent=0 // pred_region
    _
  $region5: #{tpu_custom_call.1} parent=0 // pred_fallthru
    _
  // Predicated region
  $region6: #{tpu_custom_call.1} parent=0 // pred_check
    _
  $region7: #{tpu_custom_call.1} parent=0 // pred_check_branch
    %27 = sbr.rel (0) target = $region9
  $region8: #{tpu_custom_call.1} parent=0 // pred_region
    _
  $region9: #{tpu_custom_call.1} parent=0 // pred_fallthru
    _
  // Predicated region
  $region10: #{tpu_custom_call.1} parent=0 // pred_check
    _
  $region11: #{tpu_custom_call.1} parent=0 // pred_check_branch
    %29 = sbr.rel (0) target = $region13
  $region12: #{tpu_custom_call.1} parent=0 // pred_region
    _
  $region13: #{tpu_custom_call.1} parent=0 // pred_fallthru
    _
  // Predicated region
  $region14: #{tpu_custom_call.1} parent=0 // pred_check
    _
  $region15: #{tpu_custom_call.1} parent=0 // pred_check_branch
    %31 = sbr.rel (0) target = $region17
  $region16: #{tpu_custom_call.1} parent=0 // pred_region
    _
  $region17: #{tpu_custom_call.1} parent=0 // pred_fallthru
    _
  // Predicated region
  $region18: #{tpu_custom_call.1} parent=0 // pred_check
    _
  $region19: #{tpu_custom_call.1} parent=0 // pred_check_branch
    %33 = sbr.rel (0) target = $region21
  $region20: #{tpu_custom_call.1} parent=0 // pred_region
    _
  $region21: #{tpu_custom_call.1} parent=0 // pred_fallthru
    _
  // Predicated region
  $region22: #{tpu_custom_call.1} parent=0 // pred_check
    _
  $region23: #{tpu_custom_call.1} parent=0 // pred_check_branch
    %35 = sbr.rel (0) target = $region25
  $region24: #{tpu_custom_call.1} parent=0 // pred_region
    _
  $region25: #{tpu_custom_call.1} parent=0 // pred_fallthru
    _
  // Predicated region
  $region26: #{tpu_custom_call.1} parent=0 // pred_check
    _
  $region27: #{tpu_custom_call.1} parent=0 // pred_check_branch
    %37 = sbr.rel (0) target = $region29
  $region28: #{tpu_custom_call.1} parent=0 // pred_region
    _
  $region29: #{tpu_custom_call.1} parent=0 // pred_fallthru
    _
  // Predicated region
  $region30: #{tpu_custom_call.1} parent=0 // pred_check
    _
  $region31: #{tpu_custom_call.1} parent=0 // pred_check_branch
    %39 = sbr.rel (0) target = $region33
  $region32: #{tpu_custom_call.1} parent=0 // pred_region
    _
  $region33: #{tpu_custom_call.1} parent=0 // pred_fallthru
    _
  // Predicated region
  $region34: #{tpu_custom_call.1} parent=0 // pred_check
    _
  $region35: #{tpu_custom_call.1} parent=0 // pred_check_branch
    %41 = sbr.rel (0) target = $region37
  $region36: #{tpu_custom_call.1} parent=0 // pred_region
    _
  $region37: #{tpu_custom_call.1} parent=0 // pred_fallthru
    _
  // Predicated region
  $region38: #{tpu_custom_call.1} parent=0 // pred_check
    _
  $region39: #{tpu_custom_call.1} parent=0 // pred_check_branch
    %43 = sbr.rel (0) target = $region41
  $region40: #{tpu_custom_call.1} parent=0 // pred_region
    _
  $region41: #{tpu_custom_call.1} parent=0 // pred_fallthru
    _
  // Predicated region
  $region42: #{tpu_custom_call.1} parent=0 // pred_check
    _
  $region43: #{tpu_custom_call.1} parent=0 // pred_check_branch
    %45 = sbr.rel (0) target = $region45
  $region44: #{tpu_custom_call.1} parent=0 // pred_region
    _
  $region45: #{tpu_custom_call.1} parent=0 // pred_fallthru
    _
  // Predicated region
  $region46: #{tpu_custom_call.1} parent=0 // pred_check
    _
  $region47: #{tpu_custom_call.1} parent=0 // pred_check_branch
    %47 = sbr.rel (0) target = $region49
  $region48: #{tpu_custom_call.1} parent=0 // pred_region
    _
  $region49: #{tpu_custom_call.1} parent=0 // pred_fallthru
    _
  // Predicated region
  $region50: #{tpu_custom_call.1} parent=0 // pred_check
    _
  $region51: #{tpu_custom_call.1} parent=0 // pred_check_branch
    %49 = sbr.rel (0) target = $region53
  $region52: #{tpu_custom_call.1} parent=0 // pred_region
    _
  $region53: #{tpu_custom_call.1} parent=0 // pred_fallthru
    _
  // Predicated region
  $region54: #{tpu_custom_call.1} parent=0 // pred_check
    _
  $region55: #{tpu_custom_call.1} parent=0 // pred_check_branch
    %51 = sbr.rel (0) target = $region57
  $region56: #{tpu_custom_call.1} parent=0 // pred_region
    _
  $region57: #{tpu_custom_call.1} parent=0 // pred_fallthru
    _
  // Predicated region
  $region58: #{tpu_custom_call.1} parent=0 // pred_check
    _
  $region59: #{tpu_custom_call.1} parent=0 // pred_check_branch
    %53 = sbr.rel (0) target = $region61
  $region60: #{tpu_custom_call.1} parent=0 // pred_region
    _
  $region61: #{tpu_custom_call.1} parent=0 // pred_fallthru
    _
  // Predicated region
  $region62: #{tpu_custom_call.1} parent=0 // pred_check
    _
  $region63: #{tpu_custom_call.1} parent=0 // pred_check_branch
    %55 = sbr.rel (0) target = $region65
  $region64: #{tpu_custom_call.1} parent=0 // pred_region
    _
  $region65: #{tpu_custom_call.1} parent=0 // pred_fallthru
    _
  // Predicated region
  $region66: #{tpu_custom_call.1} parent=0 // pred_check
    _
  $region67: #{tpu_custom_call.1} parent=0 // pred_check_branch
    %57 = sbr.rel (0) target = $region69
  $region68: #{tpu_custom_call.1} parent=0 // pred_region
    _
  $region69: #{tpu_custom_call.1} parent=0 // pred_fallthru
    _
  // Predicated region
  $region70: #{tpu_custom_call.1} parent=0 // pred_check
    _
  $region71: #{tpu_custom_call.1} parent=0 // pred_check_branch
    %59 = sbr.rel (0) target = $region73
  $region72: #{tpu_custom_call.1} parent=0 // pred_region
    _
  $region73: #{tpu_custom_call.1} parent=0 // pred_fallthru
    _
  // Predicated region
  $region74: #{tpu_custom_call.1} parent=0 // pred_check
    _
  $region75: #{tpu_custom_call.1} parent=0 // pred_check_branch
    %61 = sbr.rel (0) target = $region77
  $region76: #{tpu_custom_call.1} parent=0 // pred_region
    _
  $region77: #{tpu_custom_call.1} parent=0 // pred_fallthru
    _
  %v63 = vld [vmem:[%s0] sm:$0xff]
  %v64 = vld [vmem:[%s0 + $0x8] sm:$0xff]
  %v65 = vld [vmem:[%s0 + $0x10] sm:$0xff]
  %v66 = vld [vmem:[%s0 + $0x18] sm:$0xff]
  %v67 = vld [vmem:[%s0 + $0x20] sm:$0xff]
  %v68 = vld [vmem:[%s0 + $0x28] sm:$0xff]
  %v69 = vld [vmem:[%s0 + $0x30] sm:$0xff]
  %v70 = vld [vmem:[%s0 + $0x38] sm:$0xff]
  %v71 = vld [vmem:[%s0 + $0x40] sm:$0xff]
  %v72 = vld [vmem:[%s0 + $0x48] sm:$0xff]
  %v73 = vld [vmem:[%s0 + $0x50] sm:$0xff]
  %v74 = vld [vmem:[%s0 + $0x58] sm:$0xff]
  %v75 = vld [vmem:[%s0 + $0x60] sm:$0xff]
  %v76 = vld [vmem:[%s0 + $0x68] sm:$0xff]
  %v77 = vld [vmem:[%s0 + $0x70] sm:$0xff]
  %v78 = vld [vmem:[%s0 + $0x78] sm:$0xff]
  %v79 = vld [vmem:[%s1] sm:$0x1]
  %v81 = vlaneseq
  %v82 = vshrl.u32 %v81, 7
  %v83 = vsub.s32 0, %v82
  %v84 = vrot.slane %v79, %v83
  %v86 = vmul.f32 %v63, %v84
  %v87 = vmul.f32 %v64, %v84
  %v88 = vmul.f32 %v65, %v84
  %v89 = vmul.f32 %v66, %v84
  %v90 = vmul.f32 %v67, %v84
  %v91 = vmul.f32 %v68, %v84
  %v92 = vmul.f32 %v69, %v84
  %v93 = vmul.f32 %v70, %v84
  %v94 = vmul.f32 %v71, %v84
  %v95 = vmul.f32 %v72, %v84
  %v96 = vmul.f32 %v73, %v84
  %v97 = vmul.f32 %v74, %v84
  %v98 = vmul.f32 %v75, %v84
  %v99 = vmul.f32 %v76, %v84
  %v100 = vmul.f32 %v77, %v84
  %v101 = vmul.f32 %v78, %v84
  %v102 = vld [vmem:[%s2] sm:$0x1]
  %v104 = vlaneseq
  %v105 = vshrl.u32 %v104, 7
  %v106 = vsub.s32 0, %v105
  %v107 = vrot.slane %v102, %v106
  %v109 = vadd.f32 %v86, %v107
  %v110 = vadd.f32 %v87, %v107
  %v111 = vadd.f32 %v88, %v107
  %v112 = vadd.f32 %v89, %v107
  %v113 = vadd.f32 %v90, %v107
  %v114 = vadd.f32 %v91, %v107
  %v115 = vadd.f32 %v92, %v107
  %v116 = vadd.f32 %v93, %v107
  %v117 = vadd.f32 %v94, %v107
  %v118 = vadd.f32 %v95, %v107
  %v119 = vadd.f32 %v96, %v107
  %v120 = vadd.f32 %v97, %v107
  %v121 = vadd.f32 %v98, %v107
  %v122 = vadd.f32 %v99, %v107
  %v123 = vadd.f32 %v100, %v107
  %v124 = vadd.f32 %v101, %v107
  %v125 = vmax.f32 %v109, 0.0
  %v126 = vmax.f32 %v110, 0.0
  %v127 = vmax.f32 %v111, 0.0
  %v128 = vmax.f32 %v112, 0.0
  %v129 = vmax.f32 %v113, 0.0
  %v130 = vmax.f32 %v114, 0.0
  %v131 = vmax.f32 %v115, 0.0
  %v132 = vmax.f32 %v116, 0.0
  %v133 = vmax.f32 %v117, 0.0
  %v134 = vmax.f32 %v118, 0.0
  %v135 = vmax.f32 %v119, 0.0
  %v136 = vmax.f32 %v120, 0.0
  %v137 = vmax.f32 %v121, 0.0
  %v138 = vmax.f32 %v122, 0.0
  %v139 = vmax.f32 %v123, 0.0
  %v140 = vmax.f32 %v124, 0.0
  %v141 = vpack.c.bf16 %v126, %v125
  %v142 = vpack.c.bf16 %v128, %v127
  %v143 = vpack.c.bf16 %v130, %v129
  %v144 = vpack.c.bf16 %v132, %v131
  %v145 = vpack.c.bf16 %v134, %v133
  %v146 = vpack.c.bf16 %v136, %v135
  %v147 = vpack.c.bf16 %v138, %v137
  %v148 = vpack.c.bf16 %v140, %v139
  %v149 = vld [vmem:[%s3] sm:$0xf]
  %v150 = vld [vmem:[%s3 + $0x4] sm:$0xf]
  %v151 = vld [vmem:[%s3 + $0x8] sm:$0xf]
  %v152 = vld [vmem:[%s3 + $0xc] sm:$0xf]
  %v157 = vunpack.c.l.b16 %v149
  %v158 = vunpack.c.l.b16 %v150
  %v159 = vunpack.c.l.b16 %v151
  %v160 = vunpack.c.l.b16 %v152
  %v161 = vpack.c.b16 %v158, %v157
  %v162 = vpack.c.b16 %v160, %v159
  %vm165 = vcmask 261120
  %v167 = vsel %vm165, %v141, 0
  %v170 = vsel %vm165, %v142, 0
  %v173 = vsel %vm165, %v143, 0
  %v176 = vsel %vm165, %v144, 0
  %v179 = vsel %vm165, %v145, 0
  %v182 = vsel %vm165, %v146, 0
  %v185 = vsel %vm165, %v147, 0
  %v188 = vsel %vm165, %v148, 0
  %190 = vmatprep.subr.bf16.mxu0 0
  %191 = vmatpush1.bf16.msra.mxu0 %v161
  %192 = vmatprep.subr.bf16.mxu0 0
  %193 = vmatpush1.bf16.msra.mxu0 %v162
  %194 = vmatprep.subr.bf16.mxu0 0
  %195 = vmatpush1.bf16.msra.mxu0 0
  %196 = vmatprep.subr.bf16.mxu0 0
  %197 = vmatpush1.bf16.msra.mxu0 0
  %198 = vmatprep.subr.bf16.mxu0 0
  %199 = vmatpush1.bf16.msra.mxu0 0
  %200 = vmatprep.subr.bf16.mxu0 0
  %201 = vmatpush1.bf16.msra.mxu0 0
  %202 = vmatprep.subr.bf16.mxu0 0
  %203 = vmatpush1.bf16.msra.mxu0 0
  %204 = vmatprep.subr.bf16.mxu0 0
  %205 = vmatpush1.bf16.msra.mxu0 0
  %206 = vmatprep.subr.bf16.mxu0 0
  %207 = vmatpush1.bf16.msra.mxu0 0
  %208 = vmatprep.subr.bf16.mxu0 0
  %209 = vmatpush1.bf16.msra.mxu0 0
  %210 = vmatprep.subr.bf16.mxu0 0
  %211 = vmatpush1.bf16.msra.mxu0 0
  %212 = vmatprep.subr.bf16.mxu0 0
  %213 = vmatpush1.bf16.msra.mxu0 0
  %214 = vmatprep.subr.bf16.mxu0 0
  %215 = vmatpush1.bf16.msra.mxu0 0
  %216 = vmatprep.subr.bf16.mxu0 0
  %217 = vmatpush1.bf16.msra.mxu0 0
  %218 = vmatprep.subr.bf16.mxu0 0
  %219 = vmatpush1.bf16.msra.mxu0 0
  %220 = vmatprep.subr.bf16.mxu0 0
  %221 = vmatpush1.bf16.msra.mxu0 0
  %222 = vmatprep.mubr.bf16.mxu0 0
  %223 = vmatmul.mubr.bf16.gmra.mrb[0].mxu0 %v167
  %v224 = vpop.f32.mrb[0].mxu0
  %v225 = vadd.f32 0.0, %v224
  %v226 = vpop.f32.mrb[0].mxu0
  %v227 = vpop.f32.mrb[0].mxu0
  %v228 = vadd.f32 0.0, %v227
  %v229 = vpop.f32.mrb[0].mxu0
  %230 = vmatprep.mubr.bf16.mxu0 0
  %231 = vmatmul.mubr.bf16.gmra.mrb[0].mxu0 %v170
  %v232 = vpop.f32.mrb[0].mxu0
  %v233 = vadd.f32 0.0, %v232
  %v234 = vpop.f32.mrb[0].mxu0
  %v235 = vpop.f32.mrb[0].mxu0
  %v236 = vadd.f32 0.0, %v235
  %v237 = vpop.f32.mrb[0].mxu0
  %238 = vmatprep.mubr.bf16.mxu0 0
  %239 = vmatmul.mubr.bf16.gmra.mrb[0].mxu0 %v173
  %v240 = vpop.f32.mrb[0].mxu0
  %v241 = vadd.f32 0.0, %v240
  %v242 = vpop.f32.mrb[0].mxu0
  %v243 = vpop.f32.mrb[0].mxu0
  %v244 = vadd.f32 0.0, %v243
  %v245 = vpop.f32.mrb[0].mxu0
  %246 = vmatprep.mubr.bf16.mxu0 0
  %247 = vmatmul.mubr.bf16.gmra.mrb[0].mxu0 %v176
  %v248 = vpop.f32.mrb[0].mxu0
  %v249 = vadd.f32 0.0, %v248
  %v250 = vpop.f32.mrb[0].mxu0
  %v251 = vpop.f32.mrb[0].mxu0
  %v252 = vadd.f32 0.0, %v251
  %v253 = vpop.f32.mrb[0].mxu0
  %254 = vmatprep.mubr.bf16.mxu0 0
  %255 = vmatmul.mubr.bf16.gmra.mrb[0].mxu0 %v179
  %v256 = vpop.f32.mrb[0].mxu0
  %v257 = vadd.f32 0.0, %v256
  %v258 = vpop.f32.mrb[0].mxu0
  %v259 = vpop.f32.mrb[0].mxu0
  %v260 = vadd.f32 0.0, %v259
  %v261 = vpop.f32.mrb[0].mxu0
  %262 = vmatprep.mubr.bf16.mxu0 0
  %263 = vmatmul.mubr.bf16.gmra.mrb[0].mxu0 %v182
  %v264 = vpop.f32.mrb[0].mxu0
  %v265 = vadd.f32 0.0, %v264
  %v266 = vpop.f32.mrb[0].mxu0
  %v267 = vpop.f32.mrb[0].mxu0
  %v268 = vadd.f32 0.0, %v267
  %v269 = vpop.f32.mrb[0].mxu0
  %270 = vmatprep.mubr.bf16.mxu0 0
  %271 = vmatmul.mubr.bf16.gmra.mrb[0].mxu0 %v185
  %v272 = vpop.f32.mrb[0].mxu0
  %v273 = vadd.f32 0.0, %v272
  %v274 = vpop.f32.mrb[0].mxu0
  %v275 = vpop.f32.mrb[0].mxu0
  %v276 = vadd.f32 0.0, %v275
  %v277 = vpop.f32.mrb[0].mxu0
  %278 = vmatprep.mubr.bf16.mxu0 0
  %279 = vmatmul.mubr.bf16.gmra.mrb[0].mxu0 %v188
  %v280 = vpop.f32.mrb[0].mxu0
  %v281 = vadd.f32 0.0, %v280
  %v282 = vpop.f32.mrb[0].mxu0
  %v283 = vpop.f32.mrb[0].mxu0
  %v284 = vadd.f32 0.0, %v283
  %v285 = vpop.f32.mrb[0].mxu0
  %286 = vdwg.mxu0
  %v287 = vld [vmem:[%s4] sm:$0x1]
  %v289 = vlaneseq
  %v290 = vshrl.u32 %v289, 7
  %v291 = vsub.s32 0, %v290
  %v292 = vrot.slane %v287, %v291
  %v294 = vmul.f32 %v225, %v292
  %v295 = vmul.f32 %v228, %v292
  %v296 = vmul.f32 %v233, %v292
  %v297 = vmul.f32 %v236, %v292
  %v298 = vmul.f32 %v241, %v292
  %v299 = vmul.f32 %v244, %v292
  %v300 = vmul.f32 %v249, %v292
  %v301 = vmul.f32 %v252, %v292
  %v302 = vmul.f32 %v257, %v292
  %v303 = vmul.f32 %v260, %v292
  %v304 = vmul.f32 %v265, %v292
  %v305 = vmul.f32 %v268, %v292
  %v306 = vmul.f32 %v273, %v292
  %v307 = vmul.f32 %v276, %v292
  %v308 = vmul.f32 %v281, %v292
  %v309 = vmul.f32 %v284, %v292
  %v310 = vld [vmem:[%s5] sm:$0x1]
  %v312 = vlaneseq
  %v313 = vshrl.u32 %v312, 7
  %v314 = vsub.s32 0, %v313
  %v315 = vrot.slane %v310, %v314
  %v317 = vadd.f32 %v294, %v315
  %v318 = vadd.f32 %v295, %v315
  %v319 = vadd.f32 %v296, %v315
  %v320 = vadd.f32 %v297, %v315
  %v321 = vadd.f32 %v298, %v315
  %v322 = vadd.f32 %v299, %v315
  %v323 = vadd.f32 %v300, %v315
  %v324 = vadd.f32 %v301, %v315
  %v325 = vadd.f32 %v302, %v315
  %v326 = vadd.f32 %v303, %v315
  %v327 = vadd.f32 %v304, %v315
  %v328 = vadd.f32 %v305, %v315
  %v329 = vadd.f32 %v306, %v315
  %v330 = vadd.f32 %v307, %v315
  %v331 = vadd.f32 %v308, %v315
  %v332 = vadd.f32 %v309, %v315
  %v333 = vmax.f32 %v317, 0.0
  %v334 = vmax.f32 %v318, 0.0
  %v335 = vmax.f32 %v319, 0.0
  %v336 = vmax.f32 %v320, 0.0
  %v337 = vmax.f32 %v321, 0.0
  %v338 = vmax.f32 %v322, 0.0
  %v339 = vmax.f32 %v323, 0.0
  %v340 = vmax.f32 %v324, 0.0
  %v341 = vmax.f32 %v325, 0.0
  %v342 = vmax.f32 %v326, 0.0
  %v343 = vmax.f32 %v327, 0.0
  %v344 = vmax.f32 %v328, 0.0
  %v345 = vmax.f32 %v329, 0.0
  %v346 = vmax.f32 %v330, 0.0
  %v347 = vmax.f32 %v331, 0.0
  %v348 = vmax.f32 %v332, 0.0
  %v365 = vrot.slane %v333, 7
  %v366 = vrot.slane %v334, 7
  %v367 = vrot.slane %v335, 7
  %v368 = vrot.slane %v336, 7
  %v369 = vrot.slane %v337, 7
  %v370 = vrot.slane %v338, 7
  %v371 = vrot.slane %v339, 7
  %v372 = vrot.slane %v340, 7
  %v373 = vrot.slane %v341, 7
  %v374 = vrot.slane %v342, 7
  %v375 = vrot.slane %v343, 7
  %v376 = vrot.slane %v344, 7
  %v377 = vrot.slane %v345, 7
  %v378 = vrot.slane %v346, 7
  %v379 = vrot.slane %v347, 7
  %v380 = vrot.slane %v348, 7
  %vm397 = vcmask 1040384
  %v398 = vsel %vm397, 0.0, %v365
  %v399 = vsel %vm397, 0.0, %v366
  %v400 = vsel %vm397, 0.0, %v367
  %v401 = vsel %vm397, 0.0, %v368
  %v402 = vsel %vm397, 0.0, %v369
  %v403 = vsel %vm397, 0.0, %v370
  %v404 = vsel %vm397, 0.0, %v371
  %v405 = vsel %vm397, 0.0, %v372
  %v406 = vsel %vm397, 0.0, %v373
  %v407 = vsel %vm397, 0.0, %v374
  %v408 = vsel %vm397, 0.0, %v375
  %v409 = vsel %vm397, 0.0, %v376
  %v410 = vsel %vm397, 0.0, %v377
  %v411 = vsel %vm397, 0.0, %v378
  %v412 = vsel %vm397, 0.0, %v379
  %v413 = vsel %vm397, 0.0, %v380
  %v414 = vsel %vm397, %v365, 0.0
  %v415 = vsel %vm397, %v366, 0.0
  %v416 = vsel %vm397, %v367, 0.0
  %v417 = vsel %vm397, %v368, 0.0
  %v418 = vsel %vm397, %v369, 0.0
  %v419 = vsel %vm397, %v370, 0.0
  %v420 = vsel %vm397, %v371, 0.0
  %v421 = vsel %vm397, %v372, 0.0
  %v422 = vsel %vm397, %v373, 0.0
  %v423 = vsel %vm397, %v374, 0.0
  %v424 = vsel %vm397, %v375, 0.0
  %v425 = vsel %vm397, %v376, 0.0
  %v426 = vsel %vm397, %v377, 0.0
  %v427 = vsel %vm397, %v378, 0.0
  %v428 = vsel %vm397, %v379, 0.0
  %v429 = vsel %vm397, %v380, 0.0
  %vm459 = vcmask 1046528
  %v460 = vrot.slane 0.0, 1
  %v461 = vsel %vm459, %v460, %v460
  %v462 = vrot.slane %v398, 1
  %v463 = vrot.slane %v414, 1
  %v464 = vsel %vm459, %v462, %v463
  %v465 = vrot.slane %v399, 1
  %v466 = vrot.slane %v415, 1
  %v467 = vsel %vm459, %v465, %v466
  %v468 = vrot.slane %v400, 1
  %v469 = vrot.slane %v416, 1
  %v470 = vsel %vm459, %v468, %v469
  %v471 = vrot.slane %v401, 1
  %v472 = vrot.slane %v417, 1
  %v473 = vsel %vm459, %v471, %v472
  %v474 = vrot.slane %v402, 1
  %v475 = vrot.slane %v418, 1
  %v476 = vsel %vm459, %v474, %v475
  %v477 = vrot.slane %v403, 1
  %v478 = vrot.slane %v419, 1
  %v479 = vsel %vm459, %v477, %v478
  %v480 = vrot.slane %v404, 1
  %v481 = vrot.slane %v420, 1
  %v482 = vsel %vm459, %v480, %v481
  %v483 = vrot.slane %v406, 1
  %v484 = vrot.slane %v422, 1
  %v485 = vsel %vm459, %v483, %v484
  %v486 = vrot.slane %v407, 1
  %v487 = vrot.slane %v423, 1
  %v488 = vsel %vm459, %v486, %v487
  %v489 = vrot.slane %v408, 1
  %v490 = vrot.slane %v424, 1
  %v491 = vsel %vm459, %v489, %v490
  %v492 = vrot.slane %v409, 1
  %v493 = vrot.slane %v425, 1
  %v494 = vsel %vm459, %v492, %v493
  %v495 = vrot.slane %v410, 1
  %v496 = vrot.slane %v426, 1
  %v497 = vsel %vm459, %v495, %v496
  %v498 = vrot.slane %v411, 1
  %v499 = vrot.slane %v427, 1
  %v500 = vsel %vm459, %v498, %v499
  %v501 = vrot.slane %v412, 1
  %v502 = vrot.slane %v428, 1
  %v503 = vsel %vm459, %v501, %v502
  %vm504 = vcmask 1045504
  %v505 = vrot.slane 0.0, 2
  %v506 = vsel %vm504, %v505, %v505
  %v507 = vrot.slane %v398, 2
  %v508 = vrot.slane %v414, 2
  %v509 = vsel %vm504, %v507, %v508
  %v510 = vrot.slane %v399, 2
  %v511 = vrot.slane %v415, 2
  %v512 = vsel %vm504, %v510, %v511
  %v513 = vrot.slane %v400, 2
  %v514 = vrot.slane %v416, 2
  %v515 = vsel %vm504, %v513, %v514
  %v516 = vrot.slane %v401, 2
  %v517 = vrot.slane %v417, 2
  %v518 = vsel %vm504, %v516, %v517
  %v519 = vrot.slane %v402, 2
  %v520 = vrot.slane %v418, 2
  %v521 = vsel %vm504, %v519, %v520
  %v522 = vrot.slane %v403, 2
  %v523 = vrot.slane %v419, 2
  %v524 = vsel %vm504, %v522, %v523
  %v525 = vrot.slane %v404, 2
  %v526 = vrot.slane %v420, 2
  %v527 = vsel %vm504, %v525, %v526
  %v528 = vrot.slane %v406, 2
  %v529 = vrot.slane %v422, 2
  %v530 = vsel %vm504, %v528, %v529
  %v531 = vrot.slane %v407, 2
  %v532 = vrot.slane %v423, 2
  %v533 = vsel %vm504, %v531, %v532
  %v534 = vrot.slane %v408, 2
  %v535 = vrot.slane %v424, 2
  %v536 = vsel %vm504, %v534, %v535
  %v537 = vrot.slane %v409, 2
  %v538 = vrot.slane %v425, 2
  %v539 = vsel %vm504, %v537, %v538
  %v540 = vrot.slane %v410, 2
  %v541 = vrot.slane %v426, 2
  %v542 = vsel %vm504, %v540, %v541
  %v543 = vrot.slane %v411, 2
  %v544 = vrot.slane %v427, 2
  %v545 = vsel %vm504, %v543, %v544
  %v546 = vrot.slane %v412, 2
  %v547 = vrot.slane %v428, 2
  %v548 = vsel %vm504, %v546, %v547
  %v553 = vrot.slane %v405, 1
  %v554 = vrot.slane %v421, 1
  %v555 = vsel %vm459, %v553, %v554
  %v556 = vrot.slane %v413, 1
  %v557 = vrot.slane %v429, 1
  %v558 = vsel %vm459, %v556, %v557
  %v575 = vrot.slane %v405, 2
  %v576 = vrot.slane %v421, 2
  %v577 = vsel %vm504, %v575, %v576
  %v578 = vrot.slane %v413, 2
  %v579 = vrot.slane %v429, 2
  %v580 = vsel %vm504, %v578, %v579
  %596 = vrot.lane.b32.xlu0 %v461, 32
  %v597 = vpop.permute.xlu0 %596
  %598 = vrot.lane.b32.xlu0 %v464, 32
  %v599 = vpop.permute.xlu0 %598
  %600 = vrot.lane.b32.xlu0 %v467, 32
  %v601 = vpop.permute.xlu0 %600
  %602 = vrot.lane.b32.xlu0 %v470, 32
  %v603 = vpop.permute.xlu0 %602
  %604 = vrot.lane.b32.xlu0 %v473, 32
  %v605 = vpop.permute.xlu0 %604
  %606 = vrot.lane.b32.xlu0 %v476, 32
  %v607 = vpop.permute.xlu0 %606
  %608 = vrot.lane.b32.xlu0 %v479, 32
  %v609 = vpop.permute.xlu0 %608
  %610 = vrot.lane.b32.xlu0 %v482, 32
  %v611 = vpop.permute.xlu0 %610
  %612 = vrot.lane.b32.xlu0 %v485, 32
  %v613 = vpop.permute.xlu0 %612
  %614 = vrot.lane.b32.xlu0 %v488, 32
  %v615 = vpop.permute.xlu0 %614
  %616 = vrot.lane.b32.xlu0 %v491, 32
  %v617 = vpop.permute.xlu0 %616
  %618 = vrot.lane.b32.xlu0 %v494, 32
  %v619 = vpop.permute.xlu0 %618
  %620 = vrot.lane.b32.xlu0 %v497, 32
  %v621 = vpop.permute.xlu0 %620
  %622 = vrot.lane.b32.xlu0 %v500, 32
  %v623 = vpop.permute.xlu0 %622
  %624 = vrot.lane.b32.xlu0 %v503, 32
  %v625 = vpop.permute.xlu0 %624
  %641 = vrot.lane.b32.xlu0 %v506, 64
  %v642 = vpop.permute.xlu0 %641
  %643 = vrot.lane.b32.xlu0 %v509, 64
  %v644 = vpop.permute.xlu0 %643
  %645 = vrot.lane.b32.xlu0 %v512, 64
  %v646 = vpop.permute.xlu0 %645
  %647 = vrot.lane.b32.xlu0 %v515, 64
  %v648 = vpop.permute.xlu0 %647
  %649 = vrot.lane.b32.xlu0 %v518, 64
  %v650 = vpop.permute.xlu0 %649
  %651 = vrot.lane.b32.xlu0 %v521, 64
  %v652 = vpop.permute.xlu0 %651
  %653 = vrot.lane.b32.xlu0 %v524, 64
  %v654 = vpop.permute.xlu0 %653
  %655 = vrot.lane.b32.xlu0 %v527, 64
  %v656 = vpop.permute.xlu0 %655
  %657 = vrot.lane.b32.xlu0 %v530, 64
  %v658 = vpop.permute.xlu0 %657
  %659 = vrot.lane.b32.xlu0 %v533, 64
  %v660 = vpop.permute.xlu0 %659
  %661 = vrot.lane.b32.xlu0 %v536, 64
  %v662 = vpop.permute.xlu0 %661
  %663 = vrot.lane.b32.xlu0 %v539, 64
  %v664 = vpop.permute.xlu0 %663
  %665 = vrot.lane.b32.xlu0 %v542, 64
  %v666 = vpop.permute.xlu0 %665
  %667 = vrot.lane.b32.xlu0 %v545, 64
  %v668 = vpop.permute.xlu0 %667
  %669 = vrot.lane.b32.xlu0 %v548, 64
  %v670 = vpop.permute.xlu0 %669
  %686 = vrot.lane.b32.xlu0 %v398, 96
  %v687 = vpop.permute.xlu0 %686
  %688 = vrot.lane.b32.xlu0 %v399, 96
  %v689 = vpop.permute.xlu0 %688
  %690 = vrot.lane.b32.xlu0 %v400, 96
  %v691 = vpop.permute.xlu0 %690
  %692 = vrot.lane.b32.xlu0 %v401, 96
  %v693 = vpop.permute.xlu0 %692
  %694 = vrot.lane.b32.xlu0 %v402, 96
  %v695 = vpop.permute.xlu0 %694
  %696 = vrot.lane.b32.xlu0 %v403, 96
  %v697 = vpop.permute.xlu0 %696
  %698 = vrot.lane.b32.xlu0 %v404, 96
  %v699 = vpop.permute.xlu0 %698
  %700 = vrot.lane.b32.xlu0 %v405, 96
  %v701 = vpop.permute.xlu0 %700
  %702 = vrot.lane.b32.xlu0 %v406, 96
  %v703 = vpop.permute.xlu0 %702
  %704 = vrot.lane.b32.xlu0 %v407, 96
  %v705 = vpop.permute.xlu0 %704
  %706 = vrot.lane.b32.xlu0 %v408, 96
  %v707 = vpop.permute.xlu0 %706
  %708 = vrot.lane.b32.xlu0 %v409, 96
  %v709 = vpop.permute.xlu0 %708
  %710 = vrot.lane.b32.xlu0 %v410, 96
  %v711 = vpop.permute.xlu0 %710
  %712 = vrot.lane.b32.xlu0 %v411, 96
  %v713 = vpop.permute.xlu0 %712
  %714 = vrot.lane.b32.xlu0 %v412, 96
  %v715 = vpop.permute.xlu0 %714
  %716 = vrot.lane.b32.xlu0 %v413, 96
  %v717 = vpop.permute.xlu0 %716
  %734 = vrot.lane.b32.xlu0 %v509, 32
  %v735 = vpop.permute.xlu0 %734
  %736 = vrot.lane.b32.xlu0 %v512, 32
  %v737 = vpop.permute.xlu0 %736
  %738 = vrot.lane.b32.xlu0 %v515, 32
  %v739 = vpop.permute.xlu0 %738
  %740 = vrot.lane.b32.xlu0 %v518, 32
  %v741 = vpop.permute.xlu0 %740
  %742 = vrot.lane.b32.xlu0 %v521, 32
  %v743 = vpop.permute.xlu0 %742
  %744 = vrot.lane.b32.xlu0 %v524, 32
  %v745 = vpop.permute.xlu0 %744
  %746 = vrot.lane.b32.xlu0 %v527, 32
  %v747 = vpop.permute.xlu0 %746
  %748 = vrot.lane.b32.xlu0 %v577, 32
  %v749 = vpop.permute.xlu0 %748
  %750 = vrot.lane.b32.xlu0 %v530, 32
  %v751 = vpop.permute.xlu0 %750
  %752 = vrot.lane.b32.xlu0 %v533, 32
  %v753 = vpop.permute.xlu0 %752
  %754 = vrot.lane.b32.xlu0 %v536, 32
  %v755 = vpop.permute.xlu0 %754
  %756 = vrot.lane.b32.xlu0 %v539, 32
  %v757 = vpop.permute.xlu0 %756
  %758 = vrot.lane.b32.xlu0 %v542, 32
  %v759 = vpop.permute.xlu0 %758
  %760 = vrot.lane.b32.xlu0 %v545, 32
  %v761 = vpop.permute.xlu0 %760
  %762 = vrot.lane.b32.xlu0 %v548, 32
  %v763 = vpop.permute.xlu0 %762
  %764 = vrot.lane.b32.xlu0 %v580, 32
  %v765 = vpop.permute.xlu0 %764
  %782 = vrot.lane.b32.xlu0 %v399, 64
  %v783 = vpop.permute.xlu0 %782
  %784 = vrot.lane.b32.xlu0 %v400, 64
  %v785 = vpop.permute.xlu0 %784
  %786 = vrot.lane.b32.xlu0 %v401, 64
  %v787 = vpop.permute.xlu0 %786
  %788 = vrot.lane.b32.xlu0 %v402, 64
  %v789 = vpop.permute.xlu0 %788
  %790 = vrot.lane.b32.xlu0 %v403, 64
  %v791 = vpop.permute.xlu0 %790
  %792 = vrot.lane.b32.xlu0 %v404, 64
  %v793 = vpop.permute.xlu0 %792
  %794 = vrot.lane.b32.xlu0 %v405, 64
  %v795 = vpop.permute.xlu0 %794
  %796 = vrot.lane.b32.xlu0 0.0, 64
  %v797 = vpop.permute.xlu0 %796
  %798 = vrot.lane.b32.xlu0 %v407, 64
  %v799 = vpop.permute.xlu0 %798
  %800 = vrot.lane.b32.xlu0 %v408, 64
  %v801 = vpop.permute.xlu0 %800
  %802 = vrot.lane.b32.xlu0 %v409, 64
  %v803 = vpop.permute.xlu0 %802
  %804 = vrot.lane.b32.xlu0 %v410, 64
  %v805 = vpop.permute.xlu0 %804
  %806 = vrot.lane.b32.xlu0 %v411, 64
  %v807 = vpop.permute.xlu0 %806
  %808 = vrot.lane.b32.xlu0 %v412, 64
  %v809 = vpop.permute.xlu0 %808
  %810 = vrot.lane.b32.xlu0 %v413, 64
  %v811 = vpop.permute.xlu0 %810
  %827 = vrot.lane.b32.xlu0 %v467, 96
  %v828 = vpop.permute.xlu0 %827
  %829 = vrot.lane.b32.xlu0 %v470, 96
  %v830 = vpop.permute.xlu0 %829
  %831 = vrot.lane.b32.xlu0 %v473, 96
  %v832 = vpop.permute.xlu0 %831
  %833 = vrot.lane.b32.xlu0 %v476, 96
  %v834 = vpop.permute.xlu0 %833
  %835 = vrot.lane.b32.xlu0 %v479, 96
  %v836 = vpop.permute.xlu0 %835
  %837 = vrot.lane.b32.xlu0 %v482, 96
  %v838 = vpop.permute.xlu0 %837
  %839 = vrot.lane.b32.xlu0 %v555, 96
  %v840 = vpop.permute.xlu0 %839
  %841 = vrot.lane.b32.xlu0 %v461, 96
  %v842 = vpop.permute.xlu0 %841
  %843 = vrot.lane.b32.xlu0 %v488, 96
  %v844 = vpop.permute.xlu0 %843
  %845 = vrot.lane.b32.xlu0 %v491, 96
  %v846 = vpop.permute.xlu0 %845
  %847 = vrot.lane.b32.xlu0 %v494, 96
  %v848 = vpop.permute.xlu0 %847
  %849 = vrot.lane.b32.xlu0 %v497, 96
  %v850 = vpop.permute.xlu0 %849
  %851 = vrot.lane.b32.xlu0 %v500, 96
  %v852 = vpop.permute.xlu0 %851
  %853 = vrot.lane.b32.xlu0 %v503, 96
  %v854 = vpop.permute.xlu0 %853
  %855 = vrot.lane.b32.xlu0 %v558, 96
  %v856 = vpop.permute.xlu0 %855
  %v872 = vsel %vm165, 0.0, %v597
  %v873 = vsel %vm165, %v398, %v599
  %v874 = vsel %vm165, %v399, %v601
  %v875 = vsel %vm165, %v400, %v603
  %v876 = vsel %vm165, %v401, %v605
  %v877 = vsel %vm165, %v402, %v607
  %v878 = vsel %vm165, %v403, %v609
  %v879 = vsel %vm165, %v404, %v611
  %v880 = vsel %vm165, %v406, %v613
  %v881 = vsel %vm165, %v407, %v615
  %v882 = vsel %vm165, %v408, %v617
  %v883 = vsel %vm165, %v409, %v619
  %v884 = vsel %vm165, %v410, %v621
  %v885 = vsel %vm165, %v411, %v623
  %v886 = vsel %vm165, %v412, %v625
  %vm887 = vcmask 523264
  %v888 = vsel %vm887, %v872, %v642
  %v889 = vsel %vm887, %v873, %v644
  %v890 = vsel %vm887, %v874, %v646
  %v891 = vsel %vm887, %v875, %v648
  %v892 = vsel %vm887, %v876, %v650
  %v893 = vsel %vm887, %v877, %v652
  %v894 = vsel %vm887, %v878, %v654
  %v895 = vsel %vm887, %v879, %v656
  %v896 = vsel %vm887, %v880, %v658
  %v897 = vsel %vm887, %v881, %v660
  %v898 = vsel %vm887, %v882, %v662
  %v899 = vsel %vm887, %v883, %v664
  %v900 = vsel %vm887, %v884, %v666
  %v901 = vsel %vm887, %v885, %v668
  %v902 = vsel %vm887, %v886, %v670
  %vm903 = vcmask 785408
  %v904 = vsel %vm903, %v888, %v687
  %v905 = vsel %vm903, %v889, %v689
  %v906 = vsel %vm903, %v890, %v691
  %v907 = vsel %vm903, %v891, %v693
  %v908 = vsel %vm903, %v892, %v695
  %v909 = vsel %vm903, %v893, %v697
  %v910 = vsel %vm903, %v894, %v699
  %v911 = vsel %vm903, %v895, %v701
  %v912 = vsel %vm903, %v888, %v703
  %v913 = vsel %vm903, %v896, %v705
  %v914 = vsel %vm903, %v897, %v707
  %v915 = vsel %vm903, %v898, %v709
  %v916 = vsel %vm903, %v899, %v711
  %v917 = vsel %vm903, %v900, %v713
  %v918 = vsel %vm903, %v901, %v715
  %v919 = vsel %vm903, %v902, %v717
  %v920 = vsel %vm165, %v464, %v735
  %v921 = vsel %vm165, %v467, %v737
  %v922 = vsel %vm165, %v470, %v739
  %v923 = vsel %vm165, %v473, %v741
  %v924 = vsel %vm165, %v476, %v743
  %v925 = vsel %vm165, %v479, %v745
  %v926 = vsel %vm165, %v482, %v747
  %v927 = vsel %vm165, %v555, %v749
  %v928 = vsel %vm165, %v485, %v751
  %v929 = vsel %vm165, %v488, %v753
  %v930 = vsel %vm165, %v491, %v755
  %v931 = vsel %vm165, %v494, %v757
  %v932 = vsel %vm165, %v497, %v759
  %v933 = vsel %vm165, %v500, %v761
  %v934 = vsel %vm165, %v503, %v763
  %v935 = vsel %vm165, %v558, %v765
  %v936 = vsel %vm887, %v920, %v783
  %v937 = vsel %vm887, %v921, %v785
  %v938 = vsel %vm887, %v922, %v787
  %v939 = vsel %vm887, %v923, %v789
  %v940 = vsel %vm887, %v924, %v791
  %v941 = vsel %vm887, %v925, %v793
  %v942 = vsel %vm887, %v926, %v795
  %v943 = vsel %vm887, %v927, %v797
  %v944 = vsel %vm887, %v928, %v799
  %v945 = vsel %vm887, %v929, %v801
  %v946 = vsel %vm887, %v930, %v803
  %v947 = vsel %vm887, %v931, %v805
  %v948 = vsel %vm887, %v932, %v807
  %v949 = vsel %vm887, %v933, %v809
  %v950 = vsel %vm887, %v934, %v811
  %v951 = vsel %vm887, %v935, %v797
  %v952 = vsel %vm903, %v936, %v828
  %v953 = vsel %vm903, %v937, %v830
  %v954 = vsel %vm903, %v938, %v832
  %v955 = vsel %vm903, %v939, %v834
  %v956 = vsel %vm903, %v940, %v836
  %v957 = vsel %vm903, %v941, %v838
  %v958 = vsel %vm903, %v942, %v840
  %v959 = vsel %vm903, %v943, %v842
  %v960 = vsel %vm903, %v944, %v844
  %v961 = vsel %vm903, %v945, %v846
  %v962 = vsel %vm903, %v946, %v848
  %v963 = vsel %vm903, %v947, %v850
  %v964 = vsel %vm903, %v948, %v852
  %v965 = vsel %vm903, %v949, %v854
  %v966 = vsel %vm903, %v950, %v856
  %v967 = vsel %vm903, %v951, %v842
  %v968 = vpack.c.bf16 %v905, %v904
  %v969 = vpack.c.bf16 %v953, %v952
  %v970 = vpack.c.bf16 %v515, %v512
  %v971 = vpack.c.bf16 %v907, %v906
  %v972 = vpack.c.bf16 %v955, %v954
  %v973 = vpack.c.bf16 %v521, %v518
  %v974 = vpack.c.bf16 %v909, %v908
  %v975 = vpack.c.bf16 %v957, %v956
  %v976 = vpack.c.bf16 %v527, %v524
  %v977 = vpack.c.bf16 %v911, %v910
  %v978 = vpack.c.bf16 %v959, %v958
  %v979 = vpack.c.bf16 %v506, %v577
  %v980 = vpack.c.bf16 %v913, %v912
  %v981 = vpack.c.bf16 %v961, %v960
  %v982 = vpack.c.bf16 %v536, %v533
  %v983 = vpack.c.bf16 %v915, %v914
  %v984 = vpack.c.bf16 %v963, %v962
  %v985 = vpack.c.bf16 %v542, %v539
  %v986 = vpack.c.bf16 %v917, %v916
  %v987 = vpack.c.bf16 %v965, %v964
  %v988 = vpack.c.bf16 %v548, %v545
  %v989 = vpack.c.bf16 %v919, %v918
  %v990 = vpack.c.bf16 %v967, %v966
  %v991 = vpack.c.bf16 %v506, %v580
  %v992 = vld [vmem:[%s6] sm:$0xf]
  %v993 = vld [vmem:[%s6 + $0x4] sm:$0xf]
  %v994 = vld [vmem:[%s6 + $0x8] sm:$0xf]
  %v995 = vld [vmem:[%s6 + $0xc] sm:$0xf]
  %v996 = vld [vmem:[%s6 + $0x10] sm:$0xf]
  %v997 = vld [vmem:[%s6 + $0x14] sm:$0xf]
  %v998 = vld [vmem:[%s6 + $0x18] sm:$0xf]
  %v999 = vld [vmem:[%s6 + $0x1c] sm:$0xf]
  %v1000 = vld [vmem:[%s6 + $0x20] sm:$0xf]
  %v1001 = vld [vmem:[%s6 + $0x24] sm:$0xf]
  %v1002 = vld [vmem:[%s6 + $0x28] sm:$0xf]
  %v1003 = vld [vmem:[%s6 + $0x2c] sm:$0xf]
  %v1004 = vld [vmem:[%s6 + $0x30] sm:$0xf]
  %v1005 = vld [vmem:[%s6 + $0x34] sm:$0xf]
  %v1006 = vld [vmem:[%s6 + $0x38] sm:$0xf]
  %v1007 = vld [vmem:[%s6 + $0x3c] sm:$0xf]
  %v1008 = vld [vmem:[%s6 + $0x40] sm:$0xf]
  %v1009 = vld [vmem:[%s6 + $0x44] sm:$0xf]
  %v1010 = vld [vmem:[%s6 + $0x48] sm:$0xf]
  %v1011 = vld [vmem:[%s6 + $0x4c] sm:$0xf]
  %v1012 = vld [vmem:[%s6 + $0x50] sm:$0xf]
  %v1013 = vld [vmem:[%s6 + $0x54] sm:$0xf]
  %v1014 = vld [vmem:[%s6 + $0x58] sm:$0xf]
  %v1015 = vld [vmem:[%s6 + $0x5c] sm:$0xf]
  %v1016 = vld [vmem:[%s6 + $0x60] sm:$0xf]
  %v1017 = vld [vmem:[%s6 + $0x64] sm:$0xf]
  %v1018 = vld [vmem:[%s6 + $0x68] sm:$0xf]
  %v1019 = vld [vmem:[%s6 + $0x6c] sm:$0xf]
  %v1020 = vld [vmem:[%s6 + $0x70] sm:$0xf]
  %v1021 = vld [vmem:[%s6 + $0x74] sm:$0xf]
  %v1022 = vld [vmem:[%s6 + $0x78] sm:$0xf]
  %v1023 = vld [vmem:[%s6 + $0x7c] sm:$0xf]
  %v1024 = vld [vmem:[%s6 + $0x80] sm:$0xf]
  %v1025 = vld [vmem:[%s6 + $0x84] sm:$0xf]
  %v1026 = vld [vmem:[%s6 + $0x88] sm:$0xf]
  %v1027 = vld [vmem:[%s6 + $0x8c] sm:$0xf]
  %v1064 = vunpack.c.l.b16 %v992
  %v1065 = vunpack.c.l.b16 %v993
  %v1066 = vunpack.c.l.b16 %v994
  %v1067 = vunpack.c.l.b16 %v995
  %v1068 = vunpack.c.l.b16 %v996
  %v1069 = vunpack.c.l.b16 %v997
  %v1070 = vunpack.c.l.b16 %v998
  %v1071 = vunpack.c.l.b16 %v999
  %v1072 = vunpack.c.l.b16 %v1000
  %v1073 = vunpack.c.l.b16 %v1001
  %v1074 = vunpack.c.l.b16 %v1002
  %v1075 = vunpack.c.l.b16 %v1003
  %v1076 = vunpack.c.l.b16 %v1004
  %v1077 = vunpack.c.l.b16 %v1005
  %v1078 = vunpack.c.l.b16 %v1006
  %v1079 = vunpack.c.l.b16 %v1007
  %v1080 = vunpack.c.l.b16 %v1008
  %v1081 = vunpack.c.l.b16 %v1009
  %v1082 = vunpack.c.l.b16 %v1010
  %v1083 = vunpack.c.l.b16 %v1011
  %v1084 = vunpack.c.l.b16 %v1012
  %v1085 = vunpack.c.l.b16 %v1013
  %v1086 = vunpack.c.l.b16 %v1014
  %v1087 = vunpack.c.l.b16 %v1015
  %v1088 = vunpack.c.l.b16 %v1016
  %v1089 = vunpack.c.l.b16 %v1017
  %v1090 = vunpack.c.l.b16 %v1018
  %v1091 = vunpack.c.l.b16 %v1019
  %v1092 = vunpack.c.l.b16 %v1020
  %v1093 = vunpack.c.l.b16 %v1021
  %v1094 = vunpack.c.l.b16 %v1022
  %v1095 = vunpack.c.l.b16 %v1023
  %v1096 = vunpack.c.l.b16 %v1024
  %v1097 = vunpack.c.l.b16 %v1025
  %v1098 = vunpack.c.l.b16 %v1026
  %v1099 = vunpack.c.l.b16 %v1027
  %v1100 = vpack.c.b16 %v1065, %v1064
  %v1101 = vpack.c.b16 %v1067, %v1066
  %v1102 = vpack.c.b16 %v1069, %v1068
  %v1103 = vpack.c.b16 %v1071, %v1070
  %v1104 = vpack.c.b16 %v1073, %v1072
  %v1105 = vpack.c.b16 %v1075, %v1074
  %v1106 = vpack.c.b16 %v1077, %v1076
  %v1107 = vpack.c.b16 %v1079, %v1078
  %v1108 = vpack.c.b16 %v1081, %v1080
  %v1109 = vpack.c.b16 %v1083, %v1082
  %v1110 = vpack.c.b16 %v1085, %v1084
  %v1111 = vpack.c.b16 %v1087, %v1086
  %v1112 = vpack.c.b16 %v1089, %v1088
  %v1113 = vpack.c.b16 %v1091, %v1090
  %v1114 = vpack.c.b16 %v1093, %v1092
  %v1115 = vpack.c.b16 %v1095, %v1094
  %v1116 = vpack.c.b16 %v1097, %v1096
  %v1117 = vpack.c.b16 %v1099, %v1098
  %v1137 = vsel %vm165, %v970, 0
  %v1140 = vsel %vm165, %v973, 0
  %v1143 = vsel %vm165, %v976, 0
  %v1146 = vsel %vm165, %v979, 0
  %v1149 = vsel %vm165, %v982, 0
  %v1152 = vsel %vm165, %v985, 0
  %v1155 = vsel %vm165, %v988, 0
  %v1158 = vsel %vm165, %v991, 0
  %1160 = vmatprep.subr.bf16.mxu0 0
  %1161 = vmatpush1.bf16.msra.mxu0 %v1100
  %1162 = vmatprep.subr.bf16.mxu0 0
  %1163 = vmatpush1.bf16.msra.mxu0 %v1101
  %1164 = vmatprep.subr.bf16.mxu0 0
  %1165 = vmatpush1.bf16.msra.mxu0 %v1102
  %1166 = vmatprep.subr.bf16.mxu0 0
  %1167 = vmatpush1.bf16.msra.mxu0 %v1103
  %1168 = vmatprep.subr.bf16.mxu0 0
  %1169 = vmatpush1.bf16.msra.mxu0 %v1104
  %1170 = vmatprep.subr.bf16.mxu0 0
  %1171 = vmatpush1.bf16.msra.mxu0 %v1105
  %1172 = vmatprep.subr.bf16.mxu0 0
  %1173 = vmatpush1.bf16.msra.mxu0 %v1106
  %1174 = vmatprep.subr.bf16.mxu0 0
  %1175 = vmatpush1.bf16.msra.mxu0 %v1107
  %1176 = vmatprep.subr.bf16.mxu0 0
  %1177 = vmatpush1.bf16.msra.mxu0 %v1108
  %1178 = vmatprep.subr.bf16.mxu0 0
  %1179 = vmatpush1.bf16.msra.mxu0 %v1109
  %1180 = vmatprep.subr.bf16.mxu0 0
  %1181 = vmatpush1.bf16.msra.mxu0 %v1110
  %1182 = vmatprep.subr.bf16.mxu0 0
  %1183 = vmatpush1.bf16.msra.mxu0 %v1111
  %1184 = vmatprep.subr.bf16.mxu0 0
  %1185 = vmatpush1.bf16.msra.mxu0 %v1112
  %1186 = vmatprep.subr.bf16.mxu0 0
  %1187 = vmatpush1.bf16.msra.mxu0 %v1113
  %1188 = vmatprep.subr.bf16.mxu0 0
  %1189 = vmatpush1.bf16.msra.mxu0 %v1114
  %1190 = vmatprep.subr.bf16.mxu0 0
  %1191 = vmatpush1.bf16.msra.mxu0 %v1115
  %1192 = vmatprep.mubr.bf16.mxu0 %v969
  %1193 = vmatmul.mubr.bf16.gmra.mrb[0].mxu0 %v968
  %v1194 = vpop.f32.mrb[0].mxu0
  %v1195 = vadd.f32 0.0, %v1194
  %v1196 = vpop.f32.mrb[0].mxu0
  %v1197 = vpop.f32.mrb[0].mxu0
  %v1198 = vadd.f32 0.0, %v1197
  %v1199 = vpop.f32.mrb[0].mxu0
  %1200 = vmatprep.mubr.bf16.mxu0 %v972
  %1201 = vmatmul.mubr.bf16.gmra.mrb[0].mxu0 %v971
  %v1202 = vpop.f32.mrb[0].mxu0
  %v1203 = vadd.f32 0.0, %v1202
  %v1204 = vpop.f32.mrb[0].mxu0
  %v1205 = vpop.f32.mrb[0].mxu0
  %v1206 = vadd.f32 0.0, %v1205
  %v1207 = vpop.f32.mrb[0].mxu0
  %1208 = vmatprep.mubr.bf16.mxu0 %v975
  %1209 = vmatmul.mubr.bf16.gmra.mrb[0].mxu0 %v974
  %v1210 = vpop.f32.mrb[0].mxu0
  %v1211 = vadd.f32 0.0, %v1210
  %v1212 = vpop.f32.mrb[0].mxu0
  %v1213 = vpop.f32.mrb[0].mxu0
  %v1214 = vadd.f32 0.0, %v1213
  %v1215 = vpop.f32.mrb[0].mxu0
  %1216 = vmatprep.mubr.bf16.mxu0 %v978
  %1217 = vmatmul.mubr.bf16.gmra.mrb[0].mxu0 %v977
  %v1218 = vpop.f32.mrb[0].mxu0
  %v1219 = vadd.f32 0.0, %v1218
  %v1220 = vpop.f32.mrb[0].mxu0
  %v1221 = vpop.f32.mrb[0].mxu0
  %v1222 = vadd.f32 0.0, %v1221
  %v1223 = vpop.f32.mrb[0].mxu0
  %1224 = vmatprep.mubr.bf16.mxu0 %v981
  %1225 = vmatmul.mubr.bf16.gmra.mrb[0].mxu0 %v980
  %v1226 = vpop.f32.mrb[0].mxu0
  %v1227 = vadd.f32 0.0, %v1226
  %v1228 = vpop.f32.mrb[0].mxu0
  %v1229 = vpop.f32.mrb[0].mxu0
  %v1230 = vadd.f32 0.0, %v1229
  %v1231 = vpop.f32.mrb[0].mxu0
  %1232 = vmatprep.mubr.bf16.mxu0 %v984
  %1233 = vmatmul.mubr.bf16.gmra.mrb[0].mxu0 %v983
  %v1234 = vpop.f32.mrb[0].mxu0
  %v1235 = vadd.f32 0.0, %v1234
  %v1236 = vpop.f32.mrb[0].mxu0
  %v1237 = vpop.f32.mrb[0].mxu0
  %v1238 = vadd.f32 0.0, %v1237
  %v1239 = vpop.f32.mrb[0].mxu0
  %1240 = vmatprep.mubr.bf16.mxu0 %v987
  %1241 = vmatmul.mubr.bf16.gmra.mrb[0].mxu0 %v986
  %v1242 = vpop.f32.mrb[0].mxu0
  %v1243 = vadd.f32 0.0, %v1242
  %v1244 = vpop.f32.mrb[0].mxu0
  %v1245 = vpop.f32.mrb[0].mxu0
  %v1246 = vadd.f32 0.0, %v1245
  %v1247 = vpop.f32.mrb[0].mxu0
  %1248 = vmatprep.mubr.bf16.mxu0 %v990
  %1249 = vmatmul.mubr.bf16.gmra.mrb[0].mxu0 %v989
  %v1250 = vpop.f32.mrb[0].mxu0
  %v1251 = vadd.f32 0.0, %v1250
  %v1252 = vpop.f32.mrb[0].mxu0
  %v1253 = vpop.f32.mrb[0].mxu0
  %v1254 = vadd.f32 0.0, %v1253
  %v1255 = vpop.f32.mrb[0].mxu0
  %1256 = vdwg.mxu0
  %1257 = vmatprep.subr.bf16.mxu0 0
  %1258 = vmatpush1.bf16.msra.mxu0 %v1116
  %1259 = vmatprep.subr.bf16.mxu0 0
  %1260 = vmatpush1.bf16.msra.mxu0 %v1117
  %1261 = vmatprep.subr.bf16.mxu0 0
  %1262 = vmatpush1.bf16.msra.mxu0 0
  %1263 = vmatprep.subr.bf16.mxu0 0
  %1264 = vmatpush1.bf16.msra.mxu0 0
  %1265 = vmatprep.subr.bf16.mxu0 0
  %1266 = vmatpush1.bf16.msra.mxu0 0
  %1267 = vmatprep.subr.bf16.mxu0 0
  %1268 = vmatpush1.bf16.msra.mxu0 0
  %1269 = vmatprep.subr.bf16.mxu0 0
  %1270 = vmatpush1.bf16.msra.mxu0 0
  %1271 = vmatprep.subr.bf16.mxu0 0
  %1272 = vmatpush1.bf16.msra.mxu0 0
  %1273 = vmatprep.subr.bf16.mxu0 0
  %1274 = vmatpush1.bf16.msra.mxu0 0
  %1275 = vmatprep.subr.bf16.mxu0 0
  %1276 = vmatpush1.bf16.msra.mxu0 0
  %1277 = vmatprep.subr.bf16.mxu0 0
  %1278 = vmatpush1.bf16.msra.mxu0 0
  %1279 = vmatprep.subr.bf16.mxu0 0
  %1280 = vmatpush1.bf16.msra.mxu0 0
  %1281 = vmatprep.subr.bf16.mxu0 0
  %1282 = vmatpush1.bf16.msra.mxu0 0
  %1283 = vmatprep.subr.bf16.mxu0 0
  %1284 = vmatpush1.bf16.msra.mxu0 0
  %1285 = vmatprep.subr.bf16.mxu0 0
  %1286 = vmatpush1.bf16.msra.mxu0 0
  %1287 = vmatprep.subr.bf16.mxu0 0
  %1288 = vmatpush1.bf16.msra.mxu0 0
  %1289 = vmatprep.mubr.bf16.mxu0 0
  %1290 = vmatmul.mubr.bf16.gmra.mrb[0].mxu0 %v1137
  %v1291 = vpop.f32.mrb[0].mxu0
  %v1292 = vadd.f32 %v1195, %v1291
  %v1293 = vpop.f32.mrb[0].mxu0
  %v1294 = vpop.f32.mrb[0].mxu0
  %v1295 = vadd.f32 %v1198, %v1294
  %v1296 = vpop.f32.mrb[0].mxu0
  %1297 = vmatprep.mubr.bf16.mxu0 0
  %1298 = vmatmul.mubr.bf16.gmra.mrb[0].mxu0 %v1140
  %v1299 = vpop.f32.mrb[0].mxu0
  %v1300 = vadd.f32 %v1203, %v1299
  %v1301 = vpop.f32.mrb[0].mxu0
  %v1302 = vpop.f32.mrb[0].mxu0
  %v1303 = vadd.f32 %v1206, %v1302
  %v1304 = vpop.f32.mrb[0].mxu0
  %1305 = vmatprep.mubr.bf16.mxu0 0
  %1306 = vmatmul.mubr.bf16.gmra.mrb[0].mxu0 %v1143
  %v1307 = vpop.f32.mrb[0].mxu0
  %v1308 = vadd.f32 %v1211, %v1307
  %v1309 = vpop.f32.mrb[0].mxu0
  %v1310 = vpop.f32.mrb[0].mxu0
  %v1311 = vadd.f32 %v1214, %v1310
  %v1312 = vpop.f32.mrb[0].mxu0
  %1313 = vmatprep.mubr.bf16.mxu0 0
  %1314 = vmatmul.mubr.bf16.gmra.mrb[0].mxu0 %v1146
  %v1315 = vpop.f32.mrb[0].mxu0
  %v1316 = vadd.f32 %v1219, %v1315
  %v1317 = vpop.f32.mrb[0].mxu0
  %v1318 = vpop.f32.mrb[0].mxu0
  %v1319 = vadd.f32 %v1222, %v1318
  %v1320 = vpop.f32.mrb[0].mxu0
  %1321 = vmatprep.mubr.bf16.mxu0 0
  %1322 = vmatmul.mubr.bf16.gmra.mrb[0].mxu0 %v1149
  %v1323 = vpop.f32.mrb[0].mxu0
  %v1324 = vadd.f32 %v1227, %v1323
  %v1325 = vpop.f32.mrb[0].mxu0
  %v1326 = vpop.f32.mrb[0].mxu0
  %v1327 = vadd.f32 %v1230, %v1326
  %v1328 = vpop.f32.mrb[0].mxu0
  %1329 = vmatprep.mubr.bf16.mxu0 0
  %1330 = vmatmul.mubr.bf16.gmra.mrb[0].mxu0 %v1152
  %v1331 = vpop.f32.mrb[0].mxu0
  %v1332 = vadd.f32 %v1235, %v1331
  %v1333 = vpop.f32.mrb[0].mxu0
  %v1334 = vpop.f32.mrb[0].mxu0
  %v1335 = vadd.f32 %v1238, %v1334
  %v1336 = vpop.f32.mrb[0].mxu0
  %1337 = vmatprep.mubr.bf16.mxu0 0
  %1338 = vmatmul.mubr.bf16.gmra.mrb[0].mxu0 %v1155
  %v1339 = vpop.f32.mrb[0].mxu0
  %v1340 = vadd.f32 %v1243, %v1339
  %v1341 = vpop.f32.mrb[0].mxu0
  %v1342 = vpop.f32.mrb[0].mxu0
  %v1343 = vadd.f32 %v1246, %v1342
  %v1344 = vpop.f32.mrb[0].mxu0
  %1345 = vmatprep.mubr.bf16.mxu0 0
  %1346 = vmatmul.mubr.bf16.gmra.mrb[0].mxu0 %v1158
  %v1347 = vpop.f32.mrb[0].mxu0
  %v1348 = vadd.f32 %v1251, %v1347
  %v1349 = vpop.f32.mrb[0].mxu0
  %v1350 = vpop.f32.mrb[0].mxu0
  %v1351 = vadd.f32 %v1254, %v1350
  %v1352 = vpop.f32.mrb[0].mxu0
  %1353 = vdwg.mxu0
  %1370 = vrot.lane.b32.xlu0 %v1292, 32
  %v1371 = vpop.permute.xlu0 %1370
  %1372 = vrot.lane.b32.xlu0 %v1295, 32
  %v1373 = vpop.permute.xlu0 %1372
  %1374 = vrot.lane.b32.xlu0 %v1300, 32
  %v1375 = vpop.permute.xlu0 %1374
  %1376 = vrot.lane.b32.xlu0 %v1303, 32
  %v1377 = vpop.permute.xlu0 %1376
  %1378 = vrot.lane.b32.xlu0 %v1308, 32
  %v1379 = vpop.permute.xlu0 %1378
  %1380 = vrot.lane.b32.xlu0 %v1311, 32
  %v1381 = vpop.permute.xlu0 %1380
  %1382 = vrot.lane.b32.xlu0 %v1316, 32
  %v1383 = vpop.permute.xlu0 %1382
  %1384 = vrot.lane.b32.xlu0 %v1319, 32
  %v1385 = vpop.permute.xlu0 %1384
  %1386 = vrot.lane.b32.xlu0 %v1324, 32
  %v1387 = vpop.permute.xlu0 %1386
  %1388 = vrot.lane.b32.xlu0 %v1327, 32
  %v1389 = vpop.permute.xlu0 %1388
  %1390 = vrot.lane.b32.xlu0 %v1332, 32
  %v1391 = vpop.permute.xlu0 %1390
  %1392 = vrot.lane.b32.xlu0 %v1335, 32
  %v1393 = vpop.permute.xlu0 %1392
  %1394 = vrot.lane.b32.xlu0 %v1340, 32
  %v1395 = vpop.permute.xlu0 %1394
  %1396 = vrot.lane.b32.xlu0 %v1343, 32
  %v1397 = vpop.permute.xlu0 %1396
  %1398 = vrot.lane.b32.xlu0 %v1348, 32
  %v1399 = vpop.permute.xlu0 %1398
  %1400 = vrot.lane.b32.xlu0 %v1351, 32
  %v1401 = vpop.permute.xlu0 %1400
  %v1418 = vsel %vm165, %v63, %v1371
  %v1419 = vsel %vm165, %v64, %v1373
  %v1420 = vsel %vm165, %v65, %v1375
  %v1421 = vsel %vm165, %v66, %v1377
  %v1422 = vsel %vm165, %v67, %v1379
  %v1423 = vsel %vm165, %v68, %v1381
  %v1424 = vsel %vm165, %v69, %v1383
  %v1425 = vsel %vm165, %v70, %v1385
  %v1426 = vsel %vm165, %v71, %v1387
  %v1427 = vsel %vm165, %v72, %v1389
  %v1428 = vsel %vm165, %v73, %v1391
  %v1429 = vsel %vm165, %v74, %v1393
  %v1430 = vsel %vm165, %v75, %v1395
  %v1431 = vsel %vm165, %v76, %v1397
  %v1432 = vsel %vm165, %v77, %v1399
  %v1433 = vsel %vm165, %v78, %v1401
  %v1434 = vld [vmem:[%s7] sm:$0x1]
  %v1436 = vlaneseq
  %v1437 = vshrl.u32 %v1436, 7
  %v1438 = vsub.s32 0, %v1437
  %v1439 = vrot.slane %v1434, %v1438
  %v1441 = vmul.f32 %v1418, %v1439
  %v1442 = vmul.f32 %v1419, %v1439
  %v1443 = vmul.f32 %v1420, %v1439
  %v1444 = vmul.f32 %v1421, %v1439
  %v1445 = vmul.f32 %v1422, %v1439
  %v1446 = vmul.f32 %v1423, %v1439
  %v1447 = vmul.f32 %v1424, %v1439
  %v1448 = vmul.f32 %v1425, %v1439
  %v1449 = vmul.f32 %v1426, %v1439
  %v1450 = vmul.f32 %v1427, %v1439
  %v1451 = vmul.f32 %v1428, %v1439
  %v1452 = vmul.f32 %v1429, %v1439
  %v1453 = vmul.f32 %v1430, %v1439
  %v1454 = vmul.f32 %v1431, %v1439
  %v1455 = vmul.f32 %v1432, %v1439
  %v1456 = vmul.f32 %v1433, %v1439
  %v1457 = vld [vmem:[%s8] sm:$0x1]
  %v1459 = vlaneseq
  %v1460 = vshrl.u32 %v1459, 7
  %v1461 = vsub.s32 0, %v1460
  %v1462 = vrot.slane %v1457, %v1461
  %v1464 = vadd.f32 %v1441, %v1462
  %v1465 = vadd.f32 %v1442, %v1462
  %v1466 = vadd.f32 %v1443, %v1462
  %v1467 = vadd.f32 %v1444, %v1462
  %v1468 = vadd.f32 %v1445, %v1462
  %v1469 = vadd.f32 %v1446, %v1462
  %v1470 = vadd.f32 %v1447, %v1462
  %v1471 = vadd.f32 %v1448, %v1462
  %v1472 = vadd.f32 %v1449, %v1462
  %v1473 = vadd.f32 %v1450, %v1462
  %v1474 = vadd.f32 %v1451, %v1462
  %v1475 = vadd.f32 %v1452, %v1462
  %v1476 = vadd.f32 %v1453, %v1462
  %v1477 = vadd.f32 %v1454, %v1462
  %v1478 = vadd.f32 %v1455, %v1462
  %v1479 = vadd.f32 %v1456, %v1462
  %v1480 = vmax.f32 %v1464, 0.0
  %v1481 = vmax.f32 %v1465, 0.0
  %v1482 = vmax.f32 %v1466, 0.0
  %v1483 = vmax.f32 %v1467, 0.0
  %v1484 = vmax.f32 %v1468, 0.0
  %v1485 = vmax.f32 %v1469, 0.0
  %v1486 = vmax.f32 %v1470, 0.0
  %v1487 = vmax.f32 %v1471, 0.0
  %v1488 = vmax.f32 %v1472, 0.0
  %v1489 = vmax.f32 %v1473, 0.0
  %v1490 = vmax.f32 %v1474, 0.0
  %v1491 = vmax.f32 %v1475, 0.0
  %v1492 = vmax.f32 %v1476, 0.0
  %v1493 = vmax.f32 %v1477, 0.0
  %v1494 = vmax.f32 %v1478, 0.0
  %v1495 = vmax.f32 %v1479, 0.0
  %v1496 = vpack.c.bf16 %v1481, %v1480
  %v1497 = vpack.c.bf16 %v1483, %v1482
  %v1498 = vpack.c.bf16 %v1485, %v1484
  %v1499 = vpack.c.bf16 %v1487, %v1486
  %v1500 = vpack.c.bf16 %v1489, %v1488
  %v1501 = vpack.c.bf16 %v1491, %v1490
  %v1502 = vpack.c.bf16 %v1493, %v1492
  %v1503 = vpack.c.bf16 %v1495, %v1494
  %v1504 = vld [vmem:[%s9] sm:$0xf]
  %v1505 = vld [vmem:[%s9 + $0x4] sm:$0xf]
  %v1506 = vld [vmem:[%s9 + $0x8] sm:$0xf]
  %v1507 = vld [vmem:[%s9 + $0xc] sm:$0xf]
  %v1508 = vld [vmem:[%s9 + $0x10] sm:$0xf]
  %v1509 = vld [vmem:[%s9 + $0x14] sm:$0xf]
  %v1516 = vunpack.c.l.b16 %v1504
  %v1517 = vunpack.c.l.b16 %v1505
  %v1518 = vunpack.c.l.b16 %v1506
  %v1519 = vunpack.c.l.b16 %v1507
  %v1520 = vunpack.c.l.b16 %v1508
  %v1521 = vunpack.c.l.b16 %v1509
  %v1522 = vpack.c.b16 %v1517, %v1516
  %v1523 = vpack.c.b16 %v1519, %v1518
  %v1524 = vpack.c.b16 %v1521, %v1520
  %vm1528 = vcmask 392192
  %v1530 = vsel %vm1528, %v1496, 0
  %v1533 = vsel %vm1528, %v1497, 0
  %v1536 = vsel %vm1528, %v1498, 0
  %v1539 = vsel %vm1528, %v1499, 0
  %v1542 = vsel %vm1528, %v1500, 0
  %v1545 = vsel %vm1528, %v1501, 0
  %v1548 = vsel %vm1528, %v1502, 0
  %v1551 = vsel %vm1528, %v1503, 0
  %1553 = vmatprep.subr.bf16.mxu0 0
  %1554 = vmatpush1.bf16.msra.mxu0 %v1522
  %1555 = vmatprep.subr.bf16.mxu0 0
  %1556 = vmatpush1.bf16.msra.mxu0 %v1523
  %1557 = vmatprep.subr.bf16.mxu0 0
  %1558 = vmatpush1.bf16.msra.mxu0 %v1524
  %1559 = vmatprep.subr.bf16.mxu0 0
  %1560 = vmatpush1.bf16.msra.mxu0 0
  %1561 = vmatprep.subr.bf16.mxu0 0
  %1562 = vmatpush1.bf16.msra.mxu0 0
  %1563 = vmatprep.subr.bf16.mxu0 0
  %1564 = vmatpush1.bf16.msra.mxu0 0
  %1565 = vmatprep.subr.bf16.mxu0 0
  %1566 = vmatpush1.bf16.msra.mxu0 0
  %1567 = vmatprep.subr.bf16.mxu0 0
  %1568 = vmatpush1.bf16.msra.mxu0 0
  %1569 = vmatprep.subr.bf16.mxu0 0
  %1570 = vmatpush1.bf16.msra.mxu0 0
  %1571 = vmatprep.subr.bf16.mxu0 0
  %1572 = vmatpush1.bf16.msra.mxu0 0
  %1573 = vmatprep.subr.bf16.mxu0 0
  %1574 = vmatpush1.bf16.msra.mxu0 0
  %1575 = vmatprep.subr.bf16.mxu0 0
  %1576 = vmatpush1.bf16.msra.mxu0 0
  %1577 = vmatprep.subr.bf16.mxu0 0
  %1578 = vmatpush1.bf16.msra.mxu0 0
  %1579 = vmatprep.subr.bf16.mxu0 0
  %1580 = vmatpush1.bf16.msra.mxu0 0
  %1581 = vmatprep.subr.bf16.mxu0 0
  %1582 = vmatpush1.bf16.msra.mxu0 0
  %1583 = vmatprep.subr.bf16.mxu0 0
  %1584 = vmatpush1.bf16.msra.mxu0 0
  %1585 = vmatprep.mubr.bf16.mxu0 0
  %1586 = vmatmul.mubr.bf16.gmra.mrb[0].mxu0 %v1530
  %v1587 = vpop.f32.mrb[0].mxu0
  %v1588 = vadd.f32 0.0, %v1587
  %v1589 = vpop.f32.mrb[0].mxu0
  %v1590 = vpop.f32.mrb[0].mxu0
  %v1591 = vadd.f32 0.0, %v1590
  %v1592 = vpop.f32.mrb[0].mxu0
  %1593 = vmatprep.mubr.bf16.mxu0 0
  %1594 = vmatmul.mubr.bf16.gmra.mrb[0].mxu0 %v1533
  %v1595 = vpop.f32.mrb[0].mxu0
  %v1596 = vadd.f32 0.0, %v1595
  %v1597 = vpop.f32.mrb[0].mxu0
  %v1598 = vpop.f32.mrb[0].mxu0
  %v1599 = vadd.f32 0.0, %v1598
  %v1600 = vpop.f32.mrb[0].mxu0
  %1601 = vmatprep.mubr.bf16.mxu0 0
  %1602 = vmatmul.mubr.bf16.gmra.mrb[0].mxu0 %v1536
  %v1603 = vpop.f32.mrb[0].mxu0
  %v1604 = vadd.f32 0.0, %v1603
  %v1605 = vpop.f32.mrb[0].mxu0
  %v1606 = vpop.f32.mrb[0].mxu0
  %v1607 = vadd.f32 0.0, %v1606
  %v1608 = vpop.f32.mrb[0].mxu0
  %1609 = vmatprep.mubr.bf16.mxu0 0
  %1610 = vmatmul.mubr.bf16.gmra.mrb[0].mxu0 %v1539
  %v1611 = vpop.f32.mrb[0].mxu0
  %v1612 = vadd.f32 0.0, %v1611
  %v1613 = vpop.f32.mrb[0].mxu0
  %v1614 = vpop.f32.mrb[0].mxu0
  %v1615 = vadd.f32 0.0, %v1614
  %v1616 = vpop.f32.mrb[0].mxu0
  %1617 = vmatprep.mubr.bf16.mxu0 0
  %1618 = vmatmul.mubr.bf16.gmra.mrb[0].mxu0 %v1542
  %v1619 = vpop.f32.mrb[0].mxu0
  %v1620 = vadd.f32 0.0, %v1619
  %v1621 = vpop.f32.mrb[0].mxu0
  %v1622 = vpop.f32.mrb[0].mxu0
  %v1623 = vadd.f32 0.0, %v1622
  %v1624 = vpop.f32.mrb[0].mxu0
  %1625 = vmatprep.mubr.bf16.mxu0 0
  %1626 = vmatmul.mubr.bf16.gmra.mrb[0].mxu0 %v1545
  %v1627 = vpop.f32.mrb[0].mxu0
  %v1628 = vadd.f32 0.0, %v1627
  %v1629 = vpop.f32.mrb[0].mxu0
  %v1630 = vpop.f32.mrb[0].mxu0
  %v1631 = vadd.f32 0.0, %v1630
  %v1632 = vpop.f32.mrb[0].mxu0
  %1633 = vmatprep.mubr.bf16.mxu0 0
  %1634 = vmatmul.mubr.bf16.gmra.mrb[0].mxu0 %v1548
  %v1635 = vpop.f32.mrb[0].mxu0
  %v1636 = vadd.f32 0.0, %v1635
  %v1637 = vpop.f32.mrb[0].mxu0
  %v1638 = vpop.f32.mrb[0].mxu0
  %v1639 = vadd.f32 0.0, %v1638
  %v1640 = vpop.f32.mrb[0].mxu0
  %1641 = vmatprep.mubr.bf16.mxu0 0
  %1642 = vmatmul.mubr.bf16.gmra.mrb[0].mxu0 %v1551
  %v1643 = vpop.f32.mrb[0].mxu0
  %v1644 = vadd.f32 0.0, %v1643
  %v1645 = vpop.f32.mrb[0].mxu0
  %v1646 = vpop.f32.mrb[0].mxu0
  %v1647 = vadd.f32 0.0, %v1646
  %v1648 = vpop.f32.mrb[0].mxu0
  %1649 = vdwg.mxu0
  %v1650 = vld [vmem:[%s10] sm:$0x1]
  %v1652 = vlaneseq
  %v1653 = vshrl.u32 %v1652, 7
  %v1654 = vsub.s32 0, %v1653
  %v1655 = vrot.slane %v1650, %v1654
  %v1657 = vmul.f32 %v1588, %v1655
  %v1658 = vmul.f32 %v1591, %v1655
  %v1659 = vmul.f32 %v1596, %v1655
  %v1660 = vmul.f32 %v1599, %v1655
  %v1661 = vmul.f32 %v1604, %v1655
  %v1662 = vmul.f32 %v1607, %v1655
  %v1663 = vmul.f32 %v1612, %v1655
  %v1664 = vmul.f32 %v1615, %v1655
  %v1665 = vmul.f32 %v1620, %v1655
  %v1666 = vmul.f32 %v1623, %v1655
  %v1667 = vmul.f32 %v1628, %v1655
  %v1668 = vmul.f32 %v1631, %v1655
  %v1669 = vmul.f32 %v1636, %v1655
  %v1670 = vmul.f32 %v1639, %v1655
  %v1671 = vmul.f32 %v1644, %v1655
  %v1672 = vmul.f32 %v1647, %v1655
  %v1673 = vld [vmem:[%s11] sm:$0x1]
  %v1675 = vlaneseq
  %v1676 = vshrl.u32 %v1675, 7
  %v1677 = vsub.s32 0, %v1676
  %v1678 = vrot.slane %v1673, %v1677
  %v1680 = vadd.f32 %v1657, %v1678
  %v1681 = vadd.f32 %v1658, %v1678
  %v1682 = vadd.f32 %v1659, %v1678
  %v1683 = vadd.f32 %v1660, %v1678
  %v1684 = vadd.f32 %v1661, %v1678
  %v1685 = vadd.f32 %v1662, %v1678
  %v1686 = vadd.f32 %v1663, %v1678
  %v1687 = vadd.f32 %v1664, %v1678
  %v1688 = vadd.f32 %v1665, %v1678
  %v1689 = vadd.f32 %v1666, %v1678
  %v1690 = vadd.f32 %v1667, %v1678
  %v1691 = vadd.f32 %v1668, %v1678
  %v1692 = vadd.f32 %v1669, %v1678
  %v1693 = vadd.f32 %v1670, %v1678
  %v1694 = vadd.f32 %v1671, %v1678
  %v1695 = vadd.f32 %v1672, %v1678
  %v1696 = vmax.f32 %v1680, 0.0
  %v1697 = vmax.f32 %v1681, 0.0
  %v1698 = vmax.f32 %v1682, 0.0
  %v1699 = vmax.f32 %v1683, 0.0
  %v1700 = vmax.f32 %v1684, 0.0
  %v1701 = vmax.f32 %v1685, 0.0
  %v1702 = vmax.f32 %v1686, 0.0
  %v1703 = vmax.f32 %v1687, 0.0
  %v1704 = vmax.f32 %v1688, 0.0
  %v1705 = vmax.f32 %v1689, 0.0
  %v1706 = vmax.f32 %v1690, 0.0
  %v1707 = vmax.f32 %v1691, 0.0
  %v1708 = vmax.f32 %v1692, 0.0
  %v1709 = vmax.f32 %v1693, 0.0
  %v1710 = vmax.f32 %v1694, 0.0
  %v1711 = vmax.f32 %v1695, 0.0
  %v1728 = vrot.slane %v1696, 7
  %v1729 = vrot.slane %v1697, 7
  %v1730 = vrot.slane %v1698, 7
  %v1731 = vrot.slane %v1699, 7
  %v1732 = vrot.slane %v1700, 7
  %v1733 = vrot.slane %v1701, 7
  %v1734 = vrot.slane %v1702, 7
  %v1735 = vrot.slane %v1703, 7
  %v1736 = vrot.slane %v1704, 7
  %v1737 = vrot.slane %v1705, 7
  %v1738 = vrot.slane %v1706, 7
  %v1739 = vrot.slane %v1707, 7
  %v1740 = vrot.slane %v1708, 7
  %v1741 = vrot.slane %v1709, 7
  %v1742 = vrot.slane %v1710, 7
  %v1743 = vrot.slane %v1711, 7
  %v1760 = vsel %vm397, 0.0, %v1728
  %v1761 = vsel %vm397, 0.0, %v1729
  %v1762 = vsel %vm397, 0.0, %v1730
  %v1763 = vsel %vm397, 0.0, %v1731
  %v1764 = vsel %vm397, 0.0, %v1732
  %v1765 = vsel %vm397, 0.0, %v1733
  %v1766 = vsel %vm397, 0.0, %v1734
  %v1767 = vsel %vm397, 0.0, %v1735
  %v1768 = vsel %vm397, 0.0, %v1736
  %v1769 = vsel %vm397, 0.0, %v1737
  %v1770 = vsel %vm397, 0.0, %v1738
  %v1771 = vsel %vm397, 0.0, %v1739
  %v1772 = vsel %vm397, 0.0, %v1740
  %v1773 = vsel %vm397, 0.0, %v1741
  %v1774 = vsel %vm397, 0.0, %v1742
  %v1775 = vsel %vm397, 0.0, %v1743
  %v1776 = vsel %vm397, %v1728, 0.0
  %v1777 = vsel %vm397, %v1729, 0.0
  %v1778 = vsel %vm397, %v1730, 0.0
  %v1779 = vsel %vm397, %v1731, 0.0
  %v1780 = vsel %vm397, %v1732, 0.0
  %v1781 = vsel %vm397, %v1733, 0.0
  %v1782 = vsel %vm397, %v1734, 0.0
  %v1783 = vsel %vm397, %v1735, 0.0
  %v1784 = vsel %vm397, %v1736, 0.0
  %v1785 = vsel %vm397, %v1737, 0.0
  %v1786 = vsel %vm397, %v1738, 0.0
  %v1787 = vsel %vm397, %v1739, 0.0
  %v1788 = vsel %vm397, %v1740, 0.0
  %v1789 = vsel %vm397, %v1741, 0.0
  %v1790 = vsel %vm397, %v1742, 0.0
  %v1791 = vsel %vm397, %v1743, 0.0
  %v1820 = vrot.slane %v1760, 1
  %v1821 = vrot.slane %v1776, 1
  %v1822 = vsel %vm459, %v1820, %v1821
  %v1823 = vrot.slane %v1761, 1
  %v1824 = vrot.slane %v1777, 1
  %v1825 = vsel %vm459, %v1823, %v1824
  %v1826 = vrot.slane %v1762, 1
  %v1827 = vrot.slane %v1778, 1
  %v1828 = vsel %vm459, %v1826, %v1827
  %v1829 = vrot.slane %v1763, 1
  %v1830 = vrot.slane %v1779, 1
  %v1831 = vsel %vm459, %v1829, %v1830
  %v1832 = vrot.slane %v1764, 1
  %v1833 = vrot.slane %v1780, 1
  %v1834 = vsel %vm459, %v1832, %v1833
  %v1835 = vrot.slane %v1765, 1
  %v1836 = vrot.slane %v1781, 1
  %v1837 = vsel %vm459, %v1835, %v1836
  %v1838 = vrot.slane %v1766, 1
  %v1839 = vrot.slane %v1782, 1
  %v1840 = vsel %vm459, %v1838, %v1839
  %v1841 = vrot.slane %v1768, 1
  %v1842 = vrot.slane %v1784, 1
  %v1843 = vsel %vm459, %v1841, %v1842
  %v1844 = vrot.slane %v1769, 1
  %v1845 = vrot.slane %v1785, 1
  %v1846 = vsel %vm459, %v1844, %v1845
  %v1847 = vrot.slane %v1770, 1
  %v1848 = vrot.slane %v1786, 1
  %v1849 = vsel %vm459, %v1847, %v1848
  %v1850 = vrot.slane %v1771, 1
  %v1851 = vrot.slane %v1787, 1
  %v1852 = vsel %vm459, %v1850, %v1851
  %v1853 = vrot.slane %v1772, 1
  %v1854 = vrot.slane %v1788, 1
  %v1855 = vsel %vm459, %v1853, %v1854
  %v1856 = vrot.slane %v1773, 1
  %v1857 = vrot.slane %v1789, 1
  %v1858 = vsel %vm459, %v1856, %v1857
  %v1859 = vrot.slane %v1774, 1
  %v1860 = vrot.slane %v1790, 1
  %v1861 = vsel %vm459, %v1859, %v1860
  %v1862 = vrot.slane %v1760, 2
  %v1863 = vrot.slane %v1776, 2
  %v1864 = vsel %vm504, %v1862, %v1863
  %v1865 = vrot.slane %v1761, 2
  %v1866 = vrot.slane %v1777, 2
  %v1867 = vsel %vm504, %v1865, %v1866
  %v1868 = vrot.slane %v1762, 2
  %v1869 = vrot.slane %v1778, 2
  %v1870 = vsel %vm504, %v1868, %v1869
  %v1871 = vrot.slane %v1763, 2
  %v1872 = vrot.slane %v1779, 2
  %v1873 = vsel %vm504, %v1871, %v1872
  %v1874 = vrot.slane %v1764, 2
  %v1875 = vrot.slane %v1780, 2
  %v1876 = vsel %vm504, %v1874, %v1875
  %v1877 = vrot.slane %v1765, 2
  %v1878 = vrot.slane %v1781, 2
  %v1879 = vsel %vm504, %v1877, %v1878
  %v1880 = vrot.slane %v1766, 2
  %v1881 = vrot.slane %v1782, 2
  %v1882 = vsel %vm504, %v1880, %v1881
  %v1883 = vrot.slane %v1768, 2
  %v1884 = vrot.slane %v1784, 2
  %v1885 = vsel %vm504, %v1883, %v1884
  %v1886 = vrot.slane %v1769, 2
  %v1887 = vrot.slane %v1785, 2
  %v1888 = vsel %vm504, %v1886, %v1887
  %v1889 = vrot.slane %v1770, 2
  %v1890 = vrot.slane %v1786, 2
  %v1891 = vsel %vm504, %v1889, %v1890
  %v1892 = vrot.slane %v1771, 2
  %v1893 = vrot.slane %v1787, 2
  %v1894 = vsel %vm504, %v1892, %v1893
  %v1895 = vrot.slane %v1772, 2
  %v1896 = vrot.slane %v1788, 2
  %v1897 = vsel %vm504, %v1895, %v1896
  %v1898 = vrot.slane %v1773, 2
  %v1899 = vrot.slane %v1789, 2
  %v1900 = vsel %vm504, %v1898, %v1899
  %v1901 = vrot.slane %v1774, 2
  %v1902 = vrot.slane %v1790, 2
  %v1903 = vsel %vm504, %v1901, %v1902
  %v1908 = vrot.slane %v1767, 1
  %v1909 = vrot.slane %v1783, 1
  %v1910 = vsel %vm459, %v1908, %v1909
  %v1911 = vrot.slane %v1775, 1
  %v1912 = vrot.slane %v1791, 1
  %v1913 = vsel %vm459, %v1911, %v1912
  %v1930 = vrot.slane %v1767, 2
  %v1931 = vrot.slane %v1783, 2
  %v1932 = vsel %vm504, %v1930, %v1931
  %v1933 = vrot.slane %v1775, 2
  %v1934 = vrot.slane %v1791, 2
  %v1935 = vsel %vm504, %v1933, %v1934
  %1950 = vrot.lane.b32.xlu0 %v1822, 32
  %v1951 = vpop.permute.xlu0 %1950
  %1952 = vrot.lane.b32.xlu0 %v1825, 32
  %v1953 = vpop.permute.xlu0 %1952
  %1954 = vrot.lane.b32.xlu0 %v1828, 32
  %v1955 = vpop.permute.xlu0 %1954
  %1956 = vrot.lane.b32.xlu0 %v1831, 32
  %v1957 = vpop.permute.xlu0 %1956
  %1958 = vrot.lane.b32.xlu0 %v1834, 32
  %v1959 = vpop.permute.xlu0 %1958
  %1960 = vrot.lane.b32.xlu0 %v1837, 32
  %v1961 = vpop.permute.xlu0 %1960
  %1962 = vrot.lane.b32.xlu0 %v1840, 32
  %v1963 = vpop.permute.xlu0 %1962
  %1964 = vrot.lane.b32.xlu0 %v1843, 32
  %v1965 = vpop.permute.xlu0 %1964
  %1966 = vrot.lane.b32.xlu0 %v1846, 32
  %v1967 = vpop.permute.xlu0 %1966
  %1968 = vrot.lane.b32.xlu0 %v1849, 32
  %v1969 = vpop.permute.xlu0 %1968
  %1970 = vrot.lane.b32.xlu0 %v1852, 32
  %v1971 = vpop.permute.xlu0 %1970
  %1972 = vrot.lane.b32.xlu0 %v1855, 32
  %v1973 = vpop.permute.xlu0 %1972
  %1974 = vrot.lane.b32.xlu0 %v1858, 32
  %v1975 = vpop.permute.xlu0 %1974
  %1976 = vrot.lane.b32.xlu0 %v1861, 32
  %v1977 = vpop.permute.xlu0 %1976
  %1992 = vrot.lane.b32.xlu0 %v1864, 64
  %v1993 = vpop.permute.xlu0 %1992
  %1994 = vrot.lane.b32.xlu0 %v1867, 64
  %v1995 = vpop.permute.xlu0 %1994
  %1996 = vrot.lane.b32.xlu0 %v1870, 64
  %v1997 = vpop.permute.xlu0 %1996
  %1998 = vrot.lane.b32.xlu0 %v1873, 64
  %v1999 = vpop.permute.xlu0 %1998
  %2000 = vrot.lane.b32.xlu0 %v1876, 64
  %v2001 = vpop.permute.xlu0 %2000
  %2002 = vrot.lane.b32.xlu0 %v1879, 64
  %v2003 = vpop.permute.xlu0 %2002
  %2004 = vrot.lane.b32.xlu0 %v1882, 64
  %v2005 = vpop.permute.xlu0 %2004
  %2006 = vrot.lane.b32.xlu0 %v1885, 64
  %v2007 = vpop.permute.xlu0 %2006
  %2008 = vrot.lane.b32.xlu0 %v1888, 64
  %v2009 = vpop.permute.xlu0 %2008
  %2010 = vrot.lane.b32.xlu0 %v1891, 64
  %v2011 = vpop.permute.xlu0 %2010
  %2012 = vrot.lane.b32.xlu0 %v1894, 64
  %v2013 = vpop.permute.xlu0 %2012
  %2014 = vrot.lane.b32.xlu0 %v1897, 64
  %v2015 = vpop.permute.xlu0 %2014
  %2016 = vrot.lane.b32.xlu0 %v1900, 64
  %v2017 = vpop.permute.xlu0 %2016
  %2018 = vrot.lane.b32.xlu0 %v1903, 64
  %v2019 = vpop.permute.xlu0 %2018
  %2034 = vrot.lane.b32.xlu0 %v1760, 96
  %v2035 = vpop.permute.xlu0 %2034
  %2036 = vrot.lane.b32.xlu0 %v1761, 96
  %v2037 = vpop.permute.xlu0 %2036
  %2038 = vrot.lane.b32.xlu0 %v1762, 96
  %v2039 = vpop.permute.xlu0 %2038
  %2040 = vrot.lane.b32.xlu0 %v1763, 96
  %v2041 = vpop.permute.xlu0 %2040
  %2042 = vrot.lane.b32.xlu0 %v1764, 96
  %v2043 = vpop.permute.xlu0 %2042
  %2044 = vrot.lane.b32.xlu0 %v1765, 96
  %v2045 = vpop.permute.xlu0 %2044
  %2046 = vrot.lane.b32.xlu0 %v1766, 96
  %v2047 = vpop.permute.xlu0 %2046
  %2048 = vrot.lane.b32.xlu0 %v1767, 96
  %v2049 = vpop.permute.xlu0 %2048
  %2050 = vrot.lane.b32.xlu0 %v1768, 96
  %v2051 = vpop.permute.xlu0 %2050
  %2052 = vrot.lane.b32.xlu0 %v1769, 96
  %v2053 = vpop.permute.xlu0 %2052
  %2054 = vrot.lane.b32.xlu0 %v1770, 96
  %v2055 = vpop.permute.xlu0 %2054
  %2056 = vrot.lane.b32.xlu0 %v1771, 96
  %v2057 = vpop.permute.xlu0 %2056
  %2058 = vrot.lane.b32.xlu0 %v1772, 96
  %v2059 = vpop.permute.xlu0 %2058
  %2060 = vrot.lane.b32.xlu0 %v1773, 96
  %v2061 = vpop.permute.xlu0 %2060
  %2062 = vrot.lane.b32.xlu0 %v1774, 96
  %v2063 = vpop.permute.xlu0 %2062
  %2064 = vrot.lane.b32.xlu0 %v1775, 96
  %v2065 = vpop.permute.xlu0 %2064
  %2082 = vrot.lane.b32.xlu0 %v1864, 32
  %v2083 = vpop.permute.xlu0 %2082
  %2084 = vrot.lane.b32.xlu0 %v1867, 32
  %v2085 = vpop.permute.xlu0 %2084
  %2086 = vrot.lane.b32.xlu0 %v1870, 32
  %v2087 = vpop.permute.xlu0 %2086
  %2088 = vrot.lane.b32.xlu0 %v1873, 32
  %v2089 = vpop.permute.xlu0 %2088
  %2090 = vrot.lane.b32.xlu0 %v1876, 32
  %v2091 = vpop.permute.xlu0 %2090
  %2092 = vrot.lane.b32.xlu0 %v1879, 32
  %v2093 = vpop.permute.xlu0 %2092
  %2094 = vrot.lane.b32.xlu0 %v1882, 32
  %v2095 = vpop.permute.xlu0 %2094
  %2096 = vrot.lane.b32.xlu0 %v1932, 32
  %v2097 = vpop.permute.xlu0 %2096
  %2098 = vrot.lane.b32.xlu0 %v1885, 32
  %v2099 = vpop.permute.xlu0 %2098
  %2100 = vrot.lane.b32.xlu0 %v1888, 32
  %v2101 = vpop.permute.xlu0 %2100
  %2102 = vrot.lane.b32.xlu0 %v1891, 32
  %v2103 = vpop.permute.xlu0 %2102
  %2104 = vrot.lane.b32.xlu0 %v1894, 32
  %v2105 = vpop.permute.xlu0 %2104
  %2106 = vrot.lane.b32.xlu0 %v1897, 32
  %v2107 = vpop.permute.xlu0 %2106
  %2108 = vrot.lane.b32.xlu0 %v1900, 32
  %v2109 = vpop.permute.xlu0 %2108
  %2110 = vrot.lane.b32.xlu0 %v1903, 32
  %v2111 = vpop.permute.xlu0 %2110
  %2112 = vrot.lane.b32.xlu0 %v1935, 32
  %v2113 = vpop.permute.xlu0 %2112
  %2130 = vrot.lane.b32.xlu0 %v1761, 64
  %v2131 = vpop.permute.xlu0 %2130
  %2132 = vrot.lane.b32.xlu0 %v1762, 64
  %v2133 = vpop.permute.xlu0 %2132
  %2134 = vrot.lane.b32.xlu0 %v1763, 64
  %v2135 = vpop.permute.xlu0 %2134
  %2136 = vrot.lane.b32.xlu0 %v1764, 64
  %v2137 = vpop.permute.xlu0 %2136
  %2138 = vrot.lane.b32.xlu0 %v1765, 64
  %v2139 = vpop.permute.xlu0 %2138
  %2140 = vrot.lane.b32.xlu0 %v1766, 64
  %v2141 = vpop.permute.xlu0 %2140
  %2142 = vrot.lane.b32.xlu0 %v1767, 64
  %v2143 = vpop.permute.xlu0 %2142
  %2144 = vrot.lane.b32.xlu0 %v1769, 64
  %v2145 = vpop.permute.xlu0 %2144
  %2146 = vrot.lane.b32.xlu0 %v1770, 64
  %v2147 = vpop.permute.xlu0 %2146
  %2148 = vrot.lane.b32.xlu0 %v1771, 64
  %v2149 = vpop.permute.xlu0 %2148
  %2150 = vrot.lane.b32.xlu0 %v1772, 64
  %v2151 = vpop.permute.xlu0 %2150
  %2152 = vrot.lane.b32.xlu0 %v1773, 64
  %v2153 = vpop.permute.xlu0 %2152
  %2154 = vrot.lane.b32.xlu0 %v1774, 64
  %v2155 = vpop.permute.xlu0 %2154
  %2156 = vrot.lane.b32.xlu0 %v1775, 64
  %v2157 = vpop.permute.xlu0 %2156
  %2172 = vrot.lane.b32.xlu0 %v1825, 96
  %v2173 = vpop.permute.xlu0 %2172
  %2174 = vrot.lane.b32.xlu0 %v1828, 96
  %v2175 = vpop.permute.xlu0 %2174
  %2176 = vrot.lane.b32.xlu0 %v1831, 96
  %v2177 = vpop.permute.xlu0 %2176
  %2178 = vrot.lane.b32.xlu0 %v1834, 96
  %v2179 = vpop.permute.xlu0 %2178
  %2180 = vrot.lane.b32.xlu0 %v1837, 96
  %v2181 = vpop.permute.xlu0 %2180
  %2182 = vrot.lane.b32.xlu0 %v1840, 96
  %v2183 = vpop.permute.xlu0 %2182
  %2184 = vrot.lane.b32.xlu0 %v1910, 96
  %v2185 = vpop.permute.xlu0 %2184
  %2186 = vrot.lane.b32.xlu0 %v1846, 96
  %v2187 = vpop.permute.xlu0 %2186
  %2188 = vrot.lane.b32.xlu0 %v1849, 96
  %v2189 = vpop.permute.xlu0 %2188
  %2190 = vrot.lane.b32.xlu0 %v1852, 96
  %v2191 = vpop.permute.xlu0 %2190
  %2192 = vrot.lane.b32.xlu0 %v1855, 96
  %v2193 = vpop.permute.xlu0 %2192
  %2194 = vrot.lane.b32.xlu0 %v1858, 96
  %v2195 = vpop.permute.xlu0 %2194
  %2196 = vrot.lane.b32.xlu0 %v1861, 96
  %v2197 = vpop.permute.xlu0 %2196
  %2198 = vrot.lane.b32.xlu0 %v1913, 96
  %v2199 = vpop.permute.xlu0 %2198
  %v2214 = vsel %vm165, %v1760, %v1951
  %v2215 = vsel %vm165, %v1761, %v1953
  %v2216 = vsel %vm165, %v1762, %v1955
  %v2217 = vsel %vm165, %v1763, %v1957
  %v2218 = vsel %vm165, %v1764, %v1959
  %v2219 = vsel %vm165, %v1765, %v1961
  %v2220 = vsel %vm165, %v1766, %v1963
  %v2221 = vsel %vm165, %v1768, %v1965
  %v2222 = vsel %vm165, %v1769, %v1967
  %v2223 = vsel %vm165, %v1770, %v1969
  %v2224 = vsel %vm165, %v1771, %v1971
  %v2225 = vsel %vm165, %v1772, %v1973
  %v2226 = vsel %vm165, %v1773, %v1975
  %v2227 = vsel %vm165, %v1774, %v1977
  %v2228 = vsel %vm887, %v2214, %v1993
  %v2229 = vsel %vm887, %v2215, %v1995
  %v2230 = vsel %vm887, %v2216, %v1997
  %v2231 = vsel %vm887, %v2217, %v1999
  %v2232 = vsel %vm887, %v2218, %v2001
  %v2233 = vsel %vm887, %v2219, %v2003
  %v2234 = vsel %vm887, %v2220, %v2005
  %v2235 = vsel %vm887, %v2221, %v2007
  %v2236 = vsel %vm887, %v2222, %v2009
  %v2237 = vsel %vm887, %v2223, %v2011
  %v2238 = vsel %vm887, %v2224, %v2013
  %v2239 = vsel %vm887, %v2225, %v2015
  %v2240 = vsel %vm887, %v2226, %v2017
  %v2241 = vsel %vm887, %v2227, %v2019
  %v2242 = vsel %vm903, %v888, %v2035
  %v2243 = vsel %vm903, %v2228, %v2037
  %v2244 = vsel %vm903, %v2229, %v2039
  %v2245 = vsel %vm903, %v2230, %v2041
  %v2246 = vsel %vm903, %v2231, %v2043
  %v2247 = vsel %vm903, %v2232, %v2045
  %v2248 = vsel %vm903, %v2233, %v2047
  %v2249 = vsel %vm903, %v2234, %v2049
  %v2250 = vsel %vm903, %v888, %v2051
  %v2251 = vsel %vm903, %v2235, %v2053
  %v2252 = vsel %vm903, %v2236, %v2055
  %v2253 = vsel %vm903, %v2237, %v2057
  %v2254 = vsel %vm903, %v2238, %v2059
  %v2255 = vsel %vm903, %v2239, %v2061
  %v2256 = vsel %vm903, %v2240, %v2063
  %v2257 = vsel %vm903, %v2241, %v2065
  %v2258 = vsel %vm165, %v1822, %v2083
  %v2259 = vsel %vm165, %v1825, %v2085
  %v2260 = vsel %vm165, %v1828, %v2087
  %v2261 = vsel %vm165, %v1831, %v2089
  %v2262 = vsel %vm165, %v1834, %v2091
  %v2263 = vsel %vm165, %v1837, %v2093
  %v2264 = vsel %vm165, %v1840, %v2095
  %v2265 = vsel %vm165, %v1910, %v2097
  %v2266 = vsel %vm165, %v1843, %v2099
  %v2267 = vsel %vm165, %v1846, %v2101
  %v2268 = vsel %vm165, %v1849, %v2103
  %v2269 = vsel %vm165, %v1852, %v2105
  %v2270 = vsel %vm165, %v1855, %v2107
  %v2271 = vsel %vm165, %v1858, %v2109
  %v2272 = vsel %vm165, %v1861, %v2111
  %v2273 = vsel %vm165, %v1913, %v2113
  %v2274 = vsel %vm887, %v2258, %v2131
  %v2275 = vsel %vm887, %v2259, %v2133
  %v2276 = vsel %vm887, %v2260, %v2135
  %v2277 = vsel %vm887, %v2261, %v2137
  %v2278 = vsel %vm887, %v2262, %v2139
  %v2279 = vsel %vm887, %v2263, %v2141
  %v2280 = vsel %vm887, %v2264, %v2143
  %v2281 = vsel %vm887, %v2265, %v797
  %v2282 = vsel %vm887, %v2266, %v2145
  %v2283 = vsel %vm887, %v2267, %v2147
  %v2284 = vsel %vm887, %v2268, %v2149
  %v2285 = vsel %vm887, %v2269, %v2151
  %v2286 = vsel %vm887, %v2270, %v2153
  %v2287 = vsel %vm887, %v2271, %v2155
  %v2288 = vsel %vm887, %v2272, %v2157
  %v2289 = vsel %vm887, %v2273, %v797
  %v2290 = vsel %vm903, %v2274, %v2173
  %v2291 = vsel %vm903, %v2275, %v2175
  %v2292 = vsel %vm903, %v2276, %v2177
  %v2293 = vsel %vm903, %v2277, %v2179
  %v2294 = vsel %vm903, %v2278, %v2181
  %v2295 = vsel %vm903, %v2279, %v2183
  %v2296 = vsel %vm903, %v2280, %v2185
  %v2297 = vsel %vm903, %v2281, %v842
  %v2298 = vsel %vm903, %v2282, %v2187
  %v2299 = vsel %vm903, %v2283, %v2189
  %v2300 = vsel %vm903, %v2284, %v2191
  %v2301 = vsel %vm903, %v2285, %v2193
  %v2302 = vsel %vm903, %v2286, %v2195
  %v2303 = vsel %vm903, %v2287, %v2197
  %v2304 = vsel %vm903, %v2288, %v2199
  %v2305 = vsel %vm903, %v2289, %v842
  %v2306 = vpack.c.bf16 %v2243, %v2242
  %v2307 = vpack.c.bf16 %v2291, %v2290
  %v2308 = vpack.c.bf16 %v1870, %v1867
  %v2309 = vpack.c.bf16 %v2245, %v2244
  %v2310 = vpack.c.bf16 %v2293, %v2292
  %v2311 = vpack.c.bf16 %v1876, %v1873
  %v2312 = vpack.c.bf16 %v2247, %v2246
  %v2313 = vpack.c.bf16 %v2295, %v2294
  %v2314 = vpack.c.bf16 %v1882, %v1879
  %v2315 = vpack.c.bf16 %v2249, %v2248
  %v2316 = vpack.c.bf16 %v2297, %v2296
  %v2317 = vpack.c.bf16 %v506, %v1932
  %v2318 = vpack.c.bf16 %v2251, %v2250
  %v2319 = vpack.c.bf16 %v2299, %v2298
  %v2320 = vpack.c.bf16 %v1891, %v1888
  %v2321 = vpack.c.bf16 %v2253, %v2252
  %v2322 = vpack.c.bf16 %v2301, %v2300
  %v2323 = vpack.c.bf16 %v1897, %v1894
  %v2324 = vpack.c.bf16 %v2255, %v2254
  %v2325 = vpack.c.bf16 %v2303, %v2302
  %v2326 = vpack.c.bf16 %v1903, %v1900
  %v2327 = vpack.c.bf16 %v2257, %v2256
  %v2328 = vpack.c.bf16 %v2305, %v2304
  %v2329 = vpack.c.bf16 %v506, %v1935
  %v2330 = vld [vmem:[%s12] sm:$0xf]
  %v2331 = vld [vmem:[%s12 + $0x4] sm:$0xf]
  %v2332 = vld [vmem:[%s12 + $0x8] sm:$0xf]
  %v2333 = vld [vmem:[%s12 + $0xc] sm:$0xf]
  %v2334 = vld [vmem:[%s12 + $0x10] sm:$0xf]
  %v2335 = vld [vmem:[%s12 + $0x14] sm:$0xf]
  %v2336 = vld [vmem:[%s12 + $0x18] sm:$0xf]
  %v2337 = vld [vmem:[%s12 + $0x1c] sm:$0xf]
  %v2338 = vld [vmem:[%s12 + $0x20] sm:$0xf]
  %v2339 = vld [vmem:[%s12 + $0x24] sm:$0xf]
  %v2340 = vld [vmem:[%s12 + $0x28] sm:$0xf]
  %v2341 = vld [vmem:[%s12 + $0x2c] sm:$0xf]
  %v2342 = vld [vmem:[%s12 + $0x30] sm:$0xf]
  %v2343 = vld [vmem:[%s12 + $0x34] sm:$0xf]
  %v2344 = vld [vmem:[%s12 + $0x38] sm:$0xf]
  %v2345 = vld [vmem:[%s12 + $0x3c] sm:$0xf]
  %v2346 = vld [vmem:[%s12 + $0x40] sm:$0xf]
  %v2347 = vld [vmem:[%s12 + $0x44] sm:$0xf]
  %v2348 = vld [vmem:[%s12 + $0x48] sm:$0xf]
  %v2349 = vld [vmem:[%s12 + $0x4c] sm:$0xf]
  %v2350 = vld [vmem:[%s12 + $0x50] sm:$0xf]
  %v2351 = vld [vmem:[%s12 + $0x54] sm:$0xf]
  %v2352 = vld [vmem:[%s12 + $0x58] sm:$0xf]
  %v2353 = vld [vmem:[%s12 + $0x5c] sm:$0xf]
  %v2354 = vld [vmem:[%s12 + $0x60] sm:$0xf]
  %v2355 = vld [vmem:[%s12 + $0x64] sm:$0xf]
  %v2356 = vld [vmem:[%s12 + $0x68] sm:$0xf]
  %v2357 = vld [vmem:[%s12 + $0x6c] sm:$0xf]
  %v2358 = vld [vmem:[%s12 + $0x70] sm:$0xf]
  %v2359 = vld [vmem:[%s12 + $0x74] sm:$0xf]
  %v2360 = vld [vmem:[%s12 + $0x78] sm:$0xf]
  %v2361 = vld [vmem:[%s12 + $0x7c] sm:$0xf]
  %v2362 = vld [vmem:[%s12 + $0x80] sm:$0xf]
  %v2363 = vld [vmem:[%s12 + $0x84] sm:$0xf]
  %v2364 = vld [vmem:[%s12 + $0x88] sm:$0xf]
  %v2365 = vld [vmem:[%s12 + $0x8c] sm:$0xf]
  %v2402 = vunpack.c.l.b16 %v2330
  %v2403 = vunpack.c.l.b16 %v2331
  %v2404 = vunpack.c.l.b16 %v2332
  %v2405 = vunpack.c.l.b16 %v2333
  %v2406 = vunpack.c.l.b16 %v2334
  %v2407 = vunpack.c.l.b16 %v2335
  %v2408 = vunpack.c.l.b16 %v2336
  %v2409 = vunpack.c.l.b16 %v2337
  %v2410 = vunpack.c.l.b16 %v2338
  %v2411 = vunpack.c.l.b16 %v2339
  %v2412 = vunpack.c.l.b16 %v2340
  %v2413 = vunpack.c.l.b16 %v2341
  %v2414 = vunpack.c.l.b16 %v2342
  %v2415 = vunpack.c.l.b16 %v2343
  %v2416 = vunpack.c.l.b16 %v2344
  %v2417 = vunpack.c.l.b16 %v2345
  %v2418 = vunpack.c.l.b16 %v2346
  %v2419 = vunpack.c.l.b16 %v2347
  %v2420 = vunpack.c.l.b16 %v2348
  %v2421 = vunpack.c.l.b16 %v2349
  %v2422 = vunpack.c.l.b16 %v2350
  %v2423 = vunpack.c.l.b16 %v2351
  %v2424 = vunpack.c.l.b16 %v2352
  %v2425 = vunpack.c.l.b16 %v2353
  %v2426 = vunpack.c.l.b16 %v2354
  %v2427 = vunpack.c.l.b16 %v2355
  %v2428 = vunpack.c.l.b16 %v2356
  %v2429 = vunpack.c.l.b16 %v2357
  %v2430 = vunpack.c.l.b16 %v2358
  %v2431 = vunpack.c.l.b16 %v2359
  %v2432 = vunpack.c.l.b16 %v2360
  %v2433 = vunpack.c.l.b16 %v2361
  %v2434 = vunpack.c.l.b16 %v2362
  %v2435 = vunpack.c.l.b16 %v2363
  %v2436 = vunpack.c.l.b16 %v2364
  %v2437 = vunpack.c.l.b16 %v2365
  %v2438 = vpack.c.b16 %v2403, %v2402
  %v2439 = vpack.c.b16 %v2405, %v2404
  %v2440 = vpack.c.b16 %v2407, %v2406
  %v2441 = vpack.c.b16 %v2409, %v2408
  %v2442 = vpack.c.b16 %v2411, %v2410
  %v2443 = vpack.c.b16 %v2413, %v2412
  %v2444 = vpack.c.b16 %v2415, %v2414
  %v2445 = vpack.c.b16 %v2417, %v2416
  %v2446 = vpack.c.b16 %v2419, %v2418
  %v2447 = vpack.c.b16 %v2421, %v2420
  %v2448 = vpack.c.b16 %v2423, %v2422
  %v2449 = vpack.c.b16 %v2425, %v2424
  %v2450 = vpack.c.b16 %v2427, %v2426
  %v2451 = vpack.c.b16 %v2429, %v2428
  %v2452 = vpack.c.b16 %v2431, %v2430
  %v2453 = vpack.c.b16 %v2433, %v2432
  %v2454 = vpack.c.b16 %v2435, %v2434
  %v2455 = vpack.c.b16 %v2437, %v2436
  %v2475 = vsel %vm165, %v2308, 0
  %v2478 = vsel %vm165, %v2311, 0
  %v2481 = vsel %vm165, %v2314, 0
  %v2484 = vsel %vm165, %v2317, 0
  %v2487 = vsel %vm165, %v2320, 0
  %v2490 = vsel %vm165, %v2323, 0
  %v2493 = vsel %vm165, %v2326, 0
  %v2496 = vsel %vm165, %v2329, 0
  %2498 = vmatprep.subr.bf16.mxu0 0
  %2499 = vmatpush1.bf16.msra.mxu0 %v2438
  %2500 = vmatprep.subr.bf16.mxu0 0
  %2501 = vmatpush1.bf16.msra.mxu0 %v2439
  %2502 = vmatprep.subr.bf16.mxu0 0
  %2503 = vmatpush1.bf16.msra.mxu0 %v2440
  %2504 = vmatprep.subr.bf16.mxu0 0
  %2505 = vmatpush1.bf16.msra.mxu0 %v2441
  %2506 = vmatprep.subr.bf16.mxu0 0
  %2507 = vmatpush1.bf16.msra.mxu0 %v2442
  %2508 = vmatprep.subr.bf16.mxu0 0
  %2509 = vmatpush1.bf16.msra.mxu0 %v2443
  %2510 = vmatprep.subr.bf16.mxu0 0
  %2511 = vmatpush1.bf16.msra.mxu0 %v2444
  %2512 = vmatprep.subr.bf16.mxu0 0
  %2513 = vmatpush1.bf16.msra.mxu0 %v2445
  %2514 = vmatprep.subr.bf16.mxu0 0
  %2515 = vmatpush1.bf16.msra.mxu0 %v2446
  %2516 = vmatprep.subr.bf16.mxu0 0
  %2517 = vmatpush1.bf16.msra.mxu0 %v2447
  %2518 = vmatprep.subr.bf16.mxu0 0
  %2519 = vmatpush1.bf16.msra.mxu0 %v2448
  %2520 = vmatprep.subr.bf16.mxu0 0
  %2521 = vmatpush1.bf16.msra.mxu0 %v2449
  %2522 = vmatprep.subr.bf16.mxu0 0
  %2523 = vmatpush1.bf16.msra.mxu0 %v2450
  %2524 = vmatprep.subr.bf16.mxu0 0
  %2525 = vmatpush1.bf16.msra.mxu0 %v2451
  %2526 = vmatprep.subr.bf16.mxu0 0
  %2527 = vmatpush1.bf16.msra.mxu0 %v2452
  %2528 = vmatprep.subr.bf16.mxu0 0
  %2529 = vmatpush1.bf16.msra.mxu0 %v2453
  %2530 = vmatprep.mubr.bf16.mxu0 %v2307
  %2531 = vmatmul.mubr.bf16.gmra.mrb[0].mxu0 %v2306
  %v2532 = vpop.f32.mrb[0].mxu0
  %v2533 = vadd.f32 0.0, %v2532
  %v2534 = vpop.f32.mrb[0].mxu0
  %v2535 = vpop.f32.mrb[0].mxu0
  %v2536 = vadd.f32 0.0, %v2535
  %v2537 = vpop.f32.mrb[0].mxu0
  %2538 = vmatprep.mubr.bf16.mxu0 %v2310
  %2539 = vmatmul.mubr.bf16.gmra.mrb[0].mxu0 %v2309
  %v2540 = vpop.f32.mrb[0].mxu0
  %v2541 = vadd.f32 0.0, %v2540
  %v2542 = vpop.f32.mrb[0].mxu0
  %v2543 = vpop.f32.mrb[0].mxu0
  %v2544 = vadd.f32 0.0, %v2543
  %v2545 = vpop.f32.mrb[0].mxu0
  %2546 = vmatprep.mubr.bf16.mxu0 %v2313
  %2547 = vmatmul.mubr.bf16.gmra.mrb[0].mxu0 %v2312
  %v2548 = vpop.f32.mrb[0].mxu0
  %v2549 = vadd.f32 0.0, %v2548
  %v2550 = vpop.f32.mrb[0].mxu0
  %v2551 = vpop.f32.mrb[0].mxu0
  %v2552 = vadd.f32 0.0, %v2551
  %v2553 = vpop.f32.mrb[0].mxu0
  %2554 = vmatprep.mubr.bf16.mxu0 %v2316
  %2555 = vmatmul.mubr.bf16.gmra.mrb[0].mxu0 %v2315
  %v2556 = vpop.f32.mrb[0].mxu0
  %v2557 = vadd.f32 0.0, %v2556
  %v2558 = vpop.f32.mrb[0].mxu0
  %v2559 = vpop.f32.mrb[0].mxu0
  %v2560 = vadd.f32 0.0, %v2559
  %v2561 = vpop.f32.mrb[0].mxu0
  %2562 = vmatprep.mubr.bf16.mxu0 %v2319
  %2563 = vmatmul.mubr.bf16.gmra.mrb[0].mxu0 %v2318
  %v2564 = vpop.f32.mrb[0].mxu0
  %v2565 = vadd.f32 0.0, %v2564
  %v2566 = vpop.f32.mrb[0].mxu0
  %v2567 = vpop.f32.mrb[0].mxu0
  %v2568 = vadd.f32 0.0, %v2567
  %v2569 = vpop.f32.mrb[0].mxu0
  %2570 = vmatprep.mubr.bf16.mxu0 %v2322
  %2571 = vmatmul.mubr.bf16.gmra.mrb[0].mxu0 %v2321
  %v2572 = vpop.f32.mrb[0].mxu0
  %v2573 = vadd.f32 0.0, %v2572
  %v2574 = vpop.f32.mrb[0].mxu0
  %v2575 = vpop.f32.mrb[0].mxu0
  %v2576 = vadd.f32 0.0, %v2575
  %v2577 = vpop.f32.mrb[0].mxu0
  %2578 = vmatprep.mubr.bf16.mxu0 %v2325
  %2579 = vmatmul.mubr.bf16.gmra.mrb[0].mxu0 %v2324
  %v2580 = vpop.f32.mrb[0].mxu0
  %v2581 = vadd.f32 0.0, %v2580
  %v2582 = vpop.f32.mrb[0].mxu0
  %v2583 = vpop.f32.mrb[0].mxu0
  %v2584 = vadd.f32 0.0, %v2583
  %v2585 = vpop.f32.mrb[0].mxu0
  %2586 = vmatprep.mubr.bf16.mxu0 %v2328
  %2587 = vmatmul.mubr.bf16.gmra.mrb[0].mxu0 %v2327
  %v2588 = vpop.f32.mrb[0].mxu0
  %v2589 = vadd.f32 0.0, %v2588
  %v2590 = vpop.f32.mrb[0].mxu0
  %v2591 = vpop.f32.mrb[0].mxu0
  %v2592 = vadd.f32 0.0, %v2591
  %v2593 = vpop.f32.mrb[0].mxu0
  %2594 = vdwg.mxu0
  %2595 = vmatprep.subr.bf16.mxu0 0
  %2596 = vmatpush1.bf16.msra.mxu0 %v2454
  %2597 = vmatprep.subr.bf16.mxu0 0
  %2598 = vmatpush1.bf16.msra.mxu0 %v2455
  %2599 = vmatprep.subr.bf16.mxu0 0
  %2600 = vmatpush1.bf16.msra.mxu0 0
  %2601 = vmatprep.subr.bf16.mxu0 0
  %2602 = vmatpush1.bf16.msra.mxu0 0
  %2603 = vmatprep.subr.bf16.mxu0 0
  %2604 = vmatpush1.bf16.msra.mxu0 0
  %2605 = vmatprep.subr.bf16.mxu0 0
  %2606 = vmatpush1.bf16.msra.mxu0 0
  %2607 = vmatprep.subr.bf16.mxu0 0
  %2608 = vmatpush1.bf16.msra.mxu0 0
  %2609 = vmatprep.subr.bf16.mxu0 0
  %2610 = vmatpush1.bf16.msra.mxu0 0
  %2611 = vmatprep.subr.bf16.mxu0 0
  %2612 = vmatpush1.bf16.msra.mxu0 0
  %2613 = vmatprep.subr.bf16.mxu0 0
  %2614 = vmatpush1.bf16.msra.mxu0 0
  %2615 = vmatprep.subr.bf16.mxu0 0
  %2616 = vmatpush1.bf16.msra.mxu0 0
  %2617 = vmatprep.subr.bf16.mxu0 0
  %2618 = vmatpush1.bf16.msra.mxu0 0
  %2619 = vmatprep.subr.bf16.mxu0 0
  %2620 = vmatpush1.bf16.msra.mxu0 0
  %2621 = vmatprep.subr.bf16.mxu0 0
  %2622 = vmatpush1.bf16.msra.mxu0 0
  %2623 = vmatprep.subr.bf16.mxu0 0
  %2624 = vmatpush1.bf16.msra.mxu0 0
  %2625 = vmatprep.subr.bf16.mxu0 0
  %2626 = vmatpush1.bf16.msra.mxu0 0
  %2627 = vmatprep.mubr.bf16.mxu0 0
  %2628 = vmatmul.mubr.bf16.gmra.mrb[0].mxu0 %v2475
  %v2629 = vpop.f32.mrb[0].mxu0
  %v2630 = vadd.f32 %v2533, %v2629
  %v2631 = vpop.f32.mrb[0].mxu0
  %v2632 = vpop.f32.mrb[0].mxu0
  %v2633 = vadd.f32 %v2536, %v2632
  %v2634 = vpop.f32.mrb[0].mxu0
  %2635 = vmatprep.mubr.bf16.mxu0 0
  %2636 = vmatmul.mubr.bf16.gmra.mrb[0].mxu0 %v2478
  %v2637 = vpop.f32.mrb[0].mxu0
  %v2638 = vadd.f32 %v2541, %v2637
  %v2639 = vpop.f32.mrb[0].mxu0
  %v2640 = vpop.f32.mrb[0].mxu0
  %v2641 = vadd.f32 %v2544, %v2640
  %v2642 = vpop.f32.mrb[0].mxu0
  %2643 = vmatprep.mubr.bf16.mxu0 0
  %2644 = vmatmul.mubr.bf16.gmra.mrb[0].mxu0 %v2481
  %v2645 = vpop.f32.mrb[0].mxu0
  %v2646 = vadd.f32 %v2549, %v2645
  %v2647 = vpop.f32.mrb[0].mxu0
  %v2648 = vpop.f32.mrb[0].mxu0
  %v2649 = vadd.f32 %v2552, %v2648
  %v2650 = vpop.f32.mrb[0].mxu0
  %2651 = vmatprep.mubr.bf16.mxu0 0
  %2652 = vmatmul.mubr.bf16.gmra.mrb[0].mxu0 %v2484
  %v2653 = vpop.f32.mrb[0].mxu0
  %v2654 = vadd.f32 %v2557, %v2653
  %v2655 = vpop.f32.mrb[0].mxu0
  %v2656 = vpop.f32.mrb[0].mxu0
  %v2657 = vadd.f32 %v2560, %v2656
  %v2658 = vpop.f32.mrb[0].mxu0
  %2659 = vmatprep.mubr.bf16.mxu0 0
  %2660 = vmatmul.mubr.bf16.gmra.mrb[0].mxu0 %v2487
  %v2661 = vpop.f32.mrb[0].mxu0
  %v2662 = vadd.f32 %v2565, %v2661
  %v2663 = vpop.f32.mrb[0].mxu0
  %v2664 = vpop.f32.mrb[0].mxu0
  %v2665 = vadd.f32 %v2568, %v2664
  %v2666 = vpop.f32.mrb[0].mxu0
  %2667 = vmatprep.mubr.bf16.mxu0 0
  %2668 = vmatmul.mubr.bf16.gmra.mrb[0].mxu0 %v2490
  %v2669 = vpop.f32.mrb[0].mxu0
  %v2670 = vadd.f32 %v2573, %v2669
  %v2671 = vpop.f32.mrb[0].mxu0
  %v2672 = vpop.f32.mrb[0].mxu0
  %v2673 = vadd.f32 %v2576, %v2672
  %v2674 = vpop.f32.mrb[0].mxu0
  %2675 = vmatprep.mubr.bf16.mxu0 0
  %2676 = vmatmul.mubr.bf16.gmra.mrb[0].mxu0 %v2493
  %v2677 = vpop.f32.mrb[0].mxu0
  %v2678 = vadd.f32 %v2581, %v2677
  %v2679 = vpop.f32.mrb[0].mxu0
  %v2680 = vpop.f32.mrb[0].mxu0
  %v2681 = vadd.f32 %v2584, %v2680
  %v2682 = vpop.f32.mrb[0].mxu0
  %2683 = vmatprep.mubr.bf16.mxu0 0
  %2684 = vmatmul.mubr.bf16.gmra.mrb[0].mxu0 %v2496
  %v2685 = vpop.f32.mrb[0].mxu0
  %v2686 = vadd.f32 %v2589, %v2685
  %v2687 = vpop.f32.mrb[0].mxu0
  %v2688 = vpop.f32.mrb[0].mxu0
  %v2689 = vadd.f32 %v2592, %v2688
  %v2690 = vpop.f32.mrb[0].mxu0
  %2691 = vdwg.mxu0
  %2708 = vrot.lane.b32.xlu0 %v2630, 48
  %v2709 = vpop.permute.xlu0 %2708
  %2710 = vrot.lane.b32.xlu0 %v2633, 48
  %v2711 = vpop.permute.xlu0 %2710
  %2712 = vrot.lane.b32.xlu0 %v2638, 48
  %v2713 = vpop.permute.xlu0 %2712
  %2714 = vrot.lane.b32.xlu0 %v2641, 48
  %v2715 = vpop.permute.xlu0 %2714
  %2716 = vrot.lane.b32.xlu0 %v2646, 48
  %v2717 = vpop.permute.xlu0 %2716
  %2718 = vrot.lane.b32.xlu0 %v2649, 48
  %v2719 = vpop.permute.xlu0 %2718
  %2720 = vrot.lane.b32.xlu0 %v2654, 48
  %v2721 = vpop.permute.xlu0 %2720
  %2722 = vrot.lane.b32.xlu0 %v2657, 48
  %v2723 = vpop.permute.xlu0 %2722
  %2724 = vrot.lane.b32.xlu0 %v2662, 48
  %v2725 = vpop.permute.xlu0 %2724
  %2726 = vrot.lane.b32.xlu0 %v2665, 48
  %v2727 = vpop.permute.xlu0 %2726
  %2728 = vrot.lane.b32.xlu0 %v2670, 48
  %v2729 = vpop.permute.xlu0 %2728
  %2730 = vrot.lane.b32.xlu0 %v2673, 48
  %v2731 = vpop.permute.xlu0 %2730
  %2732 = vrot.lane.b32.xlu0 %v2678, 48
  %v2733 = vpop.permute.xlu0 %2732
  %2734 = vrot.lane.b32.xlu0 %v2681, 48
  %v2735 = vpop.permute.xlu0 %2734
  %2736 = vrot.lane.b32.xlu0 %v2686, 48
  %v2737 = vpop.permute.xlu0 %2736
  %2738 = vrot.lane.b32.xlu0 %v2689, 48
  %v2739 = vpop.permute.xlu0 %2738
  %v2756 = vsel %vm1528, %v1418, %v2709
  %v2757 = vsel %vm1528, %v1419, %v2711
  %v2758 = vsel %vm1528, %v1420, %v2713
  %v2759 = vsel %vm1528, %v1421, %v2715
  %v2760 = vsel %vm1528, %v1422, %v2717
  %v2761 = vsel %vm1528, %v1423, %v2719
  %v2762 = vsel %vm1528, %v1424, %v2721
  %v2763 = vsel %vm1528, %v1425, %v2723
  %v2764 = vsel %vm1528, %v1426, %v2725
  %v2765 = vsel %vm1528, %v1427, %v2727
  %v2766 = vsel %vm1528, %v1428, %v2729
  %v2767 = vsel %vm1528, %v1429, %v2731
  %v2768 = vsel %vm1528, %v1430, %v2733
  %v2769 = vsel %vm1528, %v1431, %v2735
  %v2770 = vsel %vm1528, %v1432, %v2737
  %v2771 = vsel %vm1528, %v1433, %v2739
  %v2772 = vld [vmem:[%s13] sm:$0x1]
  %v2774 = vlaneseq
  %v2775 = vshrl.u32 %v2774, 7
  %v2776 = vsub.s32 0, %v2775
  %v2777 = vrot.slane %v2772, %v2776
  %v2779 = vmul.f32 %v2756, %v2777
  %v2780 = vmul.f32 %v2757, %v2777
  %v2781 = vmul.f32 %v2758, %v2777
  %v2782 = vmul.f32 %v2759, %v2777
  %v2783 = vmul.f32 %v2760, %v2777
  %v2784 = vmul.f32 %v2761, %v2777
  %v2785 = vmul.f32 %v2762, %v2777
  %v2786 = vmul.f32 %v2763, %v2777
  %v2787 = vmul.f32 %v2764, %v2777
  %v2788 = vmul.f32 %v2765, %v2777
  %v2789 = vmul.f32 %v2766, %v2777
  %v2790 = vmul.f32 %v2767, %v2777
  %v2791 = vmul.f32 %v2768, %v2777
  %v2792 = vmul.f32 %v2769, %v2777
  %v2793 = vmul.f32 %v2770, %v2777
  %v2794 = vmul.f32 %v2771, %v2777
  %v2795 = vld [vmem:[%s14] sm:$0x1]
  %v2797 = vlaneseq
  %v2798 = vshrl.u32 %v2797, 7
  %v2799 = vsub.s32 0, %v2798
  %v2800 = vrot.slane %v2795, %v2799
  %v2802 = vadd.f32 %v2779, %v2800
  %v2803 = vadd.f32 %v2780, %v2800
  %v2804 = vadd.f32 %v2781, %v2800
  %v2805 = vadd.f32 %v2782, %v2800
  %v2806 = vadd.f32 %v2783, %v2800
  %v2807 = vadd.f32 %v2784, %v2800
  %v2808 = vadd.f32 %v2785, %v2800
  %v2809 = vadd.f32 %v2786, %v2800
  %v2810 = vadd.f32 %v2787, %v2800
  %v2811 = vadd.f32 %v2788, %v2800
  %v2812 = vadd.f32 %v2789, %v2800
  %v2813 = vadd.f32 %v2790, %v2800
  %v2814 = vadd.f32 %v2791, %v2800
  %v2815 = vadd.f32 %v2792, %v2800
  %v2816 = vadd.f32 %v2793, %v2800
  %v2817 = vadd.f32 %v2794, %v2800
  %v2818 = vmax.f32 %v2802, 0.0
  %v2819 = vmax.f32 %v2803, 0.0
  %v2820 = vmax.f32 %v2804, 0.0
  %v2821 = vmax.f32 %v2805, 0.0
  %v2822 = vmax.f32 %v2806, 0.0
  %v2823 = vmax.f32 %v2807, 0.0
  %v2824 = vmax.f32 %v2808, 0.0
  %v2825 = vmax.f32 %v2809, 0.0
  %v2826 = vmax.f32 %v2810, 0.0
  %v2827 = vmax.f32 %v2811, 0.0
  %v2828 = vmax.f32 %v2812, 0.0
  %v2829 = vmax.f32 %v2813, 0.0
  %v2830 = vmax.f32 %v2814, 0.0
  %v2831 = vmax.f32 %v2815, 0.0
  %v2832 = vmax.f32 %v2816, 0.0
  %v2833 = vmax.f32 %v2817, 0.0
  %v2834 = vpack.c.bf16 %v2819, %v2818
  %v2835 = vpack.c.bf16 %v2821, %v2820
  %v2836 = vpack.c.bf16 %v2823, %v2822
  %v2837 = vpack.c.bf16 %v2825, %v2824
  %v2838 = vpack.c.bf16 %v2827, %v2826
  %v2839 = vpack.c.bf16 %v2829, %v2828
  %v2840 = vpack.c.bf16 %v2831, %v2830
  %v2841 = vpack.c.bf16 %v2833, %v2832
  %v2842 = vld [vmem:[%s15] sm:$0xf]
  %v2843 = vld [vmem:[%s15 + $0x4] sm:$0xf]
  %v2844 = vld [vmem:[%s15 + $0x8] sm:$0xf]
  %v2845 = vld [vmem:[%s15 + $0xc] sm:$0xf]
  %v2846 = vld [vmem:[%s15 + $0x10] sm:$0xf]
  %v2847 = vld [vmem:[%s15 + $0x14] sm:$0xf]
  %v2848 = vld [vmem:[%s15 + $0x18] sm:$0xf]
  %v2849 = vld [vmem:[%s15 + $0x1c] sm:$0xf]
  %v2858 = vunpack.c.l.b16 %v2842
  %v2859 = vunpack.c.l.b16 %v2843
  %v2860 = vunpack.c.l.b16 %v2844
  %v2861 = vunpack.c.l.b16 %v2845
  %v2862 = vunpack.c.l.b16 %v2846
  %v2863 = vunpack.c.l.b16 %v2847
  %v2864 = vunpack.c.l.b16 %v2848
  %v2865 = vunpack.c.l.b16 %v2849
  %v2866 = vpack.c.b16 %v2859, %v2858
  %v2867 = vpack.c.b16 %v2861, %v2860
  %v2868 = vpack.c.b16 %v2863, %v2862
  %v2869 = vpack.c.b16 %v2865, %v2864
  %v2875 = vsel %vm887, %v2834, 0
  %v2878 = vsel %vm887, %v2835, 0
  %v2881 = vsel %vm887, %v2836, 0
  %v2884 = vsel %vm887, %v2837, 0
  %v2887 = vsel %vm887, %v2838, 0
  %v2890 = vsel %vm887, %v2839, 0
  %v2893 = vsel %vm887, %v2840, 0
  %v2896 = vsel %vm887, %v2841, 0
  %2898 = vmatprep.subr.bf16.mxu0 0
  %2899 = vmatpush1.bf16.msra.mxu0 %v2866
  %2900 = vmatprep.subr.bf16.mxu0 0
  %2901 = vmatpush1.bf16.msra.mxu0 %v2867
  %2902 = vmatprep.subr.bf16.mxu0 0
  %2903 = vmatpush1.bf16.msra.mxu0 %v2868
  %2904 = vmatprep.subr.bf16.mxu0 0
  %2905 = vmatpush1.bf16.msra.mxu0 %v2869
  %2906 = vmatprep.subr.bf16.mxu0 0
  %2907 = vmatpush1.bf16.msra.mxu0 0
  %2908 = vmatprep.subr.bf16.mxu0 0
  %2909 = vmatpush1.bf16.msra.mxu0 0
  %2910 = vmatprep.subr.bf16.mxu0 0
  %2911 = vmatpush1.bf16.msra.mxu0 0
  %2912 = vmatprep.subr.bf16.mxu0 0
  %2913 = vmatpush1.bf16.msra.mxu0 0
  %2914 = vmatprep.subr.bf16.mxu0 0
  %2915 = vmatpush1.bf16.msra.mxu0 0
  %2916 = vmatprep.subr.bf16.mxu0 0
  %2917 = vmatpush1.bf16.msra.mxu0 0
  %2918 = vmatprep.subr.bf16.mxu0 0
  %2919 = vmatpush1.bf16.msra.mxu0 0
  %2920 = vmatprep.subr.bf16.mxu0 0
  %2921 = vmatpush1.bf16.msra.mxu0 0
  %2922 = vmatprep.subr.bf16.mxu0 0
  %2923 = vmatpush1.bf16.msra.mxu0 0
  %2924 = vmatprep.subr.bf16.mxu0 0
  %2925 = vmatpush1.bf16.msra.mxu0 0
  %2926 = vmatprep.subr.bf16.mxu0 0
  %2927 = vmatpush1.bf16.msra.mxu0 0
  %2928 = vmatprep.subr.bf16.mxu0 0
  %2929 = vmatpush1.bf16.msra.mxu0 0
  %2930 = vmatprep.mubr.bf16.mxu0 0
  %2931 = vmatmul.mubr.bf16.gmra.mrb[0].mxu0 %v2875
  %v2932 = vpop.f32.mrb[0].mxu0
  %v2933 = vadd.f32 0.0, %v2932
  %v2934 = vpop.f32.mrb[0].mxu0
  %v2935 = vpop.f32.mrb[0].mxu0
  %v2936 = vadd.f32 0.0, %v2935
  %v2937 = vpop.f32.mrb[0].mxu0
  %2938 = vmatprep.mubr.bf16.mxu0 0
  %2939 = vmatmul.mubr.bf16.gmra.mrb[0].mxu0 %v2878
  %v2940 = vpop.f32.mrb[0].mxu0
  %v2941 = vadd.f32 0.0, %v2940
  %v2942 = vpop.f32.mrb[0].mxu0
  %v2943 = vpop.f32.mrb[0].mxu0
  %v2944 = vadd.f32 0.0, %v2943
  %v2945 = vpop.f32.mrb[0].mxu0
  %2946 = vmatprep.mubr.bf16.mxu0 0
  %2947 = vmatmul.mubr.bf16.gmra.mrb[0].mxu0 %v2881
  %v2948 = vpop.f32.mrb[0].mxu0
  %v2949 = vadd.f32 0.0, %v2948
  %v2950 = vpop.f32.mrb[0].mxu0
  %v2951 = vpop.f32.mrb[0].mxu0
  %v2952 = vadd.f32 0.0, %v2951
  %v2953 = vpop.f32.mrb[0].mxu0
  %2954 = vmatprep.mubr.bf16.mxu0 0
  %2955 = vmatmul.mubr.bf16.gmra.mrb[0].mxu0 %v2884
  %v2956 = vpop.f32.mrb[0].mxu0
  %v2957 = vadd.f32 0.0, %v2956
  %v2958 = vpop.f32.mrb[0].mxu0
  %v2959 = vpop.f32.mrb[0].mxu0
  %v2960 = vadd.f32 0.0, %v2959
  %v2961 = vpop.f32.mrb[0].mxu0
  %2962 = vmatprep.mubr.bf16.mxu0 0
  %2963 = vmatmul.mubr.bf16.gmra.mrb[0].mxu0 %v2887
  %v2964 = vpop.f32.mrb[0].mxu0
  %v2965 = vadd.f32 0.0, %v2964
  %v2966 = vpop.f32.mrb[0].mxu0
  %v2967 = vpop.f32.mrb[0].mxu0
  %v2968 = vadd.f32 0.0, %v2967
  %v2969 = vpop.f32.mrb[0].mxu0
  %2970 = vmatprep.mubr.bf16.mxu0 0
  %2971 = vmatmul.mubr.bf16.gmra.mrb[0].mxu0 %v2890
  %v2972 = vpop.f32.mrb[0].mxu0
  %v2973 = vadd.f32 0.0, %v2972
  %v2974 = vpop.f32.mrb[0].mxu0
  %v2975 = vpop.f32.mrb[0].mxu0
  %v2976 = vadd.f32 0.0, %v2975
  %v2977 = vpop.f32.mrb[0].mxu0
  %2978 = vmatprep.mubr.bf16.mxu0 0
  %2979 = vmatmul.mubr.bf16.gmra.mrb[0].mxu0 %v2893
  %v2980 = vpop.f32.mrb[0].mxu0
  %v2981 = vadd.f32 0.0, %v2980
  %v2982 = vpop.f32.mrb[0].mxu0
  %v2983 = vpop.f32.mrb[0].mxu0
  %v2984 = vadd.f32 0.0, %v2983
  %v2985 = vpop.f32.mrb[0].mxu0
  %2986 = vmatprep.mubr.bf16.mxu0 0
  %2987 = vmatmul.mubr.bf16.gmra.mrb[0].mxu0 %v2896
  %v2988 = vpop.f32.mrb[0].mxu0
  %v2989 = vadd.f32 0.0, %v2988
  %v2990 = vpop.f32.mrb[0].mxu0
  %v2991 = vpop.f32.mrb[0].mxu0
  %v2992 = vadd.f32 0.0, %v2991
  %v2993 = vpop.f32.mrb[0].mxu0
  %2994 = vdwg.mxu0
  %v2995 = vld [vmem:[%s16] sm:$0x1]
  %v2997 = vlaneseq
  %v2998 = vshrl.u32 %v2997, 7
  %v2999 = vsub.s32 0, %v2998
  %v3000 = vrot.slane %v2995, %v2999
  %v3002 = vmul.f32 %v2933, %v3000
  %v3003 = vmul.f32 %v2936, %v3000
  %v3004 = vmul.f32 %v2941, %v3000
  %v3005 = vmul.f32 %v2944, %v3000
  %v3006 = vmul.f32 %v2949, %v3000
  %v3007 = vmul.f32 %v2952, %v3000
  %v3008 = vmul.f32 %v2957, %v3000
  %v3009 = vmul.f32 %v2960, %v3000
  %v3010 = vmul.f32 %v2965, %v3000
  %v3011 = vmul.f32 %v2968, %v3000
  %v3012 = vmul.f32 %v2973, %v3000
  %v3013 = vmul.f32 %v2976, %v3000
  %v3014 = vmul.f32 %v2981, %v3000
  %v3015 = vmul.f32 %v2984, %v3000
  %v3016 = vmul.f32 %v2989, %v3000
  %v3017 = vmul.f32 %v2992, %v3000
  %v3018 = vld [vmem:[%s17] sm:$0x1]
  %v3020 = vlaneseq
  %v3021 = vshrl.u32 %v3020, 7
  %v3022 = vsub.s32 0, %v3021
  %v3023 = vrot.slane %v3018, %v3022
  %v3025 = vadd.f32 %v3002, %v3023
  %v3026 = vadd.f32 %v3003, %v3023
  %v3027 = vadd.f32 %v3004, %v3023
  %v3028 = vadd.f32 %v3005, %v3023
  %v3029 = vadd.f32 %v3006, %v3023
  %v3030 = vadd.f32 %v3007, %v3023
  %v3031 = vadd.f32 %v3008, %v3023
  %v3032 = vadd.f32 %v3009, %v3023
  %v3033 = vadd.f32 %v3010, %v3023
  %v3034 = vadd.f32 %v3011, %v3023
  %v3035 = vadd.f32 %v3012, %v3023
  %v3036 = vadd.f32 %v3013, %v3023
  %v3037 = vadd.f32 %v3014, %v3023
  %v3038 = vadd.f32 %v3015, %v3023
  %v3039 = vadd.f32 %v3016, %v3023
  %v3040 = vadd.f32 %v3017, %v3023
  %v3041 = vmax.f32 %v3025, 0.0
  %v3042 = vmax.f32 %v3026, 0.0
  %v3043 = vmax.f32 %v3027, 0.0
  %v3044 = vmax.f32 %v3028, 0.0
  %v3045 = vmax.f32 %v3029, 0.0
  %v3046 = vmax.f32 %v3030, 0.0
  %v3047 = vmax.f32 %v3031, 0.0
  %v3048 = vmax.f32 %v3032, 0.0
  %v3049 = vmax.f32 %v3033, 0.0
  %v3050 = vmax.f32 %v3034, 0.0
  %v3051 = vmax.f32 %v3035, 0.0
  %v3052 = vmax.f32 %v3036, 0.0
  %v3053 = vmax.f32 %v3037, 0.0
  %v3054 = vmax.f32 %v3038, 0.0
  %v3055 = vmax.f32 %v3039, 0.0
  %v3056 = vmax.f32 %v3040, 0.0
  %v3073 = vrot.slane %v3041, 7
  %v3074 = vrot.slane %v3042, 7
  %v3075 = vrot.slane %v3043, 7
  %v3076 = vrot.slane %v3044, 7
  %v3077 = vrot.slane %v3045, 7
  %v3078 = vrot.slane %v3046, 7
  %v3079 = vrot.slane %v3047, 7
  %v3080 = vrot.slane %v3048, 7
  %v3081 = vrot.slane %v3049, 7
  %v3082 = vrot.slane %v3050, 7
  %v3083 = vrot.slane %v3051, 7
  %v3084 = vrot.slane %v3052, 7
  %v3085 = vrot.slane %v3053, 7
  %v3086 = vrot.slane %v3054, 7
  %v3087 = vrot.slane %v3055, 7
  %v3088 = vrot.slane %v3056, 7
  %v3105 = vsel %vm397, 0.0, %v3073
  %v3106 = vsel %vm397, 0.0, %v3074
  %v3107 = vsel %vm397, 0.0, %v3075
  %v3108 = vsel %vm397, 0.0, %v3076
  %v3109 = vsel %vm397, 0.0, %v3077
  %v3110 = vsel %vm397, 0.0, %v3078
  %v3111 = vsel %vm397, 0.0, %v3079
  %v3112 = vsel %vm397, 0.0, %v3080
  %v3113 = vsel %vm397, 0.0, %v3081
  %v3114 = vsel %vm397, 0.0, %v3082
  %v3115 = vsel %vm397, 0.0, %v3083
  %v3116 = vsel %vm397, 0.0, %v3084
  %v3117 = vsel %vm397, 0.0, %v3085
  %v3118 = vsel %vm397, 0.0, %v3086
  %v3119 = vsel %vm397, 0.0, %v3087
  %v3120 = vsel %vm397, 0.0, %v3088
  %v3121 = vsel %vm397, %v3073, 0.0
  %v3122 = vsel %vm397, %v3074, 0.0
  %v3123 = vsel %vm397, %v3075, 0.0
  %v3124 = vsel %vm397, %v3076, 0.0
  %v3125 = vsel %vm397, %v3077, 0.0
  %v3126 = vsel %vm397, %v3078, 0.0
  %v3127 = vsel %vm397, %v3079, 0.0
  %v3128 = vsel %vm397, %v3080, 0.0
  %v3129 = vsel %vm397, %v3081, 0.0
  %v3130 = vsel %vm397, %v3082, 0.0
  %v3131 = vsel %vm397, %v3083, 0.0
  %v3132 = vsel %vm397, %v3084, 0.0
  %v3133 = vsel %vm397, %v3085, 0.0
  %v3134 = vsel %vm397, %v3086, 0.0
  %v3135 = vsel %vm397, %v3087, 0.0
  %v3136 = vsel %vm397, %v3088, 0.0
  %v3165 = vrot.slane %v3105, 1
  %v3166 = vrot.slane %v3121, 1
  %v3167 = vsel %vm459, %v3165, %v3166
  %v3168 = vrot.slane %v3106, 1
  %v3169 = vrot.slane %v3122, 1
  %v3170 = vsel %vm459, %v3168, %v3169
  %v3171 = vrot.slane %v3107, 1
  %v3172 = vrot.slane %v3123, 1
  %v3173 = vsel %vm459, %v3171, %v3172
  %v3174 = vrot.slane %v3108, 1
  %v3175 = vrot.slane %v3124, 1
  %v3176 = vsel %vm459, %v3174, %v3175
  %v3177 = vrot.slane %v3109, 1
  %v3178 = vrot.slane %v3125, 1
  %v3179 = vsel %vm459, %v3177, %v3178
  %v3180 = vrot.slane %v3110, 1
  %v3181 = vrot.slane %v3126, 1
  %v3182 = vsel %vm459, %v3180, %v3181
  %v3183 = vrot.slane %v3111, 1
  %v3184 = vrot.slane %v3127, 1
  %v3185 = vsel %vm459, %v3183, %v3184
  %v3186 = vrot.slane %v3113, 1
  %v3187 = vrot.slane %v3129, 1
  %v3188 = vsel %vm459, %v3186, %v3187
  %v3189 = vrot.slane %v3114, 1
  %v3190 = vrot.slane %v3130, 1
  %v3191 = vsel %vm459, %v3189, %v3190
  %v3192 = vrot.slane %v3115, 1
  %v3193 = vrot.slane %v3131, 1
  %v3194 = vsel %vm459, %v3192, %v3193
  %v3195 = vrot.slane %v3116, 1
  %v3196 = vrot.slane %v3132, 1
  %v3197 = vsel %vm459, %v3195, %v3196
  %v3198 = vrot.slane %v3117, 1
  %v3199 = vrot.slane %v3133, 1
  %v3200 = vsel %vm459, %v3198, %v3199
  %v3201 = vrot.slane %v3118, 1
  %v3202 = vrot.slane %v3134, 1
  %v3203 = vsel %vm459, %v3201, %v3202
  %v3204 = vrot.slane %v3119, 1
  %v3205 = vrot.slane %v3135, 1
  %v3206 = vsel %vm459, %v3204, %v3205
  %v3207 = vrot.slane %v3105, 2
  %v3208 = vrot.slane %v3121, 2
  %v3209 = vsel %vm504, %v3207, %v3208
  %v3210 = vrot.slane %v3106, 2
  %v3211 = vrot.slane %v3122, 2
  %v3212 = vsel %vm504, %v3210, %v3211
  %v3213 = vrot.slane %v3107, 2
  %v3214 = vrot.slane %v3123, 2
  %v3215 = vsel %vm504, %v3213, %v3214
  %v3216 = vrot.slane %v3108, 2
  %v3217 = vrot.slane %v3124, 2
  %v3218 = vsel %vm504, %v3216, %v3217
  %v3219 = vrot.slane %v3109, 2
  %v3220 = vrot.slane %v3125, 2
  %v3221 = vsel %vm504, %v3219, %v3220
  %v3222 = vrot.slane %v3110, 2
  %v3223 = vrot.slane %v3126, 2
  %v3224 = vsel %vm504, %v3222, %v3223
  %v3225 = vrot.slane %v3111, 2
  %v3226 = vrot.slane %v3127, 2
  %v3227 = vsel %vm504, %v3225, %v3226
  %v3228 = vrot.slane %v3113, 2
  %v3229 = vrot.slane %v3129, 2
  %v3230 = vsel %vm504, %v3228, %v3229
  %v3231 = vrot.slane %v3114, 2
  %v3232 = vrot.slane %v3130, 2
  %v3233 = vsel %vm504, %v3231, %v3232
  %v3234 = vrot.slane %v3115, 2
  %v3235 = vrot.slane %v3131, 2
  %v3236 = vsel %vm504, %v3234, %v3235
  %v3237 = vrot.slane %v3116, 2
  %v3238 = vrot.slane %v3132, 2
  %v3239 = vsel %vm504, %v3237, %v3238
  %v3240 = vrot.slane %v3117, 2
  %v3241 = vrot.slane %v3133, 2
  %v3242 = vsel %vm504, %v3240, %v3241
  %v3243 = vrot.slane %v3118, 2
  %v3244 = vrot.slane %v3134, 2
  %v3245 = vsel %vm504, %v3243, %v3244
  %v3246 = vrot.slane %v3119, 2
  %v3247 = vrot.slane %v3135, 2
  %v3248 = vsel %vm504, %v3246, %v3247
  %v3253 = vrot.slane %v3112, 1
  %v3254 = vrot.slane %v3128, 1
  %v3255 = vsel %vm459, %v3253, %v3254
  %v3256 = vrot.slane %v3120, 1
  %v3257 = vrot.slane %v3136, 1
  %v3258 = vsel %vm459, %v3256, %v3257
  %v3275 = vrot.slane %v3112, 2
  %v3276 = vrot.slane %v3128, 2
  %v3277 = vsel %vm504, %v3275, %v3276
  %v3278 = vrot.slane %v3120, 2
  %v3279 = vrot.slane %v3136, 2
  %v3280 = vsel %vm504, %v3278, %v3279
  %3295 = vrot.lane.b32.xlu0 %v3167, 32
  %v3296 = vpop.permute.xlu0 %3295
  %3297 = vrot.lane.b32.xlu0 %v3170, 32
  %v3298 = vpop.permute.xlu0 %3297
  %3299 = vrot.lane.b32.xlu0 %v3173, 32
  %v3300 = vpop.permute.xlu0 %3299
  %3301 = vrot.lane.b32.xlu0 %v3176, 32
  %v3302 = vpop.permute.xlu0 %3301
  %3303 = vrot.lane.b32.xlu0 %v3179, 32
  %v3304 = vpop.permute.xlu0 %3303
  %3305 = vrot.lane.b32.xlu0 %v3182, 32
  %v3306 = vpop.permute.xlu0 %3305
  %3307 = vrot.lane.b32.xlu0 %v3185, 32
  %v3308 = vpop.permute.xlu0 %3307
  %3309 = vrot.lane.b32.xlu0 %v3188, 32
  %v3310 = vpop.permute.xlu0 %3309
  %3311 = vrot.lane.b32.xlu0 %v3191, 32
  %v3312 = vpop.permute.xlu0 %3311
  %3313 = vrot.lane.b32.xlu0 %v3194, 32
  %v3314 = vpop.permute.xlu0 %3313
  %3315 = vrot.lane.b32.xlu0 %v3197, 32
  %v3316 = vpop.permute.xlu0 %3315
  %3317 = vrot.lane.b32.xlu0 %v3200, 32
  %v3318 = vpop.permute.xlu0 %3317
  %3319 = vrot.lane.b32.xlu0 %v3203, 32
  %v3320 = vpop.permute.xlu0 %3319
  %3321 = vrot.lane.b32.xlu0 %v3206, 32
  %v3322 = vpop.permute.xlu0 %3321
  %3337 = vrot.lane.b32.xlu0 %v3209, 64
  %v3338 = vpop.permute.xlu0 %3337
  %3339 = vrot.lane.b32.xlu0 %v3212, 64
  %v3340 = vpop.permute.xlu0 %3339
  %3341 = vrot.lane.b32.xlu0 %v3215, 64
  %v3342 = vpop.permute.xlu0 %3341
  %3343 = vrot.lane.b32.xlu0 %v3218, 64
  %v3344 = vpop.permute.xlu0 %3343
  %3345 = vrot.lane.b32.xlu0 %v3221, 64
  %v3346 = vpop.permute.xlu0 %3345
  %3347 = vrot.lane.b32.xlu0 %v3224, 64
  %v3348 = vpop.permute.xlu0 %3347
  %3349 = vrot.lane.b32.xlu0 %v3227, 64
  %v3350 = vpop.permute.xlu0 %3349
  %3351 = vrot.lane.b32.xlu0 %v3230, 64
  %v3352 = vpop.permute.xlu0 %3351
  %3353 = vrot.lane.b32.xlu0 %v3233, 64
  %v3354 = vpop.permute.xlu0 %3353
  %3355 = vrot.lane.b32.xlu0 %v3236, 64
  %v3356 = vpop.permute.xlu0 %3355
  %3357 = vrot.lane.b32.xlu0 %v3239, 64
  %v3358 = vpop.permute.xlu0 %3357
  %3359 = vrot.lane.b32.xlu0 %v3242, 64
  %v3360 = vpop.permute.xlu0 %3359
  %3361 = vrot.lane.b32.xlu0 %v3245, 64
  %v3362 = vpop.permute.xlu0 %3361
  %3363 = vrot.lane.b32.xlu0 %v3248, 64
  %v3364 = vpop.permute.xlu0 %3363
  %3379 = vrot.lane.b32.xlu0 %v3105, 96
  %v3380 = vpop.permute.xlu0 %3379
  %3381 = vrot.lane.b32.xlu0 %v3106, 96
  %v3382 = vpop.permute.xlu0 %3381
  %3383 = vrot.lane.b32.xlu0 %v3107, 96
  %v3384 = vpop.permute.xlu0 %3383
  %3385 = vrot.lane.b32.xlu0 %v3108, 96
  %v3386 = vpop.permute.xlu0 %3385
  %3387 = vrot.lane.b32.xlu0 %v3109, 96
  %v3388 = vpop.permute.xlu0 %3387
  %3389 = vrot.lane.b32.xlu0 %v3110, 96
  %v3390 = vpop.permute.xlu0 %3389
  %3391 = vrot.lane.b32.xlu0 %v3111, 96
  %v3392 = vpop.permute.xlu0 %3391
  %3393 = vrot.lane.b32.xlu0 %v3112, 96
  %v3394 = vpop.permute.xlu0 %3393
  %3395 = vrot.lane.b32.xlu0 %v3113, 96
  %v3396 = vpop.permute.xlu0 %3395
  %3397 = vrot.lane.b32.xlu0 %v3114, 96
  %v3398 = vpop.permute.xlu0 %3397
  %3399 = vrot.lane.b32.xlu0 %v3115, 96
  %v3400 = vpop.permute.xlu0 %3399
  %3401 = vrot.lane.b32.xlu0 %v3116, 96
  %v3402 = vpop.permute.xlu0 %3401
  %3403 = vrot.lane.b32.xlu0 %v3117, 96
  %v3404 = vpop.permute.xlu0 %3403
  %3405 = vrot.lane.b32.xlu0 %v3118, 96
  %v3406 = vpop.permute.xlu0 %3405
  %3407 = vrot.lane.b32.xlu0 %v3119, 96
  %v3408 = vpop.permute.xlu0 %3407
  %3409 = vrot.lane.b32.xlu0 %v3120, 96
  %v3410 = vpop.permute.xlu0 %3409
  %3427 = vrot.lane.b32.xlu0 %v3209, 32
  %v3428 = vpop.permute.xlu0 %3427
  %3429 = vrot.lane.b32.xlu0 %v3212, 32
  %v3430 = vpop.permute.xlu0 %3429
  %3431 = vrot.lane.b32.xlu0 %v3215, 32
  %v3432 = vpop.permute.xlu0 %3431
  %3433 = vrot.lane.b32.xlu0 %v3218, 32
  %v3434 = vpop.permute.xlu0 %3433
  %3435 = vrot.lane.b32.xlu0 %v3221, 32
  %v3436 = vpop.permute.xlu0 %3435
  %3437 = vrot.lane.b32.xlu0 %v3224, 32
  %v3438 = vpop.permute.xlu0 %3437
  %3439 = vrot.lane.b32.xlu0 %v3227, 32
  %v3440 = vpop.permute.xlu0 %3439
  %3441 = vrot.lane.b32.xlu0 %v3277, 32
  %v3442 = vpop.permute.xlu0 %3441
  %3443 = vrot.lane.b32.xlu0 %v3230, 32
  %v3444 = vpop.permute.xlu0 %3443
  %3445 = vrot.lane.b32.xlu0 %v3233, 32
  %v3446 = vpop.permute.xlu0 %3445
  %3447 = vrot.lane.b32.xlu0 %v3236, 32
  %v3448 = vpop.permute.xlu0 %3447
  %3449 = vrot.lane.b32.xlu0 %v3239, 32
  %v3450 = vpop.permute.xlu0 %3449
  %3451 = vrot.lane.b32.xlu0 %v3242, 32
  %v3452 = vpop.permute.xlu0 %3451
  %3453 = vrot.lane.b32.xlu0 %v3245, 32
  %v3454 = vpop.permute.xlu0 %3453
  %3455 = vrot.lane.b32.xlu0 %v3248, 32
  %v3456 = vpop.permute.xlu0 %3455
  %3457 = vrot.lane.b32.xlu0 %v3280, 32
  %v3458 = vpop.permute.xlu0 %3457
  %3475 = vrot.lane.b32.xlu0 %v3106, 64
  %v3476 = vpop.permute.xlu0 %3475
  %3477 = vrot.lane.b32.xlu0 %v3107, 64
  %v3478 = vpop.permute.xlu0 %3477
  %3479 = vrot.lane.b32.xlu0 %v3108, 64
  %v3480 = vpop.permute.xlu0 %3479
  %3481 = vrot.lane.b32.xlu0 %v3109, 64
  %v3482 = vpop.permute.xlu0 %3481
  %3483 = vrot.lane.b32.xlu0 %v3110, 64
  %v3484 = vpop.permute.xlu0 %3483
  %3485 = vrot.lane.b32.xlu0 %v3111, 64
  %v3486 = vpop.permute.xlu0 %3485
  %3487 = vrot.lane.b32.xlu0 %v3112, 64
  %v3488 = vpop.permute.xlu0 %3487
  %3489 = vrot.lane.b32.xlu0 %v3114, 64
  %v3490 = vpop.permute.xlu0 %3489
  %3491 = vrot.lane.b32.xlu0 %v3115, 64
  %v3492 = vpop.permute.xlu0 %3491
  %3493 = vrot.lane.b32.xlu0 %v3116, 64
  %v3494 = vpop.permute.xlu0 %3493
  %3495 = vrot.lane.b32.xlu0 %v3117, 64
  %v3496 = vpop.permute.xlu0 %3495
  %3497 = vrot.lane.b32.xlu0 %v3118, 64
  %v3498 = vpop.permute.xlu0 %3497
  %3499 = vrot.lane.b32.xlu0 %v3119, 64
  %v3500 = vpop.permute.xlu0 %3499
  %3501 = vrot.lane.b32.xlu0 %v3120, 64
  %v3502 = vpop.permute.xlu0 %3501
  %3517 = vrot.lane.b32.xlu0 %v3170, 96
  %v3518 = vpop.permute.xlu0 %3517
  %3519 = vrot.lane.b32.xlu0 %v3173, 96
  %v3520 = vpop.permute.xlu0 %3519
  %3521 = vrot.lane.b32.xlu0 %v3176, 96
  %v3522 = vpop.permute.xlu0 %3521
  %3523 = vrot.lane.b32.xlu0 %v3179, 96
  %v3524 = vpop.permute.xlu0 %3523
  %3525 = vrot.lane.b32.xlu0 %v3182, 96
  %v3526 = vpop.permute.xlu0 %3525
  %3527 = vrot.lane.b32.xlu0 %v3185, 96
  %v3528 = vpop.permute.xlu0 %3527
  %3529 = vrot.lane.b32.xlu0 %v3255, 96
  %v3530 = vpop.permute.xlu0 %3529
  %3531 = vrot.lane.b32.xlu0 %v3191, 96
  %v3532 = vpop.permute.xlu0 %3531
  %3533 = vrot.lane.b32.xlu0 %v3194, 96
  %v3534 = vpop.permute.xlu0 %3533
  %3535 = vrot.lane.b32.xlu0 %v3197, 96
  %v3536 = vpop.permute.xlu0 %3535
  %3537 = vrot.lane.b32.xlu0 %v3200, 96
  %v3538 = vpop.permute.xlu0 %3537
  %3539 = vrot.lane.b32.xlu0 %v3203, 96
  %v3540 = vpop.permute.xlu0 %3539
  %3541 = vrot.lane.b32.xlu0 %v3206, 96
  %v3542 = vpop.permute.xlu0 %3541
  %3543 = vrot.lane.b32.xlu0 %v3258, 96
  %v3544 = vpop.permute.xlu0 %3543
  %v3559 = vsel %vm165, %v3105, %v3296
  %v3560 = vsel %vm165, %v3106, %v3298
  %v3561 = vsel %vm165, %v3107, %v3300
  %v3562 = vsel %vm165, %v3108, %v3302
  %v3563 = vsel %vm165, %v3109, %v3304
  %v3564 = vsel %vm165, %v3110, %v3306
  %v3565 = vsel %vm165, %v3111, %v3308
  %v3566 = vsel %vm165, %v3113, %v3310
  %v3567 = vsel %vm165, %v3114, %v3312
  %v3568 = vsel %vm165, %v3115, %v3314
  %v3569 = vsel %vm165, %v3116, %v3316
  %v3570 = vsel %vm165, %v3117, %v3318
  %v3571 = vsel %vm165, %v3118, %v3320
  %v3572 = vsel %vm165, %v3119, %v3322
  %v3573 = vsel %vm887, %v3559, %v3338
  %v3574 = vsel %vm887, %v3560, %v3340
  %v3575 = vsel %vm887, %v3561, %v3342
  %v3576 = vsel %vm887, %v3562, %v3344
  %v3577 = vsel %vm887, %v3563, %v3346
  %v3578 = vsel %vm887, %v3564, %v3348
  %v3579 = vsel %vm887, %v3565, %v3350
  %v3580 = vsel %vm887, %v3566, %v3352
  %v3581 = vsel %vm887, %v3567, %v3354
  %v3582 = vsel %vm887, %v3568, %v3356
  %v3583 = vsel %vm887, %v3569, %v3358
  %v3584 = vsel %vm887, %v3570, %v3360
  %v3585 = vsel %vm887, %v3571, %v3362
  %v3586 = vsel %vm887, %v3572, %v3364
  %v3587 = vsel %vm903, %v888, %v3380
  %v3588 = vsel %vm903, %v3573, %v3382
  %v3589 = vsel %vm903, %v3574, %v3384
  %v3590 = vsel %vm903, %v3575, %v3386
  %v3591 = vsel %vm903, %v3576, %v3388
  %v3592 = vsel %vm903, %v3577, %v3390
  %v3593 = vsel %vm903, %v3578, %v3392
  %v3594 = vsel %vm903, %v3579, %v3394
  %v3595 = vsel %vm903, %v888, %v3396
  %v3596 = vsel %vm903, %v3580, %v3398
  %v3597 = vsel %vm903, %v3581, %v3400
  %v3598 = vsel %vm903, %v3582, %v3402
  %v3599 = vsel %vm903, %v3583, %v3404
  %v3600 = vsel %vm903, %v3584, %v3406
  %v3601 = vsel %vm903, %v3585, %v3408
  %v3602 = vsel %vm903, %v3586, %v3410
  %v3603 = vsel %vm165, %v3167, %v3428
  %v3604 = vsel %vm165, %v3170, %v3430
  %v3605 = vsel %vm165, %v3173, %v3432
  %v3606 = vsel %vm165, %v3176, %v3434
  %v3607 = vsel %vm165, %v3179, %v3436
  %v3608 = vsel %vm165, %v3182, %v3438
  %v3609 = vsel %vm165, %v3185, %v3440
  %v3610 = vsel %vm165, %v3255, %v3442
  %v3611 = vsel %vm165, %v3188, %v3444
  %v3612 = vsel %vm165, %v3191, %v3446
  %v3613 = vsel %vm165, %v3194, %v3448
  %v3614 = vsel %vm165, %v3197, %v3450
  %v3615 = vsel %vm165, %v3200, %v3452
  %v3616 = vsel %vm165, %v3203, %v3454
  %v3617 = vsel %vm165, %v3206, %v3456
  %v3618 = vsel %vm165, %v3258, %v3458
  %v3619 = vsel %vm887, %v3603, %v3476
  %v3620 = vsel %vm887, %v3604, %v3478
  %v3621 = vsel %vm887, %v3605, %v3480
  %v3622 = vsel %vm887, %v3606, %v3482
  %v3623 = vsel %vm887, %v3607, %v3484
  %v3624 = vsel %vm887, %v3608, %v3486
  %v3625 = vsel %vm887, %v3609, %v3488
  %v3626 = vsel %vm887, %v3610, %v797
  %v3627 = vsel %vm887, %v3611, %v3490
  %v3628 = vsel %vm887, %v3612, %v3492
  %v3629 = vsel %vm887, %v3613, %v3494
  %v3630 = vsel %vm887, %v3614, %v3496
  %v3631 = vsel %vm887, %v3615, %v3498
  %v3632 = vsel %vm887, %v3616, %v3500
  %v3633 = vsel %vm887, %v3617, %v3502
  %v3634 = vsel %vm887, %v3618, %v797
  %v3635 = vsel %vm903, %v3619, %v3518
  %v3636 = vsel %vm903, %v3620, %v3520
  %v3637 = vsel %vm903, %v3621, %v3522
  %v3638 = vsel %vm903, %v3622, %v3524
  %v3639 = vsel %vm903, %v3623, %v3526
  %v3640 = vsel %vm903, %v3624, %v3528
  %v3641 = vsel %vm903, %v3625, %v3530
  %v3642 = vsel %vm903, %v3626, %v842
  %v3643 = vsel %vm903, %v3627, %v3532
  %v3644 = vsel %vm903, %v3628, %v3534
  %v3645 = vsel %vm903, %v3629, %v3536
  %v3646 = vsel %vm903, %v3630, %v3538
  %v3647 = vsel %vm903, %v3631, %v3540
  %v3648 = vsel %vm903, %v3632, %v3542
  %v3649 = vsel %vm903, %v3633, %v3544
  %v3650 = vsel %vm903, %v3634, %v842
  %v3651 = vpack.c.bf16 %v3588, %v3587
  %v3652 = vpack.c.bf16 %v3636, %v3635
  %v3653 = vpack.c.bf16 %v3215, %v3212
  %v3654 = vpack.c.bf16 %v3590, %v3589
  %v3655 = vpack.c.bf16 %v3638, %v3637
  %v3656 = vpack.c.bf16 %v3221, %v3218
  %v3657 = vpack.c.bf16 %v3592, %v3591
  %v3658 = vpack.c.bf16 %v3640, %v3639
  %v3659 = vpack.c.bf16 %v3227, %v3224
  %v3660 = vpack.c.bf16 %v3594, %v3593
  %v3661 = vpack.c.bf16 %v3642, %v3641
  %v3662 = vpack.c.bf16 %v506, %v3277
  %v3663 = vpack.c.bf16 %v3596, %v3595
  %v3664 = vpack.c.bf16 %v3644, %v3643
  %v3665 = vpack.c.bf16 %v3236, %v3233
  %v3666 = vpack.c.bf16 %v3598, %v3597
  %v3667 = vpack.c.bf16 %v3646, %v3645
  %v3668 = vpack.c.bf16 %v3242, %v3239
  %v3669 = vpack.c.bf16 %v3600, %v3599
  %v3670 = vpack.c.bf16 %v3648, %v3647
  %v3671 = vpack.c.bf16 %v3248, %v3245
  %v3672 = vpack.c.bf16 %v3602, %v3601
  %v3673 = vpack.c.bf16 %v3650, %v3649
  %v3674 = vpack.c.bf16 %v506, %v3280
  %v3675 = vld [vmem:[%s18] sm:$0xf]
  %v3676 = vld [vmem:[%s18 + $0x4] sm:$0xf]
  %v3677 = vld [vmem:[%s18 + $0x8] sm:$0xf]
  %v3678 = vld [vmem:[%s18 + $0xc] sm:$0xf]
  %v3679 = vld [vmem:[%s18 + $0x10] sm:$0xf]
  %v3680 = vld [vmem:[%s18 + $0x14] sm:$0xf]
  %v3681 = vld [vmem:[%s18 + $0x18] sm:$0xf]
  %v3682 = vld [vmem:[%s18 + $0x1c] sm:$0xf]
  %v3683 = vld [vmem:[%s18 + $0x20] sm:$0xf]
  %v3684 = vld [vmem:[%s18 + $0x24] sm:$0xf]
  %v3685 = vld [vmem:[%s18 + $0x28] sm:$0xf]
  %v3686 = vld [vmem:[%s18 + $0x2c] sm:$0xf]
  %v3687 = vld [vmem:[%s18 + $0x30] sm:$0xf]
  %v3688 = vld [vmem:[%s18 + $0x34] sm:$0xf]
  %v3689 = vld [vmem:[%s18 + $0x38] sm:$0xf]
  %v3690 = vld [vmem:[%s18 + $0x3c] sm:$0xf]
  %v3691 = vld [vmem:[%s18 + $0x40] sm:$0xf]
  %v3692 = vld [vmem:[%s18 + $0x44] sm:$0xf]
  %v3693 = vld [vmem:[%s18 + $0x48] sm:$0xf]
  %v3694 = vld [vmem:[%s18 + $0x4c] sm:$0xf]
  %v3695 = vld [vmem:[%s18 + $0x50] sm:$0xf]
  %v3696 = vld [vmem:[%s18 + $0x54] sm:$0xf]
  %v3697 = vld [vmem:[%s18 + $0x58] sm:$0xf]
  %v3698 = vld [vmem:[%s18 + $0x5c] sm:$0xf]
  %v3699 = vld [vmem:[%s18 + $0x60] sm:$0xf]
  %v3700 = vld [vmem:[%s18 + $0x64] sm:$0xf]
  %v3701 = vld [vmem:[%s18 + $0x68] sm:$0xf]
  %v3702 = vld [vmem:[%s18 + $0x6c] sm:$0xf]
  %v3703 = vld [vmem:[%s18 + $0x70] sm:$0xf]
  %v3704 = vld [vmem:[%s18 + $0x74] sm:$0xf]
  %v3705 = vld [vmem:[%s18 + $0x78] sm:$0xf]
  %v3706 = vld [vmem:[%s18 + $0x7c] sm:$0xf]
  %v3707 = vld [vmem:[%s18 + $0x80] sm:$0xf]
  %v3708 = vld [vmem:[%s18 + $0x84] sm:$0xf]
  %v3709 = vld [vmem:[%s18 + $0x88] sm:$0xf]
  %v3710 = vld [vmem:[%s18 + $0x8c] sm:$0xf]
  %v3747 = vunpack.c.l.b16 %v3675
  %v3748 = vunpack.c.l.b16 %v3676
  %v3749 = vunpack.c.l.b16 %v3677
  %v3750 = vunpack.c.l.b16 %v3678
  %v3751 = vunpack.c.l.b16 %v3679
  %v3752 = vunpack.c.l.b16 %v3680
  %v3753 = vunpack.c.l.b16 %v3681
  %v3754 = vunpack.c.l.b16 %v3682
  %v3755 = vunpack.c.l.b16 %v3683
  %v3756 = vunpack.c.l.b16 %v3684
  %v3757 = vunpack.c.l.b16 %v3685
  %v3758 = vunpack.c.l.b16 %v3686
  %v3759 = vunpack.c.l.b16 %v3687
  %v3760 = vunpack.c.l.b16 %v3688
  %v3761 = vunpack.c.l.b16 %v3689
  %v3762 = vunpack.c.l.b16 %v3690
  %v3763 = vunpack.c.l.b16 %v3691
  %v3764 = vunpack.c.l.b16 %v3692
  %v3765 = vunpack.c.l.b16 %v3693
  %v3766 = vunpack.c.l.b16 %v3694
  %v3767 = vunpack.c.l.b16 %v3695
  %v3768 = vunpack.c.l.b16 %v3696
  %v3769 = vunpack.c.l.b16 %v3697
  %v3770 = vunpack.c.l.b16 %v3698
  %v3771 = vunpack.c.l.b16 %v3699
  %v3772 = vunpack.c.l.b16 %v3700
  %v3773 = vunpack.c.l.b16 %v3701
  %v3774 = vunpack.c.l.b16 %v3702
  %v3775 = vunpack.c.l.b16 %v3703
  %v3776 = vunpack.c.l.b16 %v3704
  %v3777 = vunpack.c.l.b16 %v3705
  %v3778 = vunpack.c.l.b16 %v3706
  %v3779 = vunpack.c.l.b16 %v3707
  %v3780 = vunpack.c.l.b16 %v3708
  %v3781 = vunpack.c.l.b16 %v3709
  %v3782 = vunpack.c.l.b16 %v3710
  %v3783 = vpack.c.b16 %v3748, %v3747
  %v3784 = vpack.c.b16 %v3750, %v3749
  %v3785 = vpack.c.b16 %v3752, %v3751
  %v3786 = vpack.c.b16 %v3754, %v3753
  %v3787 = vpack.c.b16 %v3756, %v3755
  %v3788 = vpack.c.b16 %v3758, %v3757
  %v3789 = vpack.c.b16 %v3760, %v3759
  %v3790 = vpack.c.b16 %v3762, %v3761
  %v3791 = vpack.c.b16 %v3764, %v3763
  %v3792 = vpack.c.b16 %v3766, %v3765
  %v3793 = vpack.c.b16 %v3768, %v3767
  %v3794 = vpack.c.b16 %v3770, %v3769
  %v3795 = vpack.c.b16 %v3772, %v3771
  %v3796 = vpack.c.b16 %v3774, %v3773
  %v3797 = vpack.c.b16 %v3776, %v3775
  %v3798 = vpack.c.b16 %v3778, %v3777
  %v3799 = vpack.c.b16 %v3780, %v3779
  %v3800 = vpack.c.b16 %v3782, %v3781
  %v3820 = vsel %vm165, %v3653, 0
  %v3823 = vsel %vm165, %v3656, 0
  %v3826 = vsel %vm165, %v3659, 0
  %v3829 = vsel %vm165, %v3662, 0
  %v3832 = vsel %vm165, %v3665, 0
  %v3835 = vsel %vm165, %v3668, 0
  %v3838 = vsel %vm165, %v3671, 0
  %v3841 = vsel %vm165, %v3674, 0
  %3843 = vmatprep.subr.bf16.mxu0 0
  %3844 = vmatpush1.bf16.msra.mxu0 %v3783
  %3845 = vmatprep.subr.bf16.mxu0 0
  %3846 = vmatpush1.bf16.msra.mxu0 %v3784
  %3847 = vmatprep.subr.bf16.mxu0 0
  %3848 = vmatpush1.bf16.msra.mxu0 %v3785
  %3849 = vmatprep.subr.bf16.mxu0 0
  %3850 = vmatpush1.bf16.msra.mxu0 %v3786
  %3851 = vmatprep.subr.bf16.mxu0 0
  %3852 = vmatpush1.bf16.msra.mxu0 %v3787
  %3853 = vmatprep.subr.bf16.mxu0 0
  %3854 = vmatpush1.bf16.msra.mxu0 %v3788
  %3855 = vmatprep.subr.bf16.mxu0 0
  %3856 = vmatpush1.bf16.msra.mxu0 %v3789
  %3857 = vmatprep.subr.bf16.mxu0 0
  %3858 = vmatpush1.bf16.msra.mxu0 %v3790
  %3859 = vmatprep.subr.bf16.mxu0 0
  %3860 = vmatpush1.bf16.msra.mxu0 %v3791
  %3861 = vmatprep.subr.bf16.mxu0 0
  %3862 = vmatpush1.bf16.msra.mxu0 %v3792
  %3863 = vmatprep.subr.bf16.mxu0 0
  %3864 = vmatpush1.bf16.msra.mxu0 %v3793
  %3865 = vmatprep.subr.bf16.mxu0 0
  %3866 = vmatpush1.bf16.msra.mxu0 %v3794
  %3867 = vmatprep.subr.bf16.mxu0 0
  %3868 = vmatpush1.bf16.msra.mxu0 %v3795
  %3869 = vmatprep.subr.bf16.mxu0 0
  %3870 = vmatpush1.bf16.msra.mxu0 %v3796
  %3871 = vmatprep.subr.bf16.mxu0 0
  %3872 = vmatpush1.bf16.msra.mxu0 %v3797
  %3873 = vmatprep.subr.bf16.mxu0 0
  %3874 = vmatpush1.bf16.msra.mxu0 %v3798
  %3875 = vmatprep.mubr.bf16.mxu0 %v3652
  %3876 = vmatmul.mubr.bf16.gmra.mrb[0].mxu0 %v3651
  %v3877 = vpop.f32.mrb[0].mxu0
  %v3878 = vadd.f32 0.0, %v3877
  %v3879 = vpop.f32.mrb[0].mxu0
  %v3880 = vpop.f32.mrb[0].mxu0
  %v3881 = vadd.f32 0.0, %v3880
  %v3882 = vpop.f32.mrb[0].mxu0
  %3883 = vmatprep.mubr.bf16.mxu0 %v3655
  %3884 = vmatmul.mubr.bf16.gmra.mrb[0].mxu0 %v3654
  %v3885 = vpop.f32.mrb[0].mxu0
  %v3886 = vadd.f32 0.0, %v3885
  %v3887 = vpop.f32.mrb[0].mxu0
  %v3888 = vpop.f32.mrb[0].mxu0
  %v3889 = vadd.f32 0.0, %v3888
  %v3890 = vpop.f32.mrb[0].mxu0
  %3891 = vmatprep.mubr.bf16.mxu0 %v3658
  %3892 = vmatmul.mubr.bf16.gmra.mrb[0].mxu0 %v3657
  %v3893 = vpop.f32.mrb[0].mxu0
  %v3894 = vadd.f32 0.0, %v3893
  %v3895 = vpop.f32.mrb[0].mxu0
  %v3896 = vpop.f32.mrb[0].mxu0
  %v3897 = vadd.f32 0.0, %v3896
  %v3898 = vpop.f32.mrb[0].mxu0
  %3899 = vmatprep.mubr.bf16.mxu0 %v3661
  %3900 = vmatmul.mubr.bf16.gmra.mrb[0].mxu0 %v3660
  %v3901 = vpop.f32.mrb[0].mxu0
  %v3902 = vadd.f32 0.0, %v3901
  %v3903 = vpop.f32.mrb[0].mxu0
  %v3904 = vpop.f32.mrb[0].mxu0
  %v3905 = vadd.f32 0.0, %v3904
  %v3906 = vpop.f32.mrb[0].mxu0
  %3907 = vmatprep.mubr.bf16.mxu0 %v3664
  %3908 = vmatmul.mubr.bf16.gmra.mrb[0].mxu0 %v3663
  %v3909 = vpop.f32.mrb[0].mxu0
  %v3910 = vadd.f32 0.0, %v3909
  %v3911 = vpop.f32.mrb[0].mxu0
  %v3912 = vpop.f32.mrb[0].mxu0
  %v3913 = vadd.f32 0.0, %v3912
  %v3914 = vpop.f32.mrb[0].mxu0
  %3915 = vmatprep.mubr.bf16.mxu0 %v3667
  %3916 = vmatmul.mubr.bf16.gmra.mrb[0].mxu0 %v3666
  %v3917 = vpop.f32.mrb[0].mxu0
  %v3918 = vadd.f32 0.0, %v3917
  %v3919 = vpop.f32.mrb[0].mxu0
  %v3920 = vpop.f32.mrb[0].mxu0
  %v3921 = vadd.f32 0.0, %v3920
  %v3922 = vpop.f32.mrb[0].mxu0
  %3923 = vmatprep.mubr.bf16.mxu0 %v3670
  %3924 = vmatmul.mubr.bf16.gmra.mrb[0].mxu0 %v3669
  %v3925 = vpop.f32.mrb[0].mxu0
  %v3926 = vadd.f32 0.0, %v3925
  %v3927 = vpop.f32.mrb[0].mxu0
  %v3928 = vpop.f32.mrb[0].mxu0
  %v3929 = vadd.f32 0.0, %v3928
  %v3930 = vpop.f32.mrb[0].mxu0
  %3931 = vmatprep.mubr.bf16.mxu0 %v3673
  %3932 = vmatmul.mubr.bf16.gmra.mrb[0].mxu0 %v3672
  %v3933 = vpop.f32.mrb[0].mxu0
  %v3934 = vadd.f32 0.0, %v3933
  %v3935 = vpop.f32.mrb[0].mxu0
  %v3936 = vpop.f32.mrb[0].mxu0
  %v3937 = vadd.f32 0.0, %v3936
  %v3938 = vpop.f32.mrb[0].mxu0
  %3939 = vdwg.mxu0
  %3940 = vmatprep.subr.bf16.mxu0 0
  %3941 = vmatpush1.bf16.msra.mxu0 %v3799
  %3942 = vmatprep.subr.bf16.mxu0 0
  %3943 = vmatpush1.bf16.msra.mxu0 %v3800
  %3944 = vmatprep.subr.bf16.mxu0 0
  %3945 = vmatpush1.bf16.msra.mxu0 0
  %3946 = vmatprep.subr.bf16.mxu0 0
  %3947 = vmatpush1.bf16.msra.mxu0 0
  %3948 = vmatprep.subr.bf16.mxu0 0
  %3949 = vmatpush1.bf16.msra.mxu0 0
  %3950 = vmatprep.subr.bf16.mxu0 0
  %3951 = vmatpush1.bf16.msra.mxu0 0
  %3952 = vmatprep.subr.bf16.mxu0 0
  %3953 = vmatpush1.bf16.msra.mxu0 0
  %3954 = vmatprep.subr.bf16.mxu0 0
  %3955 = vmatpush1.bf16.msra.mxu0 0
  %3956 = vmatprep.subr.bf16.mxu0 0
  %3957 = vmatpush1.bf16.msra.mxu0 0
  %3958 = vmatprep.subr.bf16.mxu0 0
  %3959 = vmatpush1.bf16.msra.mxu0 0
  %3960 = vmatprep.subr.bf16.mxu0 0
  %3961 = vmatpush1.bf16.msra.mxu0 0
  %3962 = vmatprep.subr.bf16.mxu0 0
  %3963 = vmatpush1.bf16.msra.mxu0 0
  %3964 = vmatprep.subr.bf16.mxu0 0
  %3965 = vmatpush1.bf16.msra.mxu0 0
  %3966 = vmatprep.subr.bf16.mxu0 0
  %3967 = vmatpush1.bf16.msra.mxu0 0
  %3968 = vmatprep.subr.bf16.mxu0 0
  %3969 = vmatpush1.bf16.msra.mxu0 0
  %3970 = vmatprep.subr.bf16.mxu0 0
  %3971 = vmatpush1.bf16.msra.mxu0 0
  %3972 = vmatprep.mubr.bf16.mxu0 0
  %3973 = vmatmul.mubr.bf16.gmra.mrb[0].mxu0 %v3820
  %v3974 = vpop.f32.mrb[0].mxu0
  %v3975 = vadd.f32 %v3878, %v3974
  %v3976 = vpop.f32.mrb[0].mxu0
  %v3977 = vpop.f32.mrb[0].mxu0
  %v3978 = vadd.f32 %v3881, %v3977
  %v3979 = vpop.f32.mrb[0].mxu0
  %3980 = vmatprep.mubr.bf16.mxu0 0
  %3981 = vmatmul.mubr.bf16.gmra.mrb[0].mxu0 %v3823
  %v3982 = vpop.f32.mrb[0].mxu0
  %v3983 = vadd.f32 %v3886, %v3982
  %v3984 = vpop.f32.mrb[0].mxu0
  %v3985 = vpop.f32.mrb[0].mxu0
  %v3986 = vadd.f32 %v3889, %v3985
  %v3987 = vpop.f32.mrb[0].mxu0
  %3988 = vmatprep.mubr.bf16.mxu0 0
  %3989 = vmatmul.mubr.bf16.gmra.mrb[0].mxu0 %v3826
  %v3990 = vpop.f32.mrb[0].mxu0
  %v3991 = vadd.f32 %v3894, %v3990
  %v3992 = vpop.f32.mrb[0].mxu0
  %v3993 = vpop.f32.mrb[0].mxu0
  %v3994 = vadd.f32 %v3897, %v3993
  %v3995 = vpop.f32.mrb[0].mxu0
  %3996 = vmatprep.mubr.bf16.mxu0 0
  %3997 = vmatmul.mubr.bf16.gmra.mrb[0].mxu0 %v3829
  %v3998 = vpop.f32.mrb[0].mxu0
  %v3999 = vadd.f32 %v3902, %v3998
  %v4000 = vpop.f32.mrb[0].mxu0
  %v4001 = vpop.f32.mrb[0].mxu0
  %v4002 = vadd.f32 %v3905, %v4001
  %v4003 = vpop.f32.mrb[0].mxu0
  %4004 = vmatprep.mubr.bf16.mxu0 0
  %4005 = vmatmul.mubr.bf16.gmra.mrb[0].mxu0 %v3832
  %v4006 = vpop.f32.mrb[0].mxu0
  %v4007 = vadd.f32 %v3910, %v4006
  %v4008 = vpop.f32.mrb[0].mxu0
  %v4009 = vpop.f32.mrb[0].mxu0
  %v4010 = vadd.f32 %v3913, %v4009
  %v4011 = vpop.f32.mrb[0].mxu0
  %4012 = vmatprep.mubr.bf16.mxu0 0
  %4013 = vmatmul.mubr.bf16.gmra.mrb[0].mxu0 %v3835
  %v4014 = vpop.f32.mrb[0].mxu0
  %v4015 = vadd.f32 %v3918, %v4014
  %v4016 = vpop.f32.mrb[0].mxu0
  %v4017 = vpop.f32.mrb[0].mxu0
  %v4018 = vadd.f32 %v3921, %v4017
  %v4019 = vpop.f32.mrb[0].mxu0
  %4020 = vmatprep.mubr.bf16.mxu0 0
  %4021 = vmatmul.mubr.bf16.gmra.mrb[0].mxu0 %v3838
  %v4022 = vpop.f32.mrb[0].mxu0
  %v4023 = vadd.f32 %v3926, %v4022
  %v4024 = vpop.f32.mrb[0].mxu0
  %v4025 = vpop.f32.mrb[0].mxu0
  %v4026 = vadd.f32 %v3929, %v4025
  %v4027 = vpop.f32.mrb[0].mxu0
  %4028 = vmatprep.mubr.bf16.mxu0 0
  %4029 = vmatmul.mubr.bf16.gmra.mrb[0].mxu0 %v3841
  %v4030 = vpop.f32.mrb[0].mxu0
  %v4031 = vadd.f32 %v3934, %v4030
  %v4032 = vpop.f32.mrb[0].mxu0
  %v4033 = vpop.f32.mrb[0].mxu0
  %v4034 = vadd.f32 %v3937, %v4033
  %v4035 = vpop.f32.mrb[0].mxu0
  %4036 = vdwg.mxu0
  %4053 = vrot.lane.b32.xlu0 %v3975, 64
  %v4054 = vpop.permute.xlu0 %4053
  %4055 = vrot.lane.b32.xlu0 %v3978, 64
  %v4056 = vpop.permute.xlu0 %4055
  %4057 = vrot.lane.b32.xlu0 %v3983, 64
  %v4058 = vpop.permute.xlu0 %4057
  %4059 = vrot.lane.b32.xlu0 %v3986, 64
  %v4060 = vpop.permute.xlu0 %4059
  %4061 = vrot.lane.b32.xlu0 %v3991, 64
  %v4062 = vpop.permute.xlu0 %4061
  %4063 = vrot.lane.b32.xlu0 %v3994, 64
  %v4064 = vpop.permute.xlu0 %4063
  %4065 = vrot.lane.b32.xlu0 %v3999, 64
  %v4066 = vpop.permute.xlu0 %4065
  %4067 = vrot.lane.b32.xlu0 %v4002, 64
  %v4068 = vpop.permute.xlu0 %4067
  %4069 = vrot.lane.b32.xlu0 %v4007, 64
  %v4070 = vpop.permute.xlu0 %4069
  %4071 = vrot.lane.b32.xlu0 %v4010, 64
  %v4072 = vpop.permute.xlu0 %4071
  %4073 = vrot.lane.b32.xlu0 %v4015, 64
  %v4074 = vpop.permute.xlu0 %4073
  %4075 = vrot.lane.b32.xlu0 %v4018, 64
  %v4076 = vpop.permute.xlu0 %4075
  %4077 = vrot.lane.b32.xlu0 %v4023, 64
  %v4078 = vpop.permute.xlu0 %4077
  %4079 = vrot.lane.b32.xlu0 %v4026, 64
  %v4080 = vpop.permute.xlu0 %4079
  %4081 = vrot.lane.b32.xlu0 %v4031, 64
  %v4082 = vpop.permute.xlu0 %4081
  %4083 = vrot.lane.b32.xlu0 %v4034, 64
  %v4084 = vpop.permute.xlu0 %4083
  %v4101 = vsel %vm887, %v2756, %v4054
  %v4102 = vsel %vm887, %v2757, %v4056
  %v4103 = vsel %vm887, %v2758, %v4058
  %v4104 = vsel %vm887, %v2759, %v4060
  %v4105 = vsel %vm887, %v2760, %v4062
  %v4106 = vsel %vm887, %v2761, %v4064
  %v4107 = vsel %vm887, %v2762, %v4066
  %v4108 = vsel %vm887, %v2763, %v4068
  %v4109 = vsel %vm887, %v2764, %v4070
  %v4110 = vsel %vm887, %v2765, %v4072
  %v4111 = vsel %vm887, %v2766, %v4074
  %v4112 = vsel %vm887, %v2767, %v4076
  %v4113 = vsel %vm887, %v2768, %v4078
  %v4114 = vsel %vm887, %v2769, %v4080
  %v4115 = vsel %vm887, %v2770, %v4082
  %v4116 = vsel %vm887, %v2771, %v4084
  %vm4117 = vcmask 654336
  %4118 = vst.msk [vmem:[%s19] sm:$0xff] %vm4117, %v4101
  %4119 = vst.msk [vmem:[%s19 + $0x8] sm:$0xff] %vm4117, %v4102
  %4120 = vst.msk [vmem:[%s19 + $0x10] sm:$0xff] %vm4117, %v4103
  %4121 = vst.msk [vmem:[%s19 + $0x18] sm:$0xff] %vm4117, %v4104
  %4122 = vst.msk [vmem:[%s19 + $0x20] sm:$0xff] %vm4117, %v4105
  %4123 = vst.msk [vmem:[%s19 + $0x28] sm:$0xff] %vm4117, %v4106
  %4124 = vst.msk [vmem:[%s19 + $0x30] sm:$0xff] %vm4117, %v4107
  %4125 = vst.msk [vmem:[%s19 + $0x38] sm:$0xff] %vm4117, %v4108
  %4126 = vst.msk [vmem:[%s19 + $0x40] sm:$0xff] %vm4117, %v4109
  %4127 = vst.msk [vmem:[%s19 + $0x48] sm:$0xff] %vm4117, %v4110
  %4128 = vst.msk [vmem:[%s19 + $0x50] sm:$0xff] %vm4117, %v4111
  %4129 = vst.msk [vmem:[%s19 + $0x58] sm:$0xff] %vm4117, %v4112
  %4130 = vst.msk [vmem:[%s19 + $0x60] sm:$0xff] %vm4117, %v4113
  %4131 = vst.msk [vmem:[%s19 + $0x68] sm:$0xff] %vm4117, %v4114
  %4132 = vst.msk [vmem:[%s19 + $0x70] sm:$0xff] %vm4117, %v4115
  %4133 = vst.msk [vmem:[%s19 + $0x78] sm:$0xff] %vm4117, %v4116
  // Predicated region
  $region78: #{tpu_custom_call.1} parent=0 // pred_check
    _
  $region79: #{tpu_custom_call.1} parent=0 // pred_check_branch
    %4135 = sbr.rel (0) target = $region81
  $region80: #{tpu_custom_call.1} parent=0 // pred_region
    _
  $region81: #{tpu_custom_call.1} parent=0 // pred_fallthru
    _
  // Predicated region
  $region82: #{tpu_custom_call.1} parent=0 // pred_check
    _
  $region83: #{tpu_custom_call.1} parent=0 // pred_check_branch
    %4137 = sbr.rel (0) target = $region85
  $region84: #{tpu_custom_call.1} parent=0 // pred_region
    _
  $region85: #{tpu_custom_call.1} parent=0 // pred_fallthru
    _

</llo_original>
